<compile_context>
chip_gen: v7x
topology: tpu7x:2x2x1
jax: 0.10.0
libtpu: 0.0.40
codegen_flags: <defaults>
</compile_context>

<pallas_src>
import functools

import jax
import jax.numpy as jnp
from jax.experimental import pallas as pl
from jax.experimental.pallas import tpu as pltpu


EXPANSION = 4


# ------------------------------ fused Pallas kernel ------------------------------

def _subsample2(v2d, h, w, c):
    """(h*w, c) -> (h//2 * w//2, c), keeping even rows / even cols (stride-2)."""
    v = v2d.reshape(h // 2, 2, w, c)[:, 0]              # drop odd rows
    v = v.reshape(h // 2, w // 2, 2, c)[:, :, 0]        # drop odd cols
    return v.reshape((h // 2) * (w // 2), c)


def _bottleneck_kernel(*args, H, W, P, Cin, Cout, stride, has_proj):
    if has_proj:
        (x_ref, w1_ref, b1_ref, w2_ref, b2_ref, w3_ref, b3_ref,
         wsc_ref, bsc_ref, o_ref, pad_ref) = args
    else:
        (x_ref, w1_ref, b1_ref, w2_ref, b2_ref, w3_ref, b3_ref,
         o_ref, pad_ref) = args

    ho, wo = H // stride, W // stride

    # conv1 (1x1) + bn1 + relu: per-pixel matmul over channels.
    x2d = x_ref[...].reshape(H * W, Cin)                                  # bf16
    h1 = jnp.dot(x2d, w1_ref[...], preferred_element_type=jnp.float32)   # (H*W, P)
    h1 = jnp.maximum(h1 + b1_ref[...], 0.0)

    # conv2 (3x3, pad 1) as 9 accumulated taps over a zero-halo VMEM tile.
    pad_ref[...] = jnp.zeros_like(pad_ref)
    pad_ref[pl.ds(1, H), pl.ds(1, W), :] = h1.reshape(H, W, P)
    acc = jnp.zeros((H * W, P), jnp.float32)
    for t in range(9):
        kh, kw = t // 3, t % 3
        tap = pad_ref[pl.ds(kh, H), pl.ds(kw, W), :].reshape(H * W, P)
        acc = acc + jnp.dot(tap.astype(jnp.bfloat16), w2_ref[t],
                            preferred_element_type=jnp.float32)
    h2 = jnp.maximum(acc + b2_ref[...], 0.0)
    if stride == 2:
        h2 = _subsample2(h2, H, W, P)                                     # (ho*wo, P)
    h2 = h2.astype(jnp.bfloat16)

    # conv3 (1x1) + bn3.
    out = jnp.dot(h2, w3_ref[...], preferred_element_type=jnp.float32) + b3_ref[...]

    # shortcut: identity, or fused 1x1 stride-s projection (+ folded BN).
    if has_proj:
        xs = _subsample2(x2d, H, W, Cin) if stride == 2 else x2d
        out = out + jnp.dot(xs, wsc_ref[...],
                            preferred_element_type=jnp.float32) + bsc_ref[...]
    else:
        out = out + x2d.astype(jnp.float32)

    out = jnp.maximum(out, 0.0)
    o_ref[...] = out.reshape(1, ho, wo, Cout).astype(o_ref.dtype)


# ------------------------------ wrapper (plain JAX glue) ------------------------------

def _fold_bn(p, eps=1e-5):
    scale = p["gamma"] / jnp.sqrt(p["var"] + eps)
    bias = p["beta"] - p["mean"] * scale
    return scale, bias


def bottleneck_pallas(x_nchw, params, *, in_planes, planes, stride):
    cout = EXPANSION * planes
    n, cin, h, w = x_nchw.shape
    assert cin == in_planes, (cin, in_planes)
    assert stride in (1, 2)
    if stride == 2:
        assert h % 2 == 0 and w % 2 == 0, (h, w)
    ho, wo = h // stride, w // stride
    has_proj = stride != 1 or in_planes != cout

    # NHWC so channels ride the 128-lane axis inside the kernel.
    x = jnp.transpose(x_nchw, (0, 2, 3, 1)).astype(jnp.bfloat16)

    # Fold BN scale into the conv weights in f32, THEN cast to bf16; bias stays f32.
    s1, b1 = _fold_bn(params["bn1"])
    s2, b2 = _fold_bn(params["bn2"])
    s3, b3 = _fold_bn(params["bn3"])
    w1 = (params["w1"].reshape(in_planes, planes) * s1[None, :]).astype(jnp.bfloat16)
    w2 = (params["w2"] * s2[None, None, None, :]).reshape(9, planes, planes).astype(jnp.bfloat16)
    w3 = (params["w3"].reshape(planes, cout) * s3[None, :]).astype(jnp.bfloat16)

    args = [x,
            w1, b1.reshape(1, planes).astype(jnp.float32),
            w2, b2.reshape(1, planes).astype(jnp.float32),
            w3, b3.reshape(1, cout).astype(jnp.float32)]
    in_specs = [
        pl.BlockSpec((1, h, w, in_planes), lambda i: (i, 0, 0, 0)),
        pl.BlockSpec((in_planes, planes), lambda i: (0, 0)),
        pl.BlockSpec((1, planes), lambda i: (0, 0)),
        pl.BlockSpec((9, planes, planes), lambda i: (0, 0, 0)),
        pl.BlockSpec((1, planes), lambda i: (0, 0)),
        pl.BlockSpec((planes, cout), lambda i: (0, 0)),
        pl.BlockSpec((1, cout), lambda i: (0, 0)),
    ]
    if has_proj:
        ssc, bsc = _fold_bn(params["bn_sc"])
        wsc = (params["w_sc"].reshape(in_planes, cout) * ssc[None, :]).astype(jnp.bfloat16)
        args += [wsc, bsc.reshape(1, cout).astype(jnp.float32)]
        in_specs += [pl.BlockSpec((in_planes, cout), lambda i: (0, 0)),
                     pl.BlockSpec((1, cout), lambda i: (0, 0))]

    kernel = functools.partial(
        _bottleneck_kernel, H=h, W=w, P=planes, Cin=in_planes, Cout=cout,
        stride=stride, has_proj=has_proj)

    out = pl.pallas_call(
        kernel,
        grid=(n,),
        in_specs=in_specs,
        out_specs=pl.BlockSpec((1, ho, wo, cout), lambda i: (i, 0, 0, 0)),
        out_shape=jax.ShapeDtypeStruct((n, ho, wo, cout), jnp.float32),
        scratch_shapes=[pltpu.VMEM((h + 2, w + 2, planes), jnp.float32)],
        compiler_params=pltpu.CompilerParams(
            dimension_semantics=("parallel",)),
    )(*args)

    return jnp.transpose(out, (0, 3, 1, 2))          # back to NCHW (PyTorch interface)


# ------------------------------ parameters ------------------------------

def _bn_params(c, salt):
    i = jnp.arange(c, dtype=jnp.float32) / max(c - 1, 1)
    return {"gamma": 0.9 + 0.2 * i + 0.01 * salt,
            "beta": 0.1 * i - 0.01 * salt,
            "mean": 0.2 * i - 0.1,
            "var": 0.8 + 0.4 * i}


def init_bottleneck_params(key, in_planes, planes, stride):
    cout = EXPANSION * planes
    k1, k2, k3, k4 = jax.random.split(key, 4)
    params = {
        "w1": jax.random.normal(k1, (1, 1, in_planes, planes), jnp.float32)
              / jnp.sqrt(float(in_planes)),
        "bn1": _bn_params(planes, 0),
        "w2": jax.random.normal(k2, (3, 3, planes, planes), jnp.float32)
              / jnp.sqrt(9.0 * planes),
        "bn2": _bn_params(planes, 1),
        "w3": jax.random.normal(k3, (1, 1, planes, cout), jnp.float32)
              / jnp.sqrt(float(planes)),
        "bn3": _bn_params(cout, 2),
    }
    if stride != 1 or in_planes != cout:
        params["w_sc"] = (jax.random.normal(k4, (1, 1, in_planes, cout), jnp.float32)
                          / jnp.sqrt(float(in_planes)))
        params["bn_sc"] = _bn_params(cout, 3)
    return params


# ------------------------------ pure-JAX reference ------------------------------

def _ref_conv(x_nchw, w_hwio, stride, padding):
    return jax.lax.conv_general_dilated(
        x_nchw, w_hwio, (stride, stride), [(padding, padding)] * 2,
        dimension_numbers=("NCHW", "HWIO", "NCHW"))


def bottleneck_ref(x, params, *, in_planes, planes, stride):
    def bn(y, p):
        s, b = _fold_bn(p)
        return y * s[None, :, None, None] + b[None, :, None, None]

    out = jax.nn.relu(bn(_ref_conv(x, params["w1"], 1, 0), params["bn1"]))
    out = jax.nn.relu(bn(_ref_conv(out, params["w2"], stride, 1), params["bn2"]))
    out = bn(_ref_conv(out, params["w3"], 1, 0), params["bn3"])
    if stride != 1 or in_planes != EXPANSION * planes:
        sc = bn(_ref_conv(x, params["w_sc"], stride, 0), params["bn_sc"])
    else:
        sc = x
    return jax.nn.relu(out + sc)


if __name__ == "__main__":
    key = jax.random.PRNGKey(0)
    kx1, kx2, kx3, kp1, kp2, kp3 = jax.random.split(key, 6)

    def run_case(kx, kp, n, in_planes, planes, stride, h=16, w=16):
        x = jax.random.normal(kx, (n, in_planes, h, w), jnp.float32)   # NCHW like PyTorch
        p = init_bottleneck_params(kp, in_planes, planes, stride)
        fwd = jax.jit(functools.partial(bottleneck_pallas, in_planes=in_planes,
                                        planes=planes, stride=stride))
        y = fwd(x, p)
        jax.block_until_ready(y)
        r = bottleneck_ref(x, p, in_planes=in_planes, planes=planes, stride=stride)
        assert y.shape == r.shape, (y.shape, r.shape)
        err = float(jnp.max(jnp.abs(y - r)))
        assert jnp.allclose(y, r, atol=5e-2, rtol=5e-2), err
        return y

    # Case 1: stride-2 bottleneck with 1x1 projection shortcut (64 -> 4*32 = 128).
    y1 = run_case(kx1, kp1, 2, 64, 32, 2)
    assert y1.shape == (2, 128, 8, 8), y1.shape

    # Case 2: stride-1 bottleneck with identity shortcut (in_planes == 4*planes == 128).
    y2 = run_case(kx2, kp2, 2, 128, 32, 1)
    assert y2.shape == (2, 128, 16, 16), y2.shape

    # Case 3: stride-1 bottleneck with projection shortcut (64 -> 128).
    y3 = run_case(kx3, kp3, 2, 64, 32, 1)
    assert y3.shape == (2, 128, 16, 16), y3.shape

    print("KERNEL_OK")
</pallas_src>

<mosaic_0001>
module attributes {stable_mosaic.version = 11 : i64} {
  func.func @_bottleneck_kernel(%arg0: i32, %arg1: memref<1x16x16x64xbf16, #tpu.memory_space<vmem>>, %arg2: memref<64x32xbf16, #tpu.memory_space<vmem>>, %arg3: memref<1x32xf32, #tpu.memory_space<vmem>>, %arg4: memref<9x32x32xbf16, #tpu.memory_space<vmem>>, %arg5: memref<1x32xf32, #tpu.memory_space<vmem>>, %arg6: memref<32x128xbf16, #tpu.memory_space<vmem>>, %arg7: memref<1x128xf32, #tpu.memory_space<vmem>>, %arg8: memref<64x128xbf16, #tpu.memory_space<vmem>>, %arg9: memref<1x128xf32, #tpu.memory_space<vmem>>, %arg10: memref<1x8x8x128xf32, #tpu.memory_space<vmem>>, %arg11: memref<18x18x32xf32, #tpu.memory_space<vmem>>) attributes {dimension_semantics = [#tpu.dimension_semantics<parallel>], iteration_bounds = array<i64: 2>, scalar_prefetch = 0 : i64, scratch_operands = 1 : i64, tpu.core_type = #tpu.core_type<tc>, window_params = [{transform_indices = @transform_0, window_bounds = array<i64: 1, 16, 16, 64>}, {pipeline_mode = #tpu.pipeline_mode<synchronous>, transform_indices = @transform_1, window_bounds = array<i64: 64, 32>}, {pipeline_mode = #tpu.pipeline_mode<synchronous>, transform_indices = @transform_2, window_bounds = array<i64: 1, 32>}, {pipeline_mode = #tpu.pipeline_mode<synchronous>, transform_indices = @transform_3, window_bounds = array<i64: 9, 32, 32>}, {pipeline_mode = #tpu.pipeline_mode<synchronous>, transform_indices = @transform_4, window_bounds = array<i64: 1, 32>}, {pipeline_mode = #tpu.pipeline_mode<synchronous>, transform_indices = @transform_5, window_bounds = array<i64: 32, 128>}, {pipeline_mode = #tpu.pipeline_mode<synchronous>, transform_indices = @transform_6, window_bounds = array<i64: 1, 128>}, {pipeline_mode = #tpu.pipeline_mode<synchronous>, transform_indices = @transform_7, window_bounds = array<i64: 64, 128>}, {pipeline_mode = #tpu.pipeline_mode<synchronous>, transform_indices = @transform_8, window_bounds = array<i64: 1, 128>}, {transform_indices = @transform_9, window_bounds = array<i64: 1, 8, 8, 128>}]} {
    %c0 = arith.constant 0 : index
    %c0_0 = arith.constant 0 : index
    %c0_1 = arith.constant 0 : index
    %c0_2 = arith.constant 0 : index
    %0 = vector.load %arg1[%c0, %c0_0, %c0_1, %c0_2] : memref<1x16x16x64xbf16, #tpu.memory_space<vmem>>, vector<1x16x16x64xbf16>
    %1 = vector.shape_cast %0 : vector<1x16x16x64xbf16> to vector<256x64xbf16>
    %c0_3 = arith.constant 0 : index
    %c0_4 = arith.constant 0 : index
    %2 = vector.load %arg2[%c0_3, %c0_4] : memref<64x32xbf16, #tpu.memory_space<vmem>>, vector<64x32xbf16>
    %cst = arith.constant dense<0.000000e+00> : vector<256x32xf32>
    %3 = tpu.matmul %1, %2, %cst {dimension_numbers = #tpu.dot_dimension_numbers<[1], [0], [0], [1], [0, 0, 1, 1], [], []>} : vector<256x64xbf16>, vector<64x32xbf16>, vector<256x32xf32> -> vector<256x32xf32>
    %c0_5 = arith.constant 0 : index
    %c0_6 = arith.constant 0 : index
    %4 = vector.load %arg3[%c0_5, %c0_6] : memref<1x32xf32, #tpu.memory_space<vmem>>, vector<1x32xf32>
    %5 = vector.broadcast %4 : vector<1x32xf32> to vector<256x32xf32>
    %6 = arith.addf %3, %5 : vector<256x32xf32>
    %cst_7 = arith.constant 0.000000e+00 : f32
    %7 = vector.broadcast %cst_7 : f32 to vector<256x32xf32>
    %8 = arith.maximumf %6, %7 : vector<256x32xf32>
    %cst_8 = arith.constant 0.000000e+00 : f32
    %9 = vector.broadcast %cst_8 : f32 to vector<18x18x32xf32>
    %c0_9 = arith.constant 0 : index
    %c0_10 = arith.constant 0 : index
    %c0_11 = arith.constant 0 : index
    %10 = vector.load %arg11[%c0_9, %c0_10, %c0_11] : memref<18x18x32xf32, #tpu.memory_space<vmem>>, vector<18x18x32xf32>
    tpu.vector_store %arg11[%c0_9, %c0_10, %c0_11], %9 {strides = array<i32>} : memref<18x18x32xf32, #tpu.memory_space<vmem>>, vector<18x18x32xf32>,
    %11 = vector.shape_cast %8 : vector<256x32xf32> to vector<16x16x32xf32>
    %c1 = arith.constant 1 : index
    %c1_12 = arith.constant 1 : index
    %c0_13 = arith.constant 0 : index
    %12 = vector.load %arg11[%c1, %c1_12, %c0_13] : memref<18x18x32xf32, #tpu.memory_space<vmem>>, vector<16x16x32xf32>
    tpu.vector_store %arg11[%c1, %c1_12, %c0_13], %11 {strides = array<i32>} : memref<18x18x32xf32, #tpu.memory_space<vmem>>, vector<16x16x32xf32>,
    %cst_14 = arith.constant 0.000000e+00 : f32
    %13 = vector.broadcast %cst_14 : f32 to vector<256x32xf32>
    %c0_15 = arith.constant 0 : index
    %c0_16 = arith.constant 0 : index
    %c0_17 = arith.constant 0 : index
    %14 = vector.load %arg11[%c0_15, %c0_16, %c0_17] : memref<18x18x32xf32, #tpu.memory_space<vmem>>, vector<16x16x32xf32>
    %15 = vector.shape_cast %14 : vector<16x16x32xf32> to vector<256x32xf32>
    %16 = arith.truncf %15 : vector<256x32xf32> to vector<256x32xbf16>
    %c0_18 = arith.constant 0 : index
    %c0_19 = arith.constant 0 : index
    %c0_20 = arith.constant 0 : index
    %17 = vector.load %arg4[%c0_18, %c0_19, %c0_20] : memref<9x32x32xbf16, #tpu.memory_space<vmem>>, vector<1x32x32xbf16>
    %18 = vector.shape_cast %17 : vector<1x32x32xbf16> to vector<32x32xbf16>
    %cst_21 = arith.constant dense<0.000000e+00> : vector<256x32xf32>
    %19 = tpu.matmul %16, %18, %cst_21 {dimension_numbers = #tpu.dot_dimension_numbers<[1], [0], [0], [1], [0, 0, 1, 1], [], []>} : vector<256x32xbf16>, vector<32x32xbf16>, vector<256x32xf32> -> vector<256x32xf32>
    %20 = arith.addf %13, %19 : vector<256x32xf32>
    %c0_22 = arith.constant 0 : index
    %c1_23 = arith.constant 1 : index
    %c0_24 = arith.constant 0 : index
    %21 = vector.load %arg11[%c0_22, %c1_23, %c0_24] : memref<18x18x32xf32, #tpu.memory_space<vmem>>, vector<16x16x32xf32>
    %22 = vector.shape_cast %21 : vector<16x16x32xf32> to vector<256x32xf32>
    %23 = arith.truncf %22 : vector<256x32xf32> to vector<256x32xbf16>
    %c1_25 = arith.constant 1 : index
    %c0_26 = arith.constant 0 : index
    %c0_27 = arith.constant 0 : index
    %24 = vector.load %arg4[%c1_25, %c0_26, %c0_27] : memref<9x32x32xbf16, #tpu.memory_space<vmem>>, vector<1x32x32xbf16>
    %25 = vector.shape_cast %24 : vector<1x32x32xbf16> to vector<32x32xbf16>
    %cst_28 = arith.constant dense<0.000000e+00> : vector<256x32xf32>
    %26 = tpu.matmul %23, %25, %cst_28 {dimension_numbers = #tpu.dot_dimension_numbers<[1], [0], [0], [1], [0, 0, 1, 1], [], []>} : vector<256x32xbf16>, vector<32x32xbf16>, vector<256x32xf32> -> vector<256x32xf32>
    %27 = arith.addf %20, %26 : vector<256x32xf32>
    %c0_29 = arith.constant 0 : index
    %c2 = arith.constant 2 : index
    %c0_30 = arith.constant 0 : index
    %28 = vector.load %arg11[%c0_29, %c2, %c0_30] : memref<18x18x32xf32, #tpu.memory_space<vmem>>, vector<16x16x32xf32>
    %29 = vector.shape_cast %28 : vector<16x16x32xf32> to vector<256x32xf32>
    %30 = arith.truncf %29 : vector<256x32xf32> to vector<256x32xbf16>
    %c2_31 = arith.constant 2 : index
    %c0_32 = arith.constant 0 : index
    %c0_33 = arith.constant 0 : index
    %31 = vector.load %arg4[%c2_31, %c0_32, %c0_33] : memref<9x32x32xbf16, #tpu.memory_space<vmem>>, vector<1x32x32xbf16>
    %32 = vector.shape_cast %31 : vector<1x32x32xbf16> to vector<32x32xbf16>
    %cst_34 = arith.constant dense<0.000000e+00> : vector<256x32xf32>
    %33 = tpu.matmul %30, %32, %cst_34 {dimension_numbers = #tpu.dot_dimension_numbers<[1], [0], [0], [1], [0, 0, 1, 1], [], []>} : vector<256x32xbf16>, vector<32x32xbf16>, vector<256x32xf32> -> vector<256x32xf32>
    %34 = arith.addf %27, %33 : vector<256x32xf32>
    %c1_35 = arith.constant 1 : index
    %c0_36 = arith.constant 0 : index
    %c0_37 = arith.constant 0 : index
    %35 = vector.load %arg11[%c1_35, %c0_36, %c0_37] : memref<18x18x32xf32, #tpu.memory_space<vmem>>, vector<16x16x32xf32>
    %36 = vector.shape_cast %35 : vector<16x16x32xf32> to vector<256x32xf32>
    %37 = arith.truncf %36 : vector<256x32xf32> to vector<256x32xbf16>
    %c3 = arith.constant 3 : index
    %c0_38 = arith.constant 0 : index
    %c0_39 = arith.constant 0 : index
    %38 = vector.load %arg4[%c3, %c0_38, %c0_39] : memref<9x32x32xbf16, #tpu.memory_space<vmem>>, vector<1x32x32xbf16>
    %39 = vector.shape_cast %38 : vector<1x32x32xbf16> to vector<32x32xbf16>
    %cst_40 = arith.constant dense<0.000000e+00> : vector<256x32xf32>
    %40 = tpu.matmul %37, %39, %cst_40 {dimension_numbers = #tpu.dot_dimension_numbers<[1], [0], [0], [1], [0, 0, 1, 1], [], []>} : vector<256x32xbf16>, vector<32x32xbf16>, vector<256x32xf32> -> vector<256x32xf32>
    %41 = arith.addf %34, %40 : vector<256x32xf32>
    %c1_41 = arith.constant 1 : index
    %c1_42 = arith.constant 1 : index
    %c0_43 = arith.constant 0 : index
    %42 = vector.load %arg11[%c1_41, %c1_42, %c0_43] : memref<18x18x32xf32, #tpu.memory_space<vmem>>, vector<16x16x32xf32>
    %43 = vector.shape_cast %42 : vector<16x16x32xf32> to vector<256x32xf32>
    %44 = arith.truncf %43 : vector<256x32xf32> to vector<256x32xbf16>
    %c4 = arith.constant 4 : index
    %c0_44 = arith.constant 0 : index
    %c0_45 = arith.constant 0 : index
    %45 = vector.load %arg4[%c4, %c0_44, %c0_45] : memref<9x32x32xbf16, #tpu.memory_space<vmem>>, vector<1x32x32xbf16>
    %46 = vector.shape_cast %45 : vector<1x32x32xbf16> to vector<32x32xbf16>
    %cst_46 = arith.constant dense<0.000000e+00> : vector<256x32xf32>
    %47 = tpu.matmul %44, %46, %cst_46 {dimension_numbers = #tpu.dot_dimension_numbers<[1], [0], [0], [1], [0, 0, 1, 1], [], []>} : vector<256x32xbf16>, vector<32x32xbf16>, vector<256x32xf32> -> vector<256x32xf32>
    %48 = arith.addf %41, %47 : vector<256x32xf32>
    %c1_47 = arith.constant 1 : index
    %c2_48 = arith.constant 2 : index
    %c0_49 = arith.constant 0 : index
    %49 = vector.load %arg11[%c1_47, %c2_48, %c0_49] : memref<18x18x32xf32, #tpu.memory_space<vmem>>, vector<16x16x32xf32>
    %50 = vector.shape_cast %49 : vector<16x16x32xf32> to vector<256x32xf32>
    %51 = arith.truncf %50 : vector<256x32xf32> to vector<256x32xbf16>
    %c5 = arith.constant 5 : index
    %c0_50 = arith.constant 0 : index
    %c0_51 = arith.constant 0 : index
    %52 = vector.load %arg4[%c5, %c0_50, %c0_51] : memref<9x32x32xbf16, #tpu.memory_space<vmem>>, vector<1x32x32xbf16>
    %53 = vector.shape_cast %52 : vector<1x32x32xbf16> to vector<32x32xbf16>
    %cst_52 = arith.constant dense<0.000000e+00> : vector<256x32xf32>
    %54 = tpu.matmul %51, %53, %cst_52 {dimension_numbers = #tpu.dot_dimension_numbers<[1], [0], [0], [1], [0, 0, 1, 1], [], []>} : vector<256x32xbf16>, vector<32x32xbf16>, vector<256x32xf32> -> vector<256x32xf32>
    %55 = arith.addf %48, %54 : vector<256x32xf32>
    %c2_53 = arith.constant 2 : index
    %c0_54 = arith.constant 0 : index
    %c0_55 = arith.constant 0 : index
    %56 = vector.load %arg11[%c2_53, %c0_54, %c0_55] : memref<18x18x32xf32, #tpu.memory_space<vmem>>, vector<16x16x32xf32>
    %57 = vector.shape_cast %56 : vector<16x16x32xf32> to vector<256x32xf32>
    %58 = arith.truncf %57 : vector<256x32xf32> to vector<256x32xbf16>
    %c6 = arith.constant 6 : index
    %c0_56 = arith.constant 0 : index
    %c0_57 = arith.constant 0 : index
    %59 = vector.load %arg4[%c6, %c0_56, %c0_57] : memref<9x32x32xbf16, #tpu.memory_space<vmem>>, vector<1x32x32xbf16>
    %60 = vector.shape_cast %59 : vector<1x32x32xbf16> to vector<32x32xbf16>
    %cst_58 = arith.constant dense<0.000000e+00> : vector<256x32xf32>
    %61 = tpu.matmul %58, %60, %cst_58 {dimension_numbers = #tpu.dot_dimension_numbers<[1], [0], [0], [1], [0, 0, 1, 1], [], []>} : vector<256x32xbf16>, vector<32x32xbf16>, vector<256x32xf32> -> vector<256x32xf32>
    %62 = arith.addf %55, %61 : vector<256x32xf32>
    %c2_59 = arith.constant 2 : index
    %c1_60 = arith.constant 1 : index
    %c0_61 = arith.constant 0 : index
    %63 = vector.load %arg11[%c2_59, %c1_60, %c0_61] : memref<18x18x32xf32, #tpu.memory_space<vmem>>, vector<16x16x32xf32>
    %64 = vector.shape_cast %63 : vector<16x16x32xf32> to vector<256x32xf32>
    %65 = arith.truncf %64 : vector<256x32xf32> to vector<256x32xbf16>
    %c7 = arith.constant 7 : index
    %c0_62 = arith.constant 0 : index
    %c0_63 = arith.constant 0 : index
    %66 = vector.load %arg4[%c7, %c0_62, %c0_63] : memref<9x32x32xbf16, #tpu.memory_space<vmem>>, vector<1x32x32xbf16>
    %67 = vector.shape_cast %66 : vector<1x32x32xbf16> to vector<32x32xbf16>
    %cst_64 = arith.constant dense<0.000000e+00> : vector<256x32xf32>
    %68 = tpu.matmul %65, %67, %cst_64 {dimension_numbers = #tpu.dot_dimension_numbers<[1], [0], [0], [1], [0, 0, 1, 1], [], []>} : vector<256x32xbf16>, vector<32x32xbf16>, vector<256x32xf32> -> vector<256x32xf32>
    %69 = arith.addf %62, %68 : vector<256x32xf32>
    %c2_65 = arith.constant 2 : index
    %c2_66 = arith.constant 2 : index
    %c0_67 = arith.constant 0 : index
    %70 = vector.load %arg11[%c2_65, %c2_66, %c0_67] : memref<18x18x32xf32, #tpu.memory_space<vmem>>, vector<16x16x32xf32>
    %71 = vector.shape_cast %70 : vector<16x16x32xf32> to vector<256x32xf32>
    %72 = arith.truncf %71 : vector<256x32xf32> to vector<256x32xbf16>
    %c8 = arith.constant 8 : index
    %c0_68 = arith.constant 0 : index
    %c0_69 = arith.constant 0 : index
    %73 = vector.load %arg4[%c8, %c0_68, %c0_69] : memref<9x32x32xbf16, #tpu.memory_space<vmem>>, vector<1x32x32xbf16>
    %74 = vector.shape_cast %73 : vector<1x32x32xbf16> to vector<32x32xbf16>
    %cst_70 = arith.constant dense<0.000000e+00> : vector<256x32xf32>
    %75 = tpu.matmul %72, %74, %cst_70 {dimension_numbers = #tpu.dot_dimension_numbers<[1], [0], [0], [1], [0, 0, 1, 1], [], []>} : vector<256x32xbf16>, vector<32x32xbf16>, vector<256x32xf32> -> vector<256x32xf32>
    %76 = arith.addf %69, %75 : vector<256x32xf32>
    %c0_71 = arith.constant 0 : index
    %c0_72 = arith.constant 0 : index
    %77 = vector.load %arg5[%c0_71, %c0_72] : memref<1x32xf32, #tpu.memory_space<vmem>>, vector<1x32xf32>
    %78 = vector.broadcast %77 : vector<1x32xf32> to vector<256x32xf32>
    %79 = arith.addf %76, %78 : vector<256x32xf32>
    %cst_73 = arith.constant 0.000000e+00 : f32
    %80 = vector.broadcast %cst_73 : f32 to vector<256x32xf32>
    %81 = arith.maximumf %79, %80 : vector<256x32xf32>
    %82 = vector.shape_cast %81 : vector<256x32xf32> to vector<8x2x16x32xf32>
    %83 = vector.extract_strided_slice %82 {offsets = [0, 0, 0, 0], sizes = [8, 1, 16, 32], strides = [1, 1, 1, 1]} : vector<8x2x16x32xf32> to vector<8x1x16x32xf32>
    %84 = vector.shape_cast %83 : vector<8x1x16x32xf32> to vector<8x16x32xf32>
    %85 = vector.shape_cast %84 : vector<8x16x32xf32> to vector<8x8x2x32xf32>
    %86 = vector.extract_strided_slice %85 {offsets = [0, 0, 0, 0], sizes = [8, 8, 1, 32], strides = [1, 1, 1, 1]} : vector<8x8x2x32xf32> to vector<8x8x1x32xf32>
    %87 = vector.shape_cast %86 : vector<8x8x1x32xf32> to vector<8x8x32xf32>
    %88 = vector.shape_cast %87 : vector<8x8x32xf32> to vector<64x32xf32>
    %89 = arith.truncf %88 : vector<64x32xf32> to vector<64x32xbf16>
    %c0_74 = arith.constant 0 : index
    %c0_75 = arith.constant 0 : index
    %90 = vector.load %arg6[%c0_74, %c0_75] : memref<32x128xbf16, #tpu.memory_space<vmem>>, vector<32x128xbf16>
    %cst_76 = arith.constant dense<0.000000e+00> : vector<64x128xf32>
    %91 = tpu.matmul %89, %90, %cst_76 {dimension_numbers = #tpu.dot_dimension_numbers<[1], [0], [0], [1], [0, 0, 1, 1], [], []>} : vector<64x32xbf16>, vector<32x128xbf16>, vector<64x128xf32> -> vector<64x128xf32>
    %c0_77 = arith.constant 0 : index
    %c0_78 = arith.constant 0 : index
    %92 = vector.load %arg7[%c0_77, %c0_78] : memref<1x128xf32, #tpu.memory_space<vmem>>, vector<1x128xf32>
    %93 = vector.broadcast %92 : vector<1x128xf32> to vector<64x128xf32>
    %94 = arith.addf %91, %93 : vector<64x128xf32>
    %95 = vector.shape_cast %1 : vector<256x64xbf16> to vector<8x2x16x64xbf16>
    %96 = vector.extract_strided_slice %95 {offsets = [0, 0, 0, 0], sizes = [8, 1, 16, 64], strides = [1, 1, 1, 1]} : vector<8x2x16x64xbf16> to vector<8x1x16x64xbf16>
    %97 = vector.shape_cast %96 : vector<8x1x16x64xbf16> to vector<8x16x64xbf16>
    %98 = vector.shape_cast %97 : vector<8x16x64xbf16> to vector<8x8x2x64xbf16>
    %99 = vector.extract_strided_slice %98 {offsets = [0, 0, 0, 0], sizes = [8, 8, 1, 64], strides = [1, 1, 1, 1]} : vector<8x8x2x64xbf16> to vector<8x8x1x64xbf16>
    %100 = vector.shape_cast %99 : vector<8x8x1x64xbf16> to vector<8x8x64xbf16>
    %101 = vector.shape_cast %100 : vector<8x8x64xbf16> to vector<64x64xbf16>
    %c0_79 = arith.constant 0 : index
    %c0_80 = arith.constant 0 : index
    %102 = vector.load %arg8[%c0_79, %c0_80] : memref<64x128xbf16, #tpu.memory_space<vmem>>, vector<64x128xbf16>
    %cst_81 = arith.constant dense<0.000000e+00> : vector<64x128xf32>
    %103 = tpu.matmul %101, %102, %cst_81 {dimension_numbers = #tpu.dot_dimension_numbers<[1], [0], [0], [1], [0, 0, 1, 1], [], []>} : vector<64x64xbf16>, vector<64x128xbf16>, vector<64x128xf32> -> vector<64x128xf32>
    %104 = arith.addf %94, %103 : vector<64x128xf32>
    %c0_82 = arith.constant 0 : index
    %c0_83 = arith.constant 0 : index
    %105 = vector.load %arg9[%c0_82, %c0_83] : memref<1x128xf32, #tpu.memory_space<vmem>>, vector<1x128xf32>
    %106 = vector.broadcast %105 : vector<1x128xf32> to vector<64x128xf32>
    %107 = arith.addf %104, %106 : vector<64x128xf32>
    %cst_84 = arith.constant 0.000000e+00 : f32
    %108 = vector.broadcast %cst_84 : f32 to vector<64x128xf32>
    %109 = arith.maximumf %107, %108 : vector<64x128xf32>
    %110 = vector.shape_cast %109 : vector<64x128xf32> to vector<1x8x8x128xf32>
    %c0_85 = arith.constant 0 : index
    %c0_86 = arith.constant 0 : index
    %c0_87 = arith.constant 0 : index
    %c0_88 = arith.constant 0 : index
    %111 = vector.load %arg10[%c0_85, %c0_86, %c0_87, %c0_88] : memref<1x8x8x128xf32, #tpu.memory_space<vmem>>, vector<1x8x8x128xf32>
    tpu.vector_store %arg10[%c0_85, %c0_86, %c0_87, %c0_88], %110 {strides = array<i32>} : memref<1x8x8x128xf32, #tpu.memory_space<vmem>>, vector<1x8x8x128xf32>,
    return
  }
  func.func @transform_0(%arg0: i32) -> (i32, i32, i32, i32) {
    %c0_i32 = arith.constant 0 : i32
    %c0_i32_0 = arith.constant 0 : i32
    %c0_i32_1 = arith.constant 0 : i32
    %c0_i32_2 = arith.constant 0 : i32
    return %arg0, %c0_i32, %c0_i32_0, %c0_i32_1 : i32, i32, i32, i32
  }
  func.func @transform_1(%arg0: i32) -> (i32, i32) {
    %c0_i32 = arith.constant 0 : i32
    %c0_i32_0 = arith.constant 0 : i32
    %c0_i32_1 = arith.constant 0 : i32
    return %c0_i32, %c0_i32_0 : i32, i32
  }
  func.func @transform_2(%arg0: i32) -> (i32, i32) {
    %c0_i32 = arith.constant 0 : i32
    %c0_i32_0 = arith.constant 0 : i32
    %c0_i32_1 = arith.constant 0 : i32
    return %c0_i32, %c0_i32_0 : i32, i32
  }
  func.func @transform_3(%arg0: i32) -> (i32, i32, i32) {
    %c0_i32 = arith.constant 0 : i32
    %c0_i32_0 = arith.constant 0 : i32
    %c0_i32_1 = arith.constant 0 : i32
    %c0_i32_2 = arith.constant 0 : i32
    return %c0_i32, %c0_i32_0, %c0_i32_1 : i32, i32, i32
  }
  func.func @transform_4(%arg0: i32) -> (i32, i32) {
    %c0_i32 = arith.constant 0 : i32
    %c0_i32_0 = arith.constant 0 : i32
    %c0_i32_1 = arith.constant 0 : i32
    return %c0_i32, %c0_i32_0 : i32, i32
  }
  func.func @transform_5(%arg0: i32) -> (i32, i32) {
    %c0_i32 = arith.constant 0 : i32
    %c0_i32_0 = arith.constant 0 : i32
    %c0_i32_1 = arith.constant 0 : i32
    return %c0_i32, %c0_i32_0 : i32, i32
  }
  func.func @transform_6(%arg0: i32) -> (i32, i32) {
    %c0_i32 = arith.constant 0 : i32
    %c0_i32_0 = arith.constant 0 : i32
    %c0_i32_1 = arith.constant 0 : i32
    return %c0_i32, %c0_i32_0 : i32, i32
  }
  func.func @transform_7(%arg0: i32) -> (i32, i32) {
    %c0_i32 = arith.constant 0 : i32
    %c0_i32_0 = arith.constant 0 : i32
    %c0_i32_1 = arith.constant 0 : i32
    return %c0_i32, %c0_i32_0 : i32, i32
  }
  func.func @transform_8(%arg0: i32) -> (i32, i32) {
    %c0_i32 = arith.constant 0 : i32
    %c0_i32_0 = arith.constant 0 : i32
    %c0_i32_1 = arith.constant 0 : i32
    return %c0_i32, %c0_i32_0 : i32, i32
  }
  func.func @transform_9(%arg0: i32) -> (i32, i32, i32, i32) {
    %c0_i32 = arith.constant 0 : i32
    %c0_i32_0 = arith.constant 0 : i32
    %c0_i32_1 = arith.constant 0 : i32
    %c0_i32_2 = arith.constant 0 : i32
    return %arg0, %c0_i32, %c0_i32_0, %c0_i32_1 : i32, i32, i32, i32
  }
}

</mosaic_0001>

<llo_original>
// kernel: bottleneck_pallas.1
$region0: #{bottleneck_pallas.1}
  #allocation0 [shape = 'u32[]', space=smem, size = 0x4, offset = 0x4, fixed_abs, tag = 'smem constant byte address 0x4 - core index']
  #allocation1 [shape = 'u32[144,128]{1,0:T(1,128)}', space=vmem, size = 0x12000, scoped, tag = 'internal scratch']
  #allocation2 [shape = 'f32[18,18,32]{2,1,0:T(8,128)}', space=vmem, size = 0x36000, scoped, tag = 'scratch operand']
  %s0 = inlined_call_operand.vmem [shape: bf16[2,16,16,64], index: 0, kind: input, shape index: {}]
  %s1 = inlined_call_operand.vmem [shape: bf16[64,32], index: 1, kind: input, shape index: {}]
  %s2 = inlined_call_operand.vmem [shape: f32[1,32], index: 2, kind: input, shape index: {}]
  %s3 = inlined_call_operand.vmem [shape: bf16[9,32,32], index: 3, kind: input, shape index: {}]
  %s4 = inlined_call_operand.vmem [shape: f32[1,32], index: 4, kind: input, shape index: {}]
  %s5 = inlined_call_operand.vmem [shape: bf16[32,128], index: 5, kind: input, shape index: {}]
  %s6 = inlined_call_operand.vmem [shape: f32[1,128], index: 6, kind: input, shape index: {}]
  %s7 = inlined_call_operand.vmem [shape: bf16[64,128], index: 7, kind: input, shape index: {}]
  %s8 = inlined_call_operand.vmem [shape: f32[1,128], index: 8, kind: input, shape index: {}]
  %s9 = inlined_call_operand.hbm [shape: f32[2,8,8,128], index: 9, kind: output, shape index: {}]
  %s10 = sld [smem:[#allocation0]]
  $region69: #{bottleneck_pallas.1} parent=0
    _
  %s12 = ssub.s32 1, %s10
  %s13 = scalar_select 0, %s12, %s10
  $region1: #{bottleneck_pallas.1} parent=0
    #allocation3 [shape = 'u8[65536]{0}', space=vmem, size = 0x10000, scoped, tag = 'output window, operand 0']
    #allocation4 [shape = 's32[2]{0}', space=sflag, size = 0x8, scoped, tag = 'scoped memory for bottleneck_pallas.1']
    %14 = vsyncpa [#allocation4], 0
    %s15 = scalar_lea.sflag [#allocation4], 1
    %16 = vsyncpa %s15, 0
    loop: start=0, step=1, limit=4
    $region2: #{bottleneck_pallas.1} parent=1 // loop_pre_header
      _
    $region3: #{bottleneck_pallas.1} parent=1 // loop_header
      %s18 = sphi 0, %s22
      %p19 = scmp.ge.s32.totalorder %s18, 4
      %s28 = sphi 0, %s30
      %s31 = sphi 0, %s28
      %s32 = sphi 0, %s31
      %s48 = sphi 0, %s32
      %s52 = sphi 0, %s52
      %s54 = sphi 0, %s52
      %s55 = sphi 0, %s54
      %s69 = sphi 0, %s55
      %s73 = sphi 0, %s73
      %s75 = sphi 0, %s73
      %s76 = sphi 0, %s75
      %s90 = sphi 0, %s76
      %s94 = sphi 0, %s94
      %s96 = sphi 0, %s94
      %s97 = sphi 0, %s96
      %s111 = sphi 0, %s97
      %s115 = sphi 0, %s115
      %s117 = sphi 0, %s115
      %s118 = sphi 0, %s117
      %s132 = sphi 0, %s118
      %s136 = sphi 0, %s136
      %s138 = sphi 0, %s136
      %s139 = sphi 0, %s138
      %s153 = sphi 0, %s139
      %s157 = sphi 0, %s157
      %s159 = sphi 0, %s157
      %s160 = sphi 0, %s159
      %s174 = sphi 0, %s160
      %s178 = sphi 0, %s178
      %s180 = sphi 0, %s178
      %s181 = sphi 0, %s180
      %s195 = sphi 0, %s181
      %s199 = sphi 0, %s199
      %s201 = sphi 0, %s199
      %s202 = sphi 0, %s201
      %s216 = sphi 0, %s202
      %s222 = sphi 0, %s224
      %s225 = sphi 0, %s222
      %s226 = sphi 0, %s225
      %s242 = sphi 0, %s226
    $region4: #{bottleneck_pallas.1} parent=1 // loop_header_branch
      %21 = sbr.rel (%p19) target = $region8
    $region5: #{bottleneck_pallas.1} parent=1 // loop_body
      %s23 = ssub.s32 %s18, 1
      %s24 = ssub.s32 %s18, 2
      %s25 = sadd.s32 %s18, 1
      %s26 = ssub.s32 %s18, %s25
      %p27 = scmp.eq.s32.totalorder %s26, 0
      %s29 = sadd.s32 %s28, 1
      %s30 = scalar_select %p27, %s28, %s29
      %p33 = pneg %p27
      %p34 = scmp.eq.s32.totalorder %s18, 1
      %p35 = por %p33, %p34
      %p36 = scmp.ne.s32.totalorder %s28, %s31
      %p37 = scmp.eq.s32.totalorder %s18, 0
      %p38 = por %p36, %p37
      %p39 = scmp.ne.s32.totalorder %s28, %s31
      %p40 = scmp.eq.s32.totalorder %s23, 1
      %p41 = por %p39, %p40
      %p42 = scmp.ne.s32.totalorder %s31, %s32
      %p43 = scmp.eq.s32.totalorder %s23, 0
      %p44 = por %p42, %p43
      %p45 = scmp.ne.s32.totalorder %s31, %s32
      %p46 = scmp.eq.s32.totalorder %s24, 1
      %p47 = por %p45, %p46
      %p49 = scmp.ne.s32.totalorder %s32, %s48
      %p50 = scmp.eq.s32.totalorder %s24, 0
      %p51 = por %p49, %p50
      %s53 = sadd.s32 %s52, 1
      %p56 = scmp.eq.s32.totalorder %s18, 1
      %p57 = scmp.ne.s32.totalorder %s52, %s54
      %p58 = scmp.eq.s32.totalorder %s18, 0
      %p59 = por %p57, %p58
      %p60 = scmp.ne.s32.totalorder %s52, %s54
      %p61 = scmp.eq.s32.totalorder %s23, 1
      %p62 = por %p60, %p61
      %p63 = scmp.ne.s32.totalorder %s54, %s55
      %p64 = scmp.eq.s32.totalorder %s23, 0
      %p65 = por %p63, %p64
      %p66 = scmp.ne.s32.totalorder %s54, %s55
      %p67 = scmp.eq.s32.totalorder %s24, 1
      %p68 = por %p66, %p67
      %p70 = scmp.ne.s32.totalorder %s55, %s69
      %p71 = scmp.eq.s32.totalorder %s24, 0
      %p72 = por %p70, %p71
      %s74 = sadd.s32 %s73, 1
      %p77 = scmp.eq.s32.totalorder %s18, 1
      %p78 = scmp.ne.s32.totalorder %s73, %s75
      %p79 = scmp.eq.s32.totalorder %s18, 0
      %p80 = por %p78, %p79
      %p81 = scmp.ne.s32.totalorder %s73, %s75
      %p82 = scmp.eq.s32.totalorder %s23, 1
      %p83 = por %p81, %p82
      %p84 = scmp.ne.s32.totalorder %s75, %s76
      %p85 = scmp.eq.s32.totalorder %s23, 0
      %p86 = por %p84, %p85
      %p87 = scmp.ne.s32.totalorder %s75, %s76
      %p88 = scmp.eq.s32.totalorder %s24, 1
      %p89 = por %p87, %p88
      %p91 = scmp.ne.s32.totalorder %s76, %s90
      %p92 = scmp.eq.s32.totalorder %s24, 0
      %p93 = por %p91, %p92
      %s95 = sadd.s32 %s94, 1
      %p98 = scmp.eq.s32.totalorder %s18, 1
      %p99 = scmp.ne.s32.totalorder %s94, %s96
      %p100 = scmp.eq.s32.totalorder %s18, 0
      %p101 = por %p99, %p100
      %p102 = scmp.ne.s32.totalorder %s94, %s96
      %p103 = scmp.eq.s32.totalorder %s23, 1
      %p104 = por %p102, %p103
      %p105 = scmp.ne.s32.totalorder %s96, %s97
      %p106 = scmp.eq.s32.totalorder %s23, 0
      %p107 = por %p105, %p106
      %p108 = scmp.ne.s32.totalorder %s96, %s97
      %p109 = scmp.eq.s32.totalorder %s24, 1
      %p110 = por %p108, %p109
      %p112 = scmp.ne.s32.totalorder %s97, %s111
      %p113 = scmp.eq.s32.totalorder %s24, 0
      %p114 = por %p112, %p113
      %s116 = sadd.s32 %s115, 1
      %p119 = scmp.eq.s32.totalorder %s18, 1
      %p120 = scmp.ne.s32.totalorder %s115, %s117
      %p121 = scmp.eq.s32.totalorder %s18, 0
      %p122 = por %p120, %p121
      %p123 = scmp.ne.s32.totalorder %s115, %s117
      %p124 = scmp.eq.s32.totalorder %s23, 1
      %p125 = por %p123, %p124
      %p126 = scmp.ne.s32.totalorder %s117, %s118
      %p127 = scmp.eq.s32.totalorder %s23, 0
      %p128 = por %p126, %p127
      %p129 = scmp.ne.s32.totalorder %s117, %s118
      %p130 = scmp.eq.s32.totalorder %s24, 1
      %p131 = por %p129, %p130
      %p133 = scmp.ne.s32.totalorder %s118, %s132
      %p134 = scmp.eq.s32.totalorder %s24, 0
      %p135 = por %p133, %p134
      %s137 = sadd.s32 %s136, 1
      %p140 = scmp.eq.s32.totalorder %s18, 1
      %p141 = scmp.ne.s32.totalorder %s136, %s138
      %p142 = scmp.eq.s32.totalorder %s18, 0
      %p143 = por %p141, %p142
      %p144 = scmp.ne.s32.totalorder %s136, %s138
      %p145 = scmp.eq.s32.totalorder %s23, 1
      %p146 = por %p144, %p145
      %p147 = scmp.ne.s32.totalorder %s138, %s139
      %p148 = scmp.eq.s32.totalorder %s23, 0
      %p149 = por %p147, %p148
      %p150 = scmp.ne.s32.totalorder %s138, %s139
      %p151 = scmp.eq.s32.totalorder %s24, 1
      %p152 = por %p150, %p151
      %p154 = scmp.ne.s32.totalorder %s139, %s153
      %p155 = scmp.eq.s32.totalorder %s24, 0
      %p156 = por %p154, %p155
      %s158 = sadd.s32 %s157, 1
      %p161 = scmp.eq.s32.totalorder %s18, 1
      %p162 = scmp.ne.s32.totalorder %s157, %s159
      %p163 = scmp.eq.s32.totalorder %s18, 0
      %p164 = por %p162, %p163
      %p165 = scmp.ne.s32.totalorder %s157, %s159
      %p166 = scmp.eq.s32.totalorder %s23, 1
      %p167 = por %p165, %p166
      %p168 = scmp.ne.s32.totalorder %s159, %s160
      %p169 = scmp.eq.s32.totalorder %s23, 0
      %p170 = por %p168, %p169
      %p171 = scmp.ne.s32.totalorder %s159, %s160
      %p172 = scmp.eq.s32.totalorder %s24, 1
      %p173 = por %p171, %p172
      %p175 = scmp.ne.s32.totalorder %s160, %s174
      %p176 = scmp.eq.s32.totalorder %s24, 0
      %p177 = por %p175, %p176
      %s179 = sadd.s32 %s178, 1
      %p182 = scmp.eq.s32.totalorder %s18, 1
      %p183 = scmp.ne.s32.totalorder %s178, %s180
      %p184 = scmp.eq.s32.totalorder %s18, 0
      %p185 = por %p183, %p184
      %p186 = scmp.ne.s32.totalorder %s178, %s180
      %p187 = scmp.eq.s32.totalorder %s23, 1
      %p188 = por %p186, %p187
      %p189 = scmp.ne.s32.totalorder %s180, %s181
      %p190 = scmp.eq.s32.totalorder %s23, 0
      %p191 = por %p189, %p190
      %p192 = scmp.ne.s32.totalorder %s180, %s181
      %p193 = scmp.eq.s32.totalorder %s24, 1
      %p194 = por %p192, %p193
      %p196 = scmp.ne.s32.totalorder %s181, %s195
      %p197 = scmp.eq.s32.totalorder %s24, 0
      %p198 = por %p196, %p197
      %s200 = sadd.s32 %s199, 1
      %p203 = scmp.eq.s32.totalorder %s18, 1
      %p204 = scmp.ne.s32.totalorder %s199, %s201
      %p205 = scmp.eq.s32.totalorder %s18, 0
      %p206 = por %p204, %p205
      %p207 = scmp.ne.s32.totalorder %s199, %s201
      %p208 = scmp.eq.s32.totalorder %s23, 1
      %p209 = por %p207, %p208
      %p210 = scmp.ne.s32.totalorder %s201, %s202
      %p211 = scmp.eq.s32.totalorder %s23, 0
      %p212 = por %p210, %p211
      %p213 = scmp.ne.s32.totalorder %s201, %s202
      %p214 = scmp.eq.s32.totalorder %s24, 1
      %p215 = por %p213, %p214
      %p217 = scmp.ne.s32.totalorder %s202, %s216
      %p218 = scmp.eq.s32.totalorder %s24, 0
      %p219 = por %p217, %p218
      %s220 = ssub.s32 %s18, %s25
      %p221 = scmp.eq.s32.totalorder %s220, 0
      %s223 = sadd.s32 %s222, 1
      %s224 = scalar_select %p221, %s222, %s223
      %p227 = pneg %p221
      %p228 = scmp.eq.s32.totalorder %s18, 1
      %p229 = por %p227, %p228
      %p230 = scmp.ne.s32.totalorder %s222, %s225
      %p231 = scmp.eq.s32.totalorder %s18, 0
      %p232 = por %p230, %p231
      %p233 = scmp.ne.s32.totalorder %s222, %s225
      %p234 = scmp.eq.s32.totalorder %s23, 1
      %p235 = por %p233, %p234
      %p236 = scmp.ne.s32.totalorder %s225, %s226
      %p237 = scmp.eq.s32.totalorder %s23, 0
      %p238 = por %p236, %p237
      %p239 = scmp.ne.s32.totalorder %s225, %s226
      %p240 = scmp.eq.s32.totalorder %s24, 1
      %p241 = por %p239, %p240
      %p243 = scmp.ne.s32.totalorder %s226, %s242
      %p244 = scmp.eq.s32.totalorder %s24, 0
      %p245 = por %p243, %p244
      %p246 = scmp.le.s32.totalorder 1, %s18
      %p247 = scmp.lt.s32.totalorder %s18, 3
      %p248 = pnand %p246, %p247
      %p249 = pneg %p248
      // Predicated region
      $region9: #{bottleneck_pallas.1} parent=5 // pred_check
        _
      $region10: #{bottleneck_pallas.1} parent=5 // pred_check_branch
        %251 = sbr.rel (%p248) target = $region12
      $region11: #{bottleneck_pallas.1} parent=5 // pred_region
        %s252 = ssub.s32 %s18, 1
        // Predicated region
        $region13: #{bottleneck_pallas.1} parent=11 // pred_check
          %p253 = pneg %p65
        $region14: #{bottleneck_pallas.1} parent=11 // pred_check_branch
          %255 = sbr.rel (%p253) target = $region16
        $region15: #{bottleneck_pallas.1} parent=11 // pred_region
          _
        $region16: #{bottleneck_pallas.1} parent=11 // pred_fallthru
          _
        // Predicated region
        $region17: #{bottleneck_pallas.1} parent=11 // pred_check
          %p256 = pneg %p86
        $region18: #{bottleneck_pallas.1} parent=11 // pred_check_branch
          %258 = sbr.rel (%p256) target = $region20
        $region19: #{bottleneck_pallas.1} parent=11 // pred_region
          _
        $region20: #{bottleneck_pallas.1} parent=11 // pred_fallthru
          _
        // Predicated region
        $region21: #{bottleneck_pallas.1} parent=11 // pred_check
          %p259 = pneg %p107
        $region22: #{bottleneck_pallas.1} parent=11 // pred_check_branch
          %261 = sbr.rel (%p259) target = $region24
        $region23: #{bottleneck_pallas.1} parent=11 // pred_region
          _
        $region24: #{bottleneck_pallas.1} parent=11 // pred_fallthru
          _
        // Predicated region
        $region25: #{bottleneck_pallas.1} parent=11 // pred_check
          %p262 = pneg %p128
        $region26: #{bottleneck_pallas.1} parent=11 // pred_check_branch
          %264 = sbr.rel (%p262) target = $region28
        $region27: #{bottleneck_pallas.1} parent=11 // pred_region
          _
        $region28: #{bottleneck_pallas.1} parent=11 // pred_fallthru
          _
        // Predicated region
        $region29: #{bottleneck_pallas.1} parent=11 // pred_check
          %p265 = pneg %p149
        $region30: #{bottleneck_pallas.1} parent=11 // pred_check_branch
          %267 = sbr.rel (%p265) target = $region32
        $region31: #{bottleneck_pallas.1} parent=11 // pred_region
          _
        $region32: #{bottleneck_pallas.1} parent=11 // pred_fallthru
          _
        // Predicated region
        $region33: #{bottleneck_pallas.1} parent=11 // pred_check
          %p268 = pneg %p170
        $region34: #{bottleneck_pallas.1} parent=11 // pred_check_branch
          %270 = sbr.rel (%p268) target = $region36
        $region35: #{bottleneck_pallas.1} parent=11 // pred_region
          _
        $region36: #{bottleneck_pallas.1} parent=11 // pred_fallthru
          _
        // Predicated region
        $region37: #{bottleneck_pallas.1} parent=11 // pred_check
          %p271 = pneg %p191
        $region38: #{bottleneck_pallas.1} parent=11 // pred_check_branch
          %273 = sbr.rel (%p271) target = $region40
        $region39: #{bottleneck_pallas.1} parent=11 // pred_region
          _
        $region40: #{bottleneck_pallas.1} parent=11 // pred_fallthru
          _
        // Predicated region
        $region41: #{bottleneck_pallas.1} parent=11 // pred_check
          %p274 = pneg %p212
        $region42: #{bottleneck_pallas.1} parent=11 // pred_check_branch
          %276 = sbr.rel (%p274) target = $region44
        $region43: #{bottleneck_pallas.1} parent=11 // pred_region
          _
        $region44: #{bottleneck_pallas.1} parent=11 // pred_fallthru
          _
      $region12: #{bottleneck_pallas.1} parent=5 // pred_fallthru
        _
      %p277 = scmp.lt.s32.totalorder %s18, 2
      // Predicated region
      $region45: #{bottleneck_pallas.1} parent=5 // pred_check
        %p278 = pneg %p277
      $region46: #{bottleneck_pallas.1} parent=5 // pred_check_branch
        %280 = sbr.rel (%p278) target = $region48
      $region47: #{bottleneck_pallas.1} parent=5 // pred_region
        // Predicated region
        $region49: #{bottleneck_pallas.1} parent=47 // pred_check
          %p281 = pneg %p38
        $region50: #{bottleneck_pallas.1} parent=47 // pred_check_branch
          %283 = sbr.rel (%p281) target = $region52
        $region51: #{bottleneck_pallas.1} parent=47 // pred_region
          %p284 = scmp.lt.s32.totalorder %s18, 1
          %s285 = scalar_select %p284, %s18, 1
          %s286 = smul.addr %s285, 32
          %s287 = smul.addr %s286, 4
          %s288 = scalar_lea.vmem %s0, %s287
        $region52: #{bottleneck_pallas.1} parent=47 // pred_fallthru
          _
      $region48: #{bottleneck_pallas.1} parent=5 // pred_fallthru
        _
      %p289 = scmp.le.s32.totalorder 1, %s18
      %p290 = scmp.lt.s32.totalorder %s18, 3
      %p291 = pnand %p289, %p290
      %p292 = pneg %p291
      // Predicated region
      $region53: #{bottleneck_pallas.1} parent=5 // pred_check
        _
      $region54: #{bottleneck_pallas.1} parent=5 // pred_check_branch
        %294 = sbr.rel (%p291) target = $region56
      $region55: #{bottleneck_pallas.1} parent=5 // pred_region
        %s295 = ssub.s32 %s18, 1
        %p296 = scmp.lt.s32.totalorder %s23, 1
        %s297 = scalar_select %p296, %s23, 1
        %s298 = smul.addr %s297, 32
        %s299 = smul.addr %s298, 4
        %s300 = scalar_lea.vmem %s0, %s299
        %p301 = pneg %p44
        %p302 = pneg %p41
        %p303 = pneg %p65
        %p304 = pneg %p62
        %p305 = pneg %p86
        %p306 = pneg %p83
        %p307 = pneg %p107
        %p308 = pneg %p104
        %p309 = pneg %p128
        %p310 = pneg %p125
        %p311 = pneg %p149
        %p312 = pneg %p146
        %p313 = pneg %p170
        %p314 = pneg %p167
        %p315 = pneg %p191
        %p316 = pneg %p188
        %p317 = pneg %p212
        %p318 = pneg %p209
        %p319 = pneg %p238
        %p320 = pneg %p235
        %s321 = sand.u32 %s225, 1
        %s322 = scalar_lea.sflag [#allocation4], %s321
        %s323 = sand.u32 %s225, 1
        %s324 = smul.addr %s323, 64
        %s325 = scalar_lea.vmem [#allocation3], %s324
        %p326 = scmp.lt.s32.totalorder %s23, 1
        %s327 = scalar_select %p326, %s23, 1
        %s328 = smul.addr %s327, 32
        %s329 = smul.addr %s328, 4
        %s330 = scalar_lea.vmem %s0, %s329
        %v332 = vld [vmem:[%s330] sm:$0xf]
        %v333 = vld [vmem:[%s330 + $0x4] sm:$0xf]
        %v334 = vld [vmem:[%s330 + $0x8] sm:$0xf]
        %v335 = vld [vmem:[%s330 + $0xc] sm:$0xf]
        %v336 = vld [vmem:[%s330 + $0x10] sm:$0xf]
        %v337 = vld [vmem:[%s330 + $0x14] sm:$0xf]
        %v338 = vld [vmem:[%s330 + $0x18] sm:$0xf]
        %v339 = vld [vmem:[%s330 + $0x1c] sm:$0xf]
        %v340 = vld [vmem:[%s330 + $0x20] sm:$0xf]
        %v341 = vld [vmem:[%s330 + $0x24] sm:$0xf]
        %v342 = vld [vmem:[%s330 + $0x28] sm:$0xf]
        %v343 = vld [vmem:[%s330 + $0x2c] sm:$0xf]
        %v344 = vld [vmem:[%s330 + $0x30] sm:$0xf]
        %v345 = vld [vmem:[%s330 + $0x34] sm:$0xf]
        %v346 = vld [vmem:[%s330 + $0x38] sm:$0xf]
        %v347 = vld [vmem:[%s330 + $0x3c] sm:$0xf]
        %v348 = vld [vmem:[%s330 + $0x40] sm:$0xf]
        %v349 = vld [vmem:[%s330 + $0x44] sm:$0xf]
        %v350 = vld [vmem:[%s330 + $0x48] sm:$0xf]
        %v351 = vld [vmem:[%s330 + $0x4c] sm:$0xf]
        %v352 = vld [vmem:[%s330 + $0x50] sm:$0xf]
        %v353 = vld [vmem:[%s330 + $0x54] sm:$0xf]
        %v354 = vld [vmem:[%s330 + $0x58] sm:$0xf]
        %v355 = vld [vmem:[%s330 + $0x5c] sm:$0xf]
        %v356 = vld [vmem:[%s330 + $0x60] sm:$0xf]
        %v357 = vld [vmem:[%s330 + $0x64] sm:$0xf]
        %v358 = vld [vmem:[%s330 + $0x68] sm:$0xf]
        %v359 = vld [vmem:[%s330 + $0x6c] sm:$0xf]
        %v360 = vld [vmem:[%s330 + $0x70] sm:$0xf]
        %v361 = vld [vmem:[%s330 + $0x74] sm:$0xf]
        %v362 = vld [vmem:[%s330 + $0x78] sm:$0xf]
        %v363 = vld [vmem:[%s330 + $0x7c] sm:$0xf]
        %v364 = vld [vmem:[%s1] sm:$0xf]
        %v365 = vld [vmem:[%s1 + $0x4] sm:$0xf]
        %v366 = vld [vmem:[%s1 + $0x8] sm:$0xf]
        %v367 = vld [vmem:[%s1 + $0xc] sm:$0xf]
        %v368 = vld [vmem:[%s1 + $0x10] sm:$0xf]
        %v369 = vld [vmem:[%s1 + $0x14] sm:$0xf]
        %v370 = vld [vmem:[%s1 + $0x18] sm:$0xf]
        %v371 = vld [vmem:[%s1 + $0x1c] sm:$0xf]
        %v372 = vld [vmem:[%s2] sm:$0x1]
        %v374 = vlaneseq
        %v375 = vshrl.u32 %v374, 7
        %v376 = vsub.s32 0, %v375
        %v377 = vrot.slane %v372, %v376
        %v411 = vunpack.c.l.b16 %v332
        %v412 = vunpack.c.l.b16 %v333
        %v413 = vunpack.c.l.b16 %v334
        %v414 = vunpack.c.l.b16 %v335
        %v415 = vunpack.c.l.b16 %v336
        %v416 = vunpack.c.l.b16 %v337
        %v417 = vunpack.c.l.b16 %v338
        %v418 = vunpack.c.l.b16 %v339
        %v419 = vunpack.c.l.b16 %v340
        %v420 = vunpack.c.l.b16 %v341
        %v421 = vunpack.c.l.b16 %v342
        %v422 = vunpack.c.l.b16 %v343
        %v423 = vunpack.c.l.b16 %v344
        %v424 = vunpack.c.l.b16 %v345
        %v425 = vunpack.c.l.b16 %v346
        %v426 = vunpack.c.l.b16 %v347
        %v427 = vunpack.c.l.b16 %v348
        %v428 = vunpack.c.l.b16 %v349
        %v429 = vunpack.c.l.b16 %v350
        %v430 = vunpack.c.l.b16 %v351
        %v431 = vunpack.c.l.b16 %v352
        %v432 = vunpack.c.l.b16 %v353
        %v433 = vunpack.c.l.b16 %v354
        %v434 = vunpack.c.l.b16 %v355
        %v435 = vunpack.c.l.b16 %v356
        %v436 = vunpack.c.l.b16 %v357
        %v437 = vunpack.c.l.b16 %v358
        %v438 = vunpack.c.l.b16 %v359
        %v439 = vunpack.c.l.b16 %v360
        %v440 = vunpack.c.l.b16 %v361
        %v441 = vunpack.c.l.b16 %v362
        %v442 = vunpack.c.l.b16 %v363
        %v443 = vpack.c.b16 %v412, %v411
        %v444 = vpack.c.b16 %v414, %v413
        %v445 = vpack.c.b16 %v416, %v415
        %v446 = vpack.c.b16 %v418, %v417
        %v447 = vpack.c.b16 %v420, %v419
        %v448 = vpack.c.b16 %v422, %v421
        %v449 = vpack.c.b16 %v424, %v423
        %v450 = vpack.c.b16 %v426, %v425
        %v451 = vpack.c.b16 %v428, %v427
        %v452 = vpack.c.b16 %v430, %v429
        %v453 = vpack.c.b16 %v432, %v431
        %v454 = vpack.c.b16 %v434, %v433
        %v455 = vpack.c.b16 %v436, %v435
        %v456 = vpack.c.b16 %v438, %v437
        %v457 = vpack.c.b16 %v440, %v439
        %v458 = vpack.c.b16 %v442, %v441
        %v467 = vunpack.c.l.b16 %v364
        %v468 = vunpack.c.l.b16 %v365
        %v469 = vunpack.c.l.b16 %v366
        %v470 = vunpack.c.l.b16 %v367
        %v471 = vunpack.c.l.b16 %v368
        %v472 = vunpack.c.l.b16 %v369
        %v473 = vunpack.c.l.b16 %v370
        %v474 = vunpack.c.l.b16 %v371
        %v475 = vpack.c.b16 %v468, %v467
        %v476 = vpack.c.b16 %v470, %v469
        %v477 = vpack.c.b16 %v472, %v471
        %v478 = vpack.c.b16 %v474, %v473
        %vm483 = vcmask 523264
        %v485 = vsel %vm483, %v443, 0
        %v488 = vsel %vm483, %v444, 0
        %v491 = vsel %vm483, %v445, 0
        %v494 = vsel %vm483, %v446, 0
        %v497 = vsel %vm483, %v447, 0
        %v500 = vsel %vm483, %v448, 0
        %v503 = vsel %vm483, %v449, 0
        %v506 = vsel %vm483, %v450, 0
        %v509 = vsel %vm483, %v451, 0
        %v512 = vsel %vm483, %v452, 0
        %v515 = vsel %vm483, %v453, 0
        %v518 = vsel %vm483, %v454, 0
        %v521 = vsel %vm483, %v455, 0
        %v524 = vsel %vm483, %v456, 0
        %v527 = vsel %vm483, %v457, 0
        %v530 = vsel %vm483, %v458, 0
        %532 = vmatprep.subr.bf16.mxu0 0
        %533 = vmatpush1.bf16.msra.mxu0 %v475
        %534 = vmatprep.subr.bf16.mxu0 0
        %535 = vmatpush1.bf16.msra.mxu0 %v476
        %536 = vmatprep.subr.bf16.mxu0 0
        %537 = vmatpush1.bf16.msra.mxu0 %v477
        %538 = vmatprep.subr.bf16.mxu0 0
        %539 = vmatpush1.bf16.msra.mxu0 %v478
        %540 = vmatprep.subr.bf16.mxu0 0
        %541 = vmatpush1.bf16.msra.mxu0 0
        %542 = vmatprep.subr.bf16.mxu0 0
        %543 = vmatpush1.bf16.msra.mxu0 0
        %544 = vmatprep.subr.bf16.mxu0 0
        %545 = vmatpush1.bf16.msra.mxu0 0
        %546 = vmatprep.subr.bf16.mxu0 0
        %547 = vmatpush1.bf16.msra.mxu0 0
        %548 = vmatprep.subr.bf16.mxu0 0
        %549 = vmatpush1.bf16.msra.mxu0 0
        %550 = vmatprep.subr.bf16.mxu0 0
        %551 = vmatpush1.bf16.msra.mxu0 0
        %552 = vmatprep.subr.bf16.mxu0 0
        %553 = vmatpush1.bf16.msra.mxu0 0
        %554 = vmatprep.subr.bf16.mxu0 0
        %555 = vmatpush1.bf16.msra.mxu0 0
        %556 = vmatprep.subr.bf16.mxu0 0
        %557 = vmatpush1.bf16.msra.mxu0 0
        %558 = vmatprep.subr.bf16.mxu0 0
        %559 = vmatpush1.bf16.msra.mxu0 0
        %560 = vmatprep.subr.bf16.mxu0 0
        %561 = vmatpush1.bf16.msra.mxu0 0
        %562 = vmatprep.subr.bf16.mxu0 0
        %563 = vmatpush1.bf16.msra.mxu0 0
        %564 = vmatprep.mubr.bf16.mxu0 0
        %565 = vmatmul.mubr.bf16.gmra.mrb[0].mxu0 %v485
        %v566 = vpop.f32.mrb[0].mxu0
        %v567 = vadd.f32 %v377, %v566
        %v568 = vpop.f32.mrb[0].mxu0
        %v569 = vpop.f32.mrb[0].mxu0
        %v570 = vadd.f32 %v377, %v569
        %v571 = vpop.f32.mrb[0].mxu0
        %572 = vmatprep.mubr.bf16.mxu0 0
        %573 = vmatmul.mubr.bf16.gmra.mrb[0].mxu0 %v488
        %v574 = vpop.f32.mrb[0].mxu0
        %v575 = vadd.f32 %v377, %v574
        %v576 = vpop.f32.mrb[0].mxu0
        %v577 = vpop.f32.mrb[0].mxu0
        %v578 = vadd.f32 %v377, %v577
        %v579 = vpop.f32.mrb[0].mxu0
        %580 = vmatprep.mubr.bf16.mxu0 0
        %581 = vmatmul.mubr.bf16.gmra.mrb[0].mxu0 %v491
        %v582 = vpop.f32.mrb[0].mxu0
        %v583 = vadd.f32 %v377, %v582
        %v584 = vpop.f32.mrb[0].mxu0
        %v585 = vpop.f32.mrb[0].mxu0
        %v586 = vadd.f32 %v377, %v585
        %v587 = vpop.f32.mrb[0].mxu0
        %588 = vmatprep.mubr.bf16.mxu0 0
        %589 = vmatmul.mubr.bf16.gmra.mrb[0].mxu0 %v494
        %v590 = vpop.f32.mrb[0].mxu0
        %v591 = vadd.f32 %v377, %v590
        %v592 = vpop.f32.mrb[0].mxu0
        %v593 = vpop.f32.mrb[0].mxu0
        %v594 = vadd.f32 %v377, %v593
        %v595 = vpop.f32.mrb[0].mxu0
        %596 = vmatprep.mubr.bf16.mxu0 0
        %597 = vmatmul.mubr.bf16.gmra.mrb[0].mxu0 %v497
        %v598 = vpop.f32.mrb[0].mxu0
        %v599 = vadd.f32 %v377, %v598
        %v600 = vpop.f32.mrb[0].mxu0
        %v601 = vpop.f32.mrb[0].mxu0
        %v602 = vadd.f32 %v377, %v601
        %v603 = vpop.f32.mrb[0].mxu0
        %604 = vmatprep.mubr.bf16.mxu0 0
        %605 = vmatmul.mubr.bf16.gmra.mrb[0].mxu0 %v500
        %v606 = vpop.f32.mrb[0].mxu0
        %v607 = vadd.f32 %v377, %v606
        %v608 = vpop.f32.mrb[0].mxu0
        %v609 = vpop.f32.mrb[0].mxu0
        %v610 = vadd.f32 %v377, %v609
        %v611 = vpop.f32.mrb[0].mxu0
        %612 = vmatprep.mubr.bf16.mxu0 0
        %613 = vmatmul.mubr.bf16.gmra.mrb[0].mxu0 %v503
        %v614 = vpop.f32.mrb[0].mxu0
        %v615 = vadd.f32 %v377, %v614
        %v616 = vpop.f32.mrb[0].mxu0
        %v617 = vpop.f32.mrb[0].mxu0
        %v618 = vadd.f32 %v377, %v617
        %v619 = vpop.f32.mrb[0].mxu0
        %620 = vmatprep.mubr.bf16.mxu0 0
        %621 = vmatmul.mubr.bf16.gmra.mrb[0].mxu0 %v506
        %v622 = vpop.f32.mrb[0].mxu0
        %v623 = vadd.f32 %v377, %v622
        %v624 = vpop.f32.mrb[0].mxu0
        %v625 = vpop.f32.mrb[0].mxu0
        %v626 = vadd.f32 %v377, %v625
        %v627 = vpop.f32.mrb[0].mxu0
        %628 = vmatprep.mubr.bf16.mxu0 0
        %629 = vmatmul.mubr.bf16.gmra.mrb[0].mxu0 %v509
        %v630 = vpop.f32.mrb[0].mxu0
        %v631 = vadd.f32 %v377, %v630
        %v632 = vpop.f32.mrb[0].mxu0
        %v633 = vpop.f32.mrb[0].mxu0
        %v634 = vadd.f32 %v377, %v633
        %v635 = vpop.f32.mrb[0].mxu0
        %636 = vmatprep.mubr.bf16.mxu0 0
        %637 = vmatmul.mubr.bf16.gmra.mrb[0].mxu0 %v512
        %v638 = vpop.f32.mrb[0].mxu0
        %v639 = vadd.f32 %v377, %v638
        %v640 = vpop.f32.mrb[0].mxu0
        %v641 = vpop.f32.mrb[0].mxu0
        %v642 = vadd.f32 %v377, %v641
        %v643 = vpop.f32.mrb[0].mxu0
        %644 = vmatprep.mubr.bf16.mxu0 0
        %645 = vmatmul.mubr.bf16.gmra.mrb[0].mxu0 %v515
        %v646 = vpop.f32.mrb[0].mxu0
        %v647 = vadd.f32 %v377, %v646
        %v648 = vpop.f32.mrb[0].mxu0
        %v649 = vpop.f32.mrb[0].mxu0
        %v650 = vadd.f32 %v377, %v649
        %v651 = vpop.f32.mrb[0].mxu0
        %652 = vmatprep.mubr.bf16.mxu0 0
        %653 = vmatmul.mubr.bf16.gmra.mrb[0].mxu0 %v518
        %v654 = vpop.f32.mrb[0].mxu0
        %v655 = vadd.f32 %v377, %v654
        %v656 = vpop.f32.mrb[0].mxu0
        %v657 = vpop.f32.mrb[0].mxu0
        %v658 = vadd.f32 %v377, %v657
        %v659 = vpop.f32.mrb[0].mxu0
        %660 = vmatprep.mubr.bf16.mxu0 0
        %661 = vmatmul.mubr.bf16.gmra.mrb[0].mxu0 %v521
        %v662 = vpop.f32.mrb[0].mxu0
        %v663 = vadd.f32 %v377, %v662
        %v664 = vpop.f32.mrb[0].mxu0
        %v665 = vpop.f32.mrb[0].mxu0
        %v666 = vadd.f32 %v377, %v665
        %v667 = vpop.f32.mrb[0].mxu0
        %668 = vmatprep.mubr.bf16.mxu0 0
        %669 = vmatmul.mubr.bf16.gmra.mrb[0].mxu0 %v524
        %v670 = vpop.f32.mrb[0].mxu0
        %v671 = vadd.f32 %v377, %v670
        %v672 = vpop.f32.mrb[0].mxu0
        %v673 = vpop.f32.mrb[0].mxu0
        %v674 = vadd.f32 %v377, %v673
        %v675 = vpop.f32.mrb[0].mxu0
        %676 = vmatprep.mubr.bf16.mxu0 0
        %677 = vmatmul.mubr.bf16.gmra.mrb[0].mxu0 %v527
        %v678 = vpop.f32.mrb[0].mxu0
        %v679 = vadd.f32 %v377, %v678
        %v680 = vpop.f32.mrb[0].mxu0
        %v681 = vpop.f32.mrb[0].mxu0
        %v682 = vadd.f32 %v377, %v681
        %v683 = vpop.f32.mrb[0].mxu0
        %684 = vmatprep.mubr.bf16.mxu0 0
        %685 = vmatmul.mubr.bf16.gmra.mrb[0].mxu0 %v530
        %v686 = vpop.f32.mrb[0].mxu0
        %v687 = vadd.f32 %v377, %v686
        %v688 = vpop.f32.mrb[0].mxu0
        %v689 = vpop.f32.mrb[0].mxu0
        %v690 = vadd.f32 %v377, %v689
        %v691 = vpop.f32.mrb[0].mxu0
        %692 = vdwg.mxu0
        %v693 = vmax.f32 %v567, 0.0
        %v694 = vmax.f32 %v570, 0.0
        %v695 = vmax.f32 %v575, 0.0
        %v696 = vmax.f32 %v578, 0.0
        %v697 = vmax.f32 %v583, 0.0
        %v698 = vmax.f32 %v586, 0.0
        %v699 = vmax.f32 %v591, 0.0
        %v700 = vmax.f32 %v594, 0.0
        %v701 = vmax.f32 %v599, 0.0
        %v702 = vmax.f32 %v602, 0.0
        %v703 = vmax.f32 %v607, 0.0
        %v704 = vmax.f32 %v610, 0.0
        %v705 = vmax.f32 %v615, 0.0
        %v706 = vmax.f32 %v618, 0.0
        %v707 = vmax.f32 %v623, 0.0
        %v708 = vmax.f32 %v626, 0.0
        %v709 = vmax.f32 %v631, 0.0
        %v710 = vmax.f32 %v634, 0.0
        %v711 = vmax.f32 %v639, 0.0
        %v712 = vmax.f32 %v642, 0.0
        %v713 = vmax.f32 %v647, 0.0
        %v714 = vmax.f32 %v650, 0.0
        %v715 = vmax.f32 %v655, 0.0
        %v716 = vmax.f32 %v658, 0.0
        %v717 = vmax.f32 %v663, 0.0
        %v718 = vmax.f32 %v666, 0.0
        %v719 = vmax.f32 %v671, 0.0
        %v720 = vmax.f32 %v674, 0.0
        %v721 = vmax.f32 %v679, 0.0
        %v722 = vmax.f32 %v682, 0.0
        %v723 = vmax.f32 %v687, 0.0
        %v724 = vmax.f32 %v690, 0.0
        %vm725 = vcmask 261120
        %726 = vst.msk [vmem:[#allocation2] sm:$0xff] %vm725, 0.0
        %727 = vst.msk [vmem:[#allocation2 + $0x8] sm:$0xff] %vm725, 0.0
        %vm728 = vcmask 254976
        %729 = vst.msk [vmem:[#allocation2 + $0x10] sm:$0x3] %vm728, 0.0
        %730 = vst.msk [vmem:[#allocation2 + $0x18] sm:$0xff] %vm725, 0.0
        %731 = vst.msk [vmem:[#allocation2 + $0x20] sm:$0xff] %vm725, 0.0
        %732 = vst.msk [vmem:[#allocation2 + $0x28] sm:$0x3] %vm728, 0.0
        %733 = vst.msk [vmem:[#allocation2 + $0x30] sm:$0xff] %vm725, 0.0
        %734 = vst.msk [vmem:[#allocation2 + $0x38] sm:$0xff] %vm725, 0.0
        %735 = vst.msk [vmem:[#allocation2 + $0x40] sm:$0x3] %vm728, 0.0
        %736 = vst.msk [vmem:[#allocation2 + $0x48] sm:$0xff] %vm725, 0.0
        %737 = vst.msk [vmem:[#allocation2 + $0x50] sm:$0xff] %vm725, 0.0
        %738 = vst.msk [vmem:[#allocation2 + $0x58] sm:$0x3] %vm728, 0.0
        %739 = vst.msk [vmem:[#allocation2 + $0x60] sm:$0xff] %vm725, 0.0
        %740 = vst.msk [vmem:[#allocation2 + $0x68] sm:$0xff] %vm725, 0.0
        %741 = vst.msk [vmem:[#allocation2 + $0x70] sm:$0x3] %vm728, 0.0
        %742 = vst.msk [vmem:[#allocation2 + $0x78] sm:$0xff] %vm725, 0.0
        %743 = vst.msk [vmem:[#allocation2 + $0x80] sm:$0xff] %vm725, 0.0
        %744 = vst.msk [vmem:[#allocation2 + $0x88] sm:$0x3] %vm728, 0.0
        %745 = vst.msk [vmem:[#allocation2 + $0x90] sm:$0xff] %vm725, 0.0
        %746 = vst.msk [vmem:[#allocation2 + $0x98] sm:$0xff] %vm725, 0.0
        %747 = vst.msk [vmem:[#allocation2 + $0xa0] sm:$0x3] %vm728, 0.0
        %748 = vst.msk [vmem:[#allocation2 + $0xa8] sm:$0xff] %vm725, 0.0
        %749 = vst.msk [vmem:[#allocation2 + $0xb0] sm:$0xff] %vm725, 0.0
        %750 = vst.msk [vmem:[#allocation2 + $0xb8] sm:$0x3] %vm728, 0.0
        %751 = vst.msk [vmem:[#allocation2 + $0xc0] sm:$0xff] %vm725, 0.0
        %752 = vst.msk [vmem:[#allocation2 + $0xc8] sm:$0xff] %vm725, 0.0
        %753 = vst.msk [vmem:[#allocation2 + $0xd0] sm:$0x3] %vm728, 0.0
        %754 = vst.msk [vmem:[#allocation2 + $0xd8] sm:$0xff] %vm725, 0.0
        %755 = vst.msk [vmem:[#allocation2 + $0xe0] sm:$0xff] %vm725, 0.0
        %756 = vst.msk [vmem:[#allocation2 + $0xe8] sm:$0x3] %vm728, 0.0
        %757 = vst.msk [vmem:[#allocation2 + $0xf0] sm:$0xff] %vm725, 0.0
        %758 = vst.msk [vmem:[#allocation2 + $0xf8] sm:$0xff] %vm725, 0.0
        %759 = vst.msk [vmem:[#allocation2 + $0x100] sm:$0x3] %vm728, 0.0
        %760 = vst.msk [vmem:[#allocation2 + $0x108] sm:$0xff] %vm725, 0.0
        %761 = vst.msk [vmem:[#allocation2 + $0x110] sm:$0xff] %vm725, 0.0
        %762 = vst.msk [vmem:[#allocation2 + $0x118] sm:$0x3] %vm728, 0.0
        %763 = vst.msk [vmem:[#allocation2 + $0x120] sm:$0xff] %vm725, 0.0
        %764 = vst.msk [vmem:[#allocation2 + $0x128] sm:$0xff] %vm725, 0.0
        %765 = vst.msk [vmem:[#allocation2 + $0x130] sm:$0x3] %vm728, 0.0
        %766 = vst.msk [vmem:[#allocation2 + $0x138] sm:$0xff] %vm725, 0.0
        %767 = vst.msk [vmem:[#allocation2 + $0x140] sm:$0xff] %vm725, 0.0
        %768 = vst.msk [vmem:[#allocation2 + $0x148] sm:$0x3] %vm728, 0.0
        %769 = vst.msk [vmem:[#allocation2 + $0x150] sm:$0xff] %vm725, 0.0
        %770 = vst.msk [vmem:[#allocation2 + $0x158] sm:$0xff] %vm725, 0.0
        %771 = vst.msk [vmem:[#allocation2 + $0x160] sm:$0x3] %vm728, 0.0
        %772 = vst.msk [vmem:[#allocation2 + $0x168] sm:$0xff] %vm725, 0.0
        %773 = vst.msk [vmem:[#allocation2 + $0x170] sm:$0xff] %vm725, 0.0
        %774 = vst.msk [vmem:[#allocation2 + $0x178] sm:$0x3] %vm728, 0.0
        %775 = vst.msk [vmem:[#allocation2 + $0x180] sm:$0xff] %vm725, 0.0
        %776 = vst.msk [vmem:[#allocation2 + $0x188] sm:$0xff] %vm725, 0.0
        %777 = vst.msk [vmem:[#allocation2 + $0x190] sm:$0x3] %vm728, 0.0
        %778 = vst.msk [vmem:[#allocation2 + $0x198] sm:$0xff] %vm725, 0.0
        %779 = vst.msk [vmem:[#allocation2 + $0x1a0] sm:$0xff] %vm725, 0.0
        %780 = vst.msk [vmem:[#allocation2 + $0x1a8] sm:$0x3] %vm728, 0.0
        %s781 = scalar_lea.vmem [#allocation2], 24
        %782 = vst.msk [vmem:[%s781 + $0x1] sm:$0xff] %vm725, %v693
        %783 = vst.msk [vmem:[%s781 + $0x9] sm:$0xff] %vm725, %v694
        %784 = vst.msk [vmem:[%s781 + $0x19] sm:$0xff] %vm725, %v695
        %785 = vst.msk [vmem:[%s781 + $0x21] sm:$0xff] %vm725, %v696
        %786 = vst.msk [vmem:[%s781 + $0x31] sm:$0xff] %vm725, %v697
        %787 = vst.msk [vmem:[%s781 + $0x39] sm:$0xff] %vm725, %v698
        %788 = vst.msk [vmem:[%s781 + $0x49] sm:$0xff] %vm725, %v699
        %789 = vst.msk [vmem:[%s781 + $0x51] sm:$0xff] %vm725, %v700
        %790 = vst.msk [vmem:[%s781 + $0x61] sm:$0xff] %vm725, %v701
        %791 = vst.msk [vmem:[%s781 + $0x69] sm:$0xff] %vm725, %v702
        %792 = vst.msk [vmem:[%s781 + $0x79] sm:$0xff] %vm725, %v703
        %793 = vst.msk [vmem:[%s781 + $0x81] sm:$0xff] %vm725, %v704
        %794 = vst.msk [vmem:[%s781 + $0x91] sm:$0xff] %vm725, %v705
        %795 = vst.msk [vmem:[%s781 + $0x99] sm:$0xff] %vm725, %v706
        %796 = vst.msk [vmem:[%s781 + $0xa9] sm:$0xff] %vm725, %v707
        %797 = vst.msk [vmem:[%s781 + $0xb1] sm:$0xff] %vm725, %v708
        %798 = vst.msk [vmem:[%s781 + $0xc1] sm:$0xff] %vm725, %v709
        %799 = vst.msk [vmem:[%s781 + $0xc9] sm:$0xff] %vm725, %v710
        %800 = vst.msk [vmem:[%s781 + $0xd9] sm:$0xff] %vm725, %v711
        %801 = vst.msk [vmem:[%s781 + $0xe1] sm:$0xff] %vm725, %v712
        %802 = vst.msk [vmem:[%s781 + $0xf1] sm:$0xff] %vm725, %v713
        %803 = vst.msk [vmem:[%s781 + $0xf9] sm:$0xff] %vm725, %v714
        %804 = vst.msk [vmem:[%s781 + $0x109] sm:$0xff] %vm725, %v715
        %805 = vst.msk [vmem:[%s781 + $0x111] sm:$0xff] %vm725, %v716
        %806 = vst.msk [vmem:[%s781 + $0x121] sm:$0xff] %vm725, %v717
        %807 = vst.msk [vmem:[%s781 + $0x129] sm:$0xff] %vm725, %v718
        %808 = vst.msk [vmem:[%s781 + $0x139] sm:$0xff] %vm725, %v719
        %809 = vst.msk [vmem:[%s781 + $0x141] sm:$0xff] %vm725, %v720
        %810 = vst.msk [vmem:[%s781 + $0x151] sm:$0xff] %vm725, %v721
        %811 = vst.msk [vmem:[%s781 + $0x159] sm:$0xff] %vm725, %v722
        %812 = vst.msk [vmem:[%s781 + $0x169] sm:$0xff] %vm725, %v723
        %813 = vst.msk [vmem:[%s781 + $0x171] sm:$0xff] %vm725, %v724
        %v814 = vld [vmem:[#allocation2] sm:$0xff]
        %v815 = vld [vmem:[#allocation2 + $0x8] sm:$0xff]
        %v816 = vld [vmem:[#allocation2 + $0x18] sm:$0xff]
        %v817 = vld [vmem:[#allocation2 + $0x20] sm:$0xff]
        %v818 = vld [vmem:[#allocation2 + $0x30] sm:$0xff]
        %v819 = vld [vmem:[#allocation2 + $0x38] sm:$0xff]
        %v820 = vld [vmem:[#allocation2 + $0x48] sm:$0xff]
        %v821 = vld [vmem:[#allocation2 + $0x50] sm:$0xff]
        %v822 = vld [vmem:[#allocation2 + $0x60] sm:$0xff]
        %v823 = vld [vmem:[#allocation2 + $0x68] sm:$0xff]
        %v824 = vld [vmem:[#allocation2 + $0x78] sm:$0xff]
        %v825 = vld [vmem:[#allocation2 + $0x80] sm:$0xff]
        %v826 = vld [vmem:[#allocation2 + $0x90] sm:$0xff]
        %v827 = vld [vmem:[#allocation2 + $0x98] sm:$0xff]
        %v828 = vld [vmem:[#allocation2 + $0xa8] sm:$0xff]
        %v829 = vld [vmem:[#allocation2 + $0xb0] sm:$0xff]
        %v830 = vld [vmem:[#allocation2 + $0xc0] sm:$0xff]
        %v831 = vld [vmem:[#allocation2 + $0xc8] sm:$0xff]
        %v832 = vld [vmem:[#allocation2 + $0xd8] sm:$0xff]
        %v833 = vld [vmem:[#allocation2 + $0xe0] sm:$0xff]
        %v834 = vld [vmem:[#allocation2 + $0xf0] sm:$0xff]
        %v835 = vld [vmem:[#allocation2 + $0xf8] sm:$0xff]
        %v836 = vld [vmem:[#allocation2 + $0x108] sm:$0xff]
        %v837 = vld [vmem:[#allocation2 + $0x110] sm:$0xff]
        %v838 = vld [vmem:[#allocation2 + $0x120] sm:$0xff]
        %v839 = vld [vmem:[#allocation2 + $0x128] sm:$0xff]
        %v840 = vld [vmem:[#allocation2 + $0x138] sm:$0xff]
        %v841 = vld [vmem:[#allocation2 + $0x140] sm:$0xff]
        %v842 = vld [vmem:[#allocation2 + $0x150] sm:$0xff]
        %v843 = vld [vmem:[#allocation2 + $0x158] sm:$0xff]
        %v844 = vld [vmem:[#allocation2 + $0x168] sm:$0xff]
        %v845 = vld [vmem:[#allocation2 + $0x170] sm:$0xff]
        %v846 = vpack.c.bf16 %v815, %v814
        %v847 = vpack.c.bf16 %v817, %v816
        %v848 = vpack.c.bf16 %v819, %v818
        %v849 = vpack.c.bf16 %v821, %v820
        %v850 = vpack.c.bf16 %v823, %v822
        %v851 = vpack.c.bf16 %v825, %v824
        %v852 = vpack.c.bf16 %v827, %v826
        %v853 = vpack.c.bf16 %v829, %v828
        %v854 = vpack.c.bf16 %v831, %v830
        %v855 = vpack.c.bf16 %v833, %v832
        %v856 = vpack.c.bf16 %v835, %v834
        %v857 = vpack.c.bf16 %v837, %v836
        %v858 = vpack.c.bf16 %v839, %v838
        %v859 = vpack.c.bf16 %v841, %v840
        %v860 = vpack.c.bf16 %v843, %v842
        %v861 = vpack.c.bf16 %v845, %v844
        %v862 = vld [vmem:[%s3] sm:$0xf]
        %v863 = vld [vmem:[%s3 + $0x4] sm:$0xf]
        %v864 = vld [vmem:[%s3 + $0x8] sm:$0xf]
        %v865 = vld [vmem:[%s3 + $0xc] sm:$0xf]
        %v866 = vld [vmem:[#allocation2 + $0x1] sm:$0xff]
        %v867 = vld [vmem:[#allocation2 + $0x9] sm:$0xff]
        %v868 = vld [vmem:[#allocation2 + $0x19] sm:$0xff]
        %v869 = vld [vmem:[#allocation2 + $0x21] sm:$0xff]
        %v870 = vld [vmem:[#allocation2 + $0x31] sm:$0xff]
        %v871 = vld [vmem:[#allocation2 + $0x39] sm:$0xff]
        %v872 = vld [vmem:[#allocation2 + $0x49] sm:$0xff]
        %v873 = vld [vmem:[#allocation2 + $0x51] sm:$0xff]
        %v874 = vld [vmem:[#allocation2 + $0x61] sm:$0xff]
        %v875 = vld [vmem:[#allocation2 + $0x69] sm:$0xff]
        %v876 = vld [vmem:[#allocation2 + $0x79] sm:$0xff]
        %v877 = vld [vmem:[#allocation2 + $0x81] sm:$0xff]
        %v878 = vld [vmem:[#allocation2 + $0x91] sm:$0xff]
        %v879 = vld [vmem:[#allocation2 + $0x99] sm:$0xff]
        %v880 = vld [vmem:[#allocation2 + $0xa9] sm:$0xff]
        %v881 = vld [vmem:[#allocation2 + $0xb1] sm:$0xff]
        %v882 = vld [vmem:[#allocation2 + $0xc1] sm:$0xff]
        %v883 = vld [vmem:[#allocation2 + $0xc9] sm:$0xff]
        %v884 = vld [vmem:[#allocation2 + $0xd9] sm:$0xff]
        %v885 = vld [vmem:[#allocation2 + $0xe1] sm:$0xff]
        %v886 = vld [vmem:[#allocation2 + $0xf1] sm:$0xff]
        %v887 = vld [vmem:[#allocation2 + $0xf9] sm:$0xff]
        %v888 = vld [vmem:[#allocation2 + $0x109] sm:$0xff]
        %v889 = vld [vmem:[#allocation2 + $0x111] sm:$0xff]
        %v890 = vld [vmem:[#allocation2 + $0x121] sm:$0xff]
        %v891 = vld [vmem:[#allocation2 + $0x129] sm:$0xff]
        %v892 = vld [vmem:[#allocation2 + $0x139] sm:$0xff]
        %v893 = vld [vmem:[#allocation2 + $0x141] sm:$0xff]
        %v894 = vld [vmem:[#allocation2 + $0x151] sm:$0xff]
        %v895 = vld [vmem:[#allocation2 + $0x159] sm:$0xff]
        %v896 = vld [vmem:[#allocation2 + $0x169] sm:$0xff]
        %v897 = vld [vmem:[#allocation2 + $0x171] sm:$0xff]
        %v898 = vpack.c.bf16 %v867, %v866
        %v899 = vpack.c.bf16 %v869, %v868
        %v900 = vpack.c.bf16 %v871, %v870
        %v901 = vpack.c.bf16 %v873, %v872
        %v902 = vpack.c.bf16 %v875, %v874
        %v903 = vpack.c.bf16 %v877, %v876
        %v904 = vpack.c.bf16 %v879, %v878
        %v905 = vpack.c.bf16 %v881, %v880
        %v906 = vpack.c.bf16 %v883, %v882
        %v907 = vpack.c.bf16 %v885, %v884
        %v908 = vpack.c.bf16 %v887, %v886
        %v909 = vpack.c.bf16 %v889, %v888
        %v910 = vpack.c.bf16 %v891, %v890
        %v911 = vpack.c.bf16 %v893, %v892
        %v912 = vpack.c.bf16 %v895, %v894
        %v913 = vpack.c.bf16 %v897, %v896
        %s914 = scalar_lea.vmem %s3, 16
        %v915 = vld [vmem:[%s914] sm:$0xf]
        %v916 = vld [vmem:[%s914 + $0x4] sm:$0xf]
        %v917 = vld [vmem:[%s914 + $0x8] sm:$0xf]
        %v918 = vld [vmem:[%s914 + $0xc] sm:$0xf]
        %v923 = vunpack.c.l.b16 %v915
        %v924 = vunpack.c.l.b16 %v916
        %v925 = vunpack.c.l.b16 %v917
        %v926 = vunpack.c.l.b16 %v918
        %v927 = vpack.c.b16 %v924, %v923
        %v928 = vpack.c.b16 %v926, %v925
        %v932 = vsel %vm725, %v898, 0
        %v935 = vsel %vm725, %v899, 0
        %v938 = vsel %vm725, %v900, 0
        %v941 = vsel %vm725, %v901, 0
        %v944 = vsel %vm725, %v902, 0
        %v947 = vsel %vm725, %v903, 0
        %v950 = vsel %vm725, %v904, 0
        %v953 = vsel %vm725, %v905, 0
        %v956 = vsel %vm725, %v906, 0
        %v959 = vsel %vm725, %v907, 0
        %v962 = vsel %vm725, %v908, 0
        %v965 = vsel %vm725, %v909, 0
        %v968 = vsel %vm725, %v910, 0
        %v971 = vsel %vm725, %v911, 0
        %v974 = vsel %vm725, %v912, 0
        %v977 = vsel %vm725, %v913, 0
        %979 = vmatprep.subr.bf16.mxu0 0
        %980 = vmatpush1.bf16.msra.mxu0 %v927
        %981 = vmatprep.subr.bf16.mxu0 0
        %982 = vmatpush1.bf16.msra.mxu0 %v928
        %983 = vmatprep.subr.bf16.mxu0 0
        %984 = vmatpush1.bf16.msra.mxu0 0
        %985 = vmatprep.subr.bf16.mxu0 0
        %986 = vmatpush1.bf16.msra.mxu0 0
        %987 = vmatprep.subr.bf16.mxu0 0
        %988 = vmatpush1.bf16.msra.mxu0 0
        %989 = vmatprep.subr.bf16.mxu0 0
        %990 = vmatpush1.bf16.msra.mxu0 0
        %991 = vmatprep.subr.bf16.mxu0 0
        %992 = vmatpush1.bf16.msra.mxu0 0
        %993 = vmatprep.subr.bf16.mxu0 0
        %994 = vmatpush1.bf16.msra.mxu0 0
        %995 = vmatprep.subr.bf16.mxu0 0
        %996 = vmatpush1.bf16.msra.mxu0 0
        %997 = vmatprep.subr.bf16.mxu0 0
        %998 = vmatpush1.bf16.msra.mxu0 0
        %999 = vmatprep.subr.bf16.mxu0 0
        %1000 = vmatpush1.bf16.msra.mxu0 0
        %1001 = vmatprep.subr.bf16.mxu0 0
        %1002 = vmatpush1.bf16.msra.mxu0 0
        %1003 = vmatprep.subr.bf16.mxu0 0
        %1004 = vmatpush1.bf16.msra.mxu0 0
        %1005 = vmatprep.subr.bf16.mxu0 0
        %1006 = vmatpush1.bf16.msra.mxu0 0
        %1007 = vmatprep.subr.bf16.mxu0 0
        %1008 = vmatpush1.bf16.msra.mxu0 0
        %1009 = vmatprep.subr.bf16.mxu0 0
        %1010 = vmatpush1.bf16.msra.mxu0 0
        %1011 = vmatprep.mubr.bf16.mxu0 0
        %1012 = vmatmul.mubr.bf16.gmra.mrb[0].mxu0 %v932
        %v1013 = vpop.f32.mrb[0].mxu0
        %v1014 = vadd.f32 0.0, %v1013
        %v1015 = vpop.f32.mrb[0].mxu0
        %v1016 = vpop.f32.mrb[0].mxu0
        %v1017 = vadd.f32 0.0, %v1016
        %v1018 = vpop.f32.mrb[0].mxu0
        %1019 = vmatprep.mubr.bf16.mxu0 0
        %1020 = vmatmul.mubr.bf16.gmra.mrb[0].mxu0 %v935
        %v1021 = vpop.f32.mrb[0].mxu0
        %v1022 = vpop.f32.mrb[0].mxu0
        %v1023 = vpop.f32.mrb[0].mxu0
        %v1024 = vpop.f32.mrb[0].mxu0
        %1025 = vmatprep.mubr.bf16.mxu0 0
        %1026 = vmatmul.mubr.bf16.gmra.mrb[0].mxu0 %v938
        %v1027 = vpop.f32.mrb[0].mxu0
        %v1028 = vadd.f32 0.0, %v1027
        %v1029 = vpop.f32.mrb[0].mxu0
        %v1030 = vpop.f32.mrb[0].mxu0
        %v1031 = vadd.f32 0.0, %v1030
        %v1032 = vpop.f32.mrb[0].mxu0
        %1033 = vmatprep.mubr.bf16.mxu0 0
        %1034 = vmatmul.mubr.bf16.gmra.mrb[0].mxu0 %v941
        %v1035 = vpop.f32.mrb[0].mxu0
        %v1036 = vpop.f32.mrb[0].mxu0
        %v1037 = vpop.f32.mrb[0].mxu0
        %v1038 = vpop.f32.mrb[0].mxu0
        %1039 = vmatprep.mubr.bf16.mxu0 0
        %1040 = vmatmul.mubr.bf16.gmra.mrb[0].mxu0 %v944
        %v1041 = vpop.f32.mrb[0].mxu0
        %v1042 = vadd.f32 0.0, %v1041
        %v1043 = vpop.f32.mrb[0].mxu0
        %v1044 = vpop.f32.mrb[0].mxu0
        %v1045 = vadd.f32 0.0, %v1044
        %v1046 = vpop.f32.mrb[0].mxu0
        %1047 = vmatprep.mubr.bf16.mxu0 0
        %1048 = vmatmul.mubr.bf16.gmra.mrb[0].mxu0 %v947
        %v1049 = vpop.f32.mrb[0].mxu0
        %v1050 = vpop.f32.mrb[0].mxu0
        %v1051 = vpop.f32.mrb[0].mxu0
        %v1052 = vpop.f32.mrb[0].mxu0
        %1053 = vmatprep.mubr.bf16.mxu0 0
        %1054 = vmatmul.mubr.bf16.gmra.mrb[0].mxu0 %v950
        %v1055 = vpop.f32.mrb[0].mxu0
        %v1056 = vadd.f32 0.0, %v1055
        %v1057 = vpop.f32.mrb[0].mxu0
        %v1058 = vpop.f32.mrb[0].mxu0
        %v1059 = vadd.f32 0.0, %v1058
        %v1060 = vpop.f32.mrb[0].mxu0
        %1061 = vmatprep.mubr.bf16.mxu0 0
        %1062 = vmatmul.mubr.bf16.gmra.mrb[0].mxu0 %v953
        %v1063 = vpop.f32.mrb[0].mxu0
        %v1064 = vpop.f32.mrb[0].mxu0
        %v1065 = vpop.f32.mrb[0].mxu0
        %v1066 = vpop.f32.mrb[0].mxu0
        %1067 = vmatprep.mubr.bf16.mxu0 0
        %1068 = vmatmul.mubr.bf16.gmra.mrb[0].mxu0 %v956
        %v1069 = vpop.f32.mrb[0].mxu0
        %v1070 = vadd.f32 0.0, %v1069
        %v1071 = vpop.f32.mrb[0].mxu0
        %v1072 = vpop.f32.mrb[0].mxu0
        %v1073 = vadd.f32 0.0, %v1072
        %v1074 = vpop.f32.mrb[0].mxu0
        %1075 = vmatprep.mubr.bf16.mxu0 0
        %1076 = vmatmul.mubr.bf16.gmra.mrb[0].mxu0 %v959
        %v1077 = vpop.f32.mrb[0].mxu0
        %v1078 = vpop.f32.mrb[0].mxu0
        %v1079 = vpop.f32.mrb[0].mxu0
        %v1080 = vpop.f32.mrb[0].mxu0
        %1081 = vmatprep.mubr.bf16.mxu0 0
        %1082 = vmatmul.mubr.bf16.gmra.mrb[0].mxu0 %v962
        %v1083 = vpop.f32.mrb[0].mxu0
        %v1084 = vadd.f32 0.0, %v1083
        %v1085 = vpop.f32.mrb[0].mxu0
        %v1086 = vpop.f32.mrb[0].mxu0
        %v1087 = vadd.f32 0.0, %v1086
        %v1088 = vpop.f32.mrb[0].mxu0
        %1089 = vmatprep.mubr.bf16.mxu0 0
        %1090 = vmatmul.mubr.bf16.gmra.mrb[0].mxu0 %v965
        %v1091 = vpop.f32.mrb[0].mxu0
        %v1092 = vpop.f32.mrb[0].mxu0
        %v1093 = vpop.f32.mrb[0].mxu0
        %v1094 = vpop.f32.mrb[0].mxu0
        %1095 = vmatprep.mubr.bf16.mxu0 0
        %1096 = vmatmul.mubr.bf16.gmra.mrb[0].mxu0 %v968
        %v1097 = vpop.f32.mrb[0].mxu0
        %v1098 = vadd.f32 0.0, %v1097
        %v1099 = vpop.f32.mrb[0].mxu0
        %v1100 = vpop.f32.mrb[0].mxu0
        %v1101 = vadd.f32 0.0, %v1100
        %v1102 = vpop.f32.mrb[0].mxu0
        %1103 = vmatprep.mubr.bf16.mxu0 0
        %1104 = vmatmul.mubr.bf16.gmra.mrb[0].mxu0 %v971
        %v1105 = vpop.f32.mrb[0].mxu0
        %v1106 = vpop.f32.mrb[0].mxu0
        %v1107 = vpop.f32.mrb[0].mxu0
        %v1108 = vpop.f32.mrb[0].mxu0
        %1109 = vmatprep.mubr.bf16.mxu0 0
        %1110 = vmatmul.mubr.bf16.gmra.mrb[0].mxu0 %v974
        %v1111 = vpop.f32.mrb[0].mxu0
        %v1112 = vadd.f32 0.0, %v1111
        %v1113 = vpop.f32.mrb[0].mxu0
        %v1114 = vpop.f32.mrb[0].mxu0
        %v1115 = vadd.f32 0.0, %v1114
        %v1116 = vpop.f32.mrb[0].mxu0
        %1117 = vmatprep.mubr.bf16.mxu0 0
        %1118 = vmatmul.mubr.bf16.gmra.mrb[0].mxu0 %v977
        %v1119 = vpop.f32.mrb[0].mxu0
        %v1120 = vpop.f32.mrb[0].mxu0
        %v1121 = vpop.f32.mrb[0].mxu0
        %v1122 = vpop.f32.mrb[0].mxu0
        %1123 = vdwg.mxu0
        %v1128 = vunpack.c.l.b16 %v862
        %v1129 = vunpack.c.l.b16 %v863
        %v1130 = vunpack.c.l.b16 %v864
        %v1131 = vunpack.c.l.b16 %v865
        %v1132 = vpack.c.b16 %v1129, %v1128
        %v1133 = vpack.c.b16 %v1131, %v1130
        %v1137 = vsel %vm725, %v846, 0
        %v1140 = vsel %vm725, %v847, 0
        %v1143 = vsel %vm725, %v848, 0
        %v1146 = vsel %vm725, %v849, 0
        %v1149 = vsel %vm725, %v850, 0
        %v1152 = vsel %vm725, %v851, 0
        %v1155 = vsel %vm725, %v852, 0
        %v1158 = vsel %vm725, %v853, 0
        %v1161 = vsel %vm725, %v854, 0
        %v1164 = vsel %vm725, %v855, 0
        %v1167 = vsel %vm725, %v856, 0
        %v1170 = vsel %vm725, %v857, 0
        %v1173 = vsel %vm725, %v858, 0
        %v1176 = vsel %vm725, %v859, 0
        %v1179 = vsel %vm725, %v860, 0
        %v1182 = vsel %vm725, %v861, 0
        %1184 = vmatprep.subr.bf16.mxu0 0
        %1185 = vmatpush1.bf16.msra.mxu0 %v1132
        %1186 = vmatprep.subr.bf16.mxu0 0
        %1187 = vmatpush1.bf16.msra.mxu0 %v1133
        %1188 = vmatprep.subr.bf16.mxu0 0
        %1189 = vmatpush1.bf16.msra.mxu0 0
        %1190 = vmatprep.subr.bf16.mxu0 0
        %1191 = vmatpush1.bf16.msra.mxu0 0
        %1192 = vmatprep.subr.bf16.mxu0 0
        %1193 = vmatpush1.bf16.msra.mxu0 0
        %1194 = vmatprep.subr.bf16.mxu0 0
        %1195 = vmatpush1.bf16.msra.mxu0 0
        %1196 = vmatprep.subr.bf16.mxu0 0
        %1197 = vmatpush1.bf16.msra.mxu0 0
        %1198 = vmatprep.subr.bf16.mxu0 0
        %1199 = vmatpush1.bf16.msra.mxu0 0
        %1200 = vmatprep.subr.bf16.mxu0 0
        %1201 = vmatpush1.bf16.msra.mxu0 0
        %1202 = vmatprep.subr.bf16.mxu0 0
        %1203 = vmatpush1.bf16.msra.mxu0 0
        %1204 = vmatprep.subr.bf16.mxu0 0
        %1205 = vmatpush1.bf16.msra.mxu0 0
        %1206 = vmatprep.subr.bf16.mxu0 0
        %1207 = vmatpush1.bf16.msra.mxu0 0
        %1208 = vmatprep.subr.bf16.mxu0 0
        %1209 = vmatpush1.bf16.msra.mxu0 0
        %1210 = vmatprep.subr.bf16.mxu0 0
        %1211 = vmatpush1.bf16.msra.mxu0 0
        %1212 = vmatprep.subr.bf16.mxu0 0
        %1213 = vmatpush1.bf16.msra.mxu0 0
        %1214 = vmatprep.subr.bf16.mxu0 0
        %1215 = vmatpush1.bf16.msra.mxu0 0
        %1216 = vmatprep.mubr.bf16.mxu0 0
        %1217 = vmatmul.mubr.bf16.gmra.mrb[0].mxu0 %v1137
        %v1218 = vpop.f32.mrb[0].mxu0
        %v1219 = vadd.f32 %v1014, %v1218
        %v1220 = vpop.f32.mrb[0].mxu0
        %v1221 = vpop.f32.mrb[0].mxu0
        %v1222 = vadd.f32 %v1017, %v1221
        %v1223 = vpop.f32.mrb[0].mxu0
        %1224 = vmatprep.mubr.bf16.mxu0 0
        %1225 = vmatmul.mubr.bf16.gmra.mrb[0].mxu0 %v1140
        %v1226 = vpop.f32.mrb[0].mxu0
        %v1227 = vpop.f32.mrb[0].mxu0
        %v1228 = vpop.f32.mrb[0].mxu0
        %v1229 = vpop.f32.mrb[0].mxu0
        %1230 = vmatprep.mubr.bf16.mxu0 0
        %1231 = vmatmul.mubr.bf16.gmra.mrb[0].mxu0 %v1143
        %v1232 = vpop.f32.mrb[0].mxu0
        %v1233 = vadd.f32 %v1028, %v1232
        %v1234 = vpop.f32.mrb[0].mxu0
        %v1235 = vpop.f32.mrb[0].mxu0
        %v1236 = vadd.f32 %v1031, %v1235
        %v1237 = vpop.f32.mrb[0].mxu0
        %1238 = vmatprep.mubr.bf16.mxu0 0
        %1239 = vmatmul.mubr.bf16.gmra.mrb[0].mxu0 %v1146
        %v1240 = vpop.f32.mrb[0].mxu0
        %v1241 = vpop.f32.mrb[0].mxu0
        %v1242 = vpop.f32.mrb[0].mxu0
        %v1243 = vpop.f32.mrb[0].mxu0
        %1244 = vmatprep.mubr.bf16.mxu0 0
        %1245 = vmatmul.mubr.bf16.gmra.mrb[0].mxu0 %v1149
        %v1246 = vpop.f32.mrb[0].mxu0
        %v1247 = vadd.f32 %v1042, %v1246
        %v1248 = vpop.f32.mrb[0].mxu0
        %v1249 = vpop.f32.mrb[0].mxu0
        %v1250 = vadd.f32 %v1045, %v1249
        %v1251 = vpop.f32.mrb[0].mxu0
        %1252 = vmatprep.mubr.bf16.mxu0 0
        %1253 = vmatmul.mubr.bf16.gmra.mrb[0].mxu0 %v1152
        %v1254 = vpop.f32.mrb[0].mxu0
        %v1255 = vpop.f32.mrb[0].mxu0
        %v1256 = vpop.f32.mrb[0].mxu0
        %v1257 = vpop.f32.mrb[0].mxu0
        %1258 = vmatprep.mubr.bf16.mxu0 0
        %1259 = vmatmul.mubr.bf16.gmra.mrb[0].mxu0 %v1155
        %v1260 = vpop.f32.mrb[0].mxu0
        %v1261 = vadd.f32 %v1056, %v1260
        %v1262 = vpop.f32.mrb[0].mxu0
        %v1263 = vpop.f32.mrb[0].mxu0
        %v1264 = vadd.f32 %v1059, %v1263
        %v1265 = vpop.f32.mrb[0].mxu0
        %1266 = vmatprep.mubr.bf16.mxu0 0
        %1267 = vmatmul.mubr.bf16.gmra.mrb[0].mxu0 %v1158
        %v1268 = vpop.f32.mrb[0].mxu0
        %v1269 = vpop.f32.mrb[0].mxu0
        %v1270 = vpop.f32.mrb[0].mxu0
        %v1271 = vpop.f32.mrb[0].mxu0
        %1272 = vmatprep.mubr.bf16.mxu0 0
        %1273 = vmatmul.mubr.bf16.gmra.mrb[0].mxu0 %v1161
        %v1274 = vpop.f32.mrb[0].mxu0
        %v1275 = vadd.f32 %v1070, %v1274
        %v1276 = vpop.f32.mrb[0].mxu0
        %v1277 = vpop.f32.mrb[0].mxu0
        %v1278 = vadd.f32 %v1073, %v1277
        %v1279 = vpop.f32.mrb[0].mxu0
        %1280 = vmatprep.mubr.bf16.mxu0 0
        %1281 = vmatmul.mubr.bf16.gmra.mrb[0].mxu0 %v1164
        %v1282 = vpop.f32.mrb[0].mxu0
        %v1283 = vpop.f32.mrb[0].mxu0
        %v1284 = vpop.f32.mrb[0].mxu0
        %v1285 = vpop.f32.mrb[0].mxu0
        %1286 = vmatprep.mubr.bf16.mxu0 0
        %1287 = vmatmul.mubr.bf16.gmra.mrb[0].mxu0 %v1167
        %v1288 = vpop.f32.mrb[0].mxu0
        %v1289 = vadd.f32 %v1084, %v1288
        %v1290 = vpop.f32.mrb[0].mxu0
        %v1291 = vpop.f32.mrb[0].mxu0
        %v1292 = vadd.f32 %v1087, %v1291
        %v1293 = vpop.f32.mrb[0].mxu0
        %1294 = vmatprep.mubr.bf16.mxu0 0
        %1295 = vmatmul.mubr.bf16.gmra.mrb[0].mxu0 %v1170
        %v1296 = vpop.f32.mrb[0].mxu0
        %v1297 = vpop.f32.mrb[0].mxu0
        %v1298 = vpop.f32.mrb[0].mxu0
        %v1299 = vpop.f32.mrb[0].mxu0
        %1300 = vmatprep.mubr.bf16.mxu0 0
        %1301 = vmatmul.mubr.bf16.gmra.mrb[0].mxu0 %v1173
        %v1302 = vpop.f32.mrb[0].mxu0
        %v1303 = vadd.f32 %v1098, %v1302
        %v1304 = vpop.f32.mrb[0].mxu0
        %v1305 = vpop.f32.mrb[0].mxu0
        %v1306 = vadd.f32 %v1101, %v1305
        %v1307 = vpop.f32.mrb[0].mxu0
        %1308 = vmatprep.mubr.bf16.mxu0 0
        %1309 = vmatmul.mubr.bf16.gmra.mrb[0].mxu0 %v1176
        %v1310 = vpop.f32.mrb[0].mxu0
        %v1311 = vpop.f32.mrb[0].mxu0
        %v1312 = vpop.f32.mrb[0].mxu0
        %v1313 = vpop.f32.mrb[0].mxu0
        %1314 = vmatprep.mubr.bf16.mxu0 0
        %1315 = vmatmul.mubr.bf16.gmra.mrb[0].mxu0 %v1179
        %v1316 = vpop.f32.mrb[0].mxu0
        %v1317 = vadd.f32 %v1112, %v1316
        %v1318 = vpop.f32.mrb[0].mxu0
        %v1319 = vpop.f32.mrb[0].mxu0
        %v1320 = vadd.f32 %v1115, %v1319
        %v1321 = vpop.f32.mrb[0].mxu0
        %1322 = vmatprep.mubr.bf16.mxu0 0
        %1323 = vmatmul.mubr.bf16.gmra.mrb[0].mxu0 %v1182
        %v1324 = vpop.f32.mrb[0].mxu0
        %v1325 = vpop.f32.mrb[0].mxu0
        %v1326 = vpop.f32.mrb[0].mxu0
        %v1327 = vpop.f32.mrb[0].mxu0
        %1328 = vdwg.mxu0
        %v1329 = vld [vmem:[#allocation2 + $0x2] sm:$0xff]
        %v1330 = vld [vmem:[#allocation2 + $0xa] sm:$0xff]
        %v1331 = vld [vmem:[#allocation2 + $0x1a] sm:$0xff]
        %v1332 = vld [vmem:[#allocation2 + $0x22] sm:$0xff]
        %v1333 = vld [vmem:[#allocation2 + $0x32] sm:$0xff]
        %v1334 = vld [vmem:[#allocation2 + $0x3a] sm:$0xff]
        %v1335 = vld [vmem:[#allocation2 + $0x4a] sm:$0xff]
        %v1336 = vld [vmem:[#allocation2 + $0x52] sm:$0xff]
        %v1337 = vld [vmem:[#allocation2 + $0x62] sm:$0xff]
        %v1338 = vld [vmem:[#allocation2 + $0x6a] sm:$0xff]
        %v1339 = vld [vmem:[#allocation2 + $0x7a] sm:$0xff]
        %v1340 = vld [vmem:[#allocation2 + $0x82] sm:$0xff]
        %v1341 = vld [vmem:[#allocation2 + $0x92] sm:$0xff]
        %v1342 = vld [vmem:[#allocation2 + $0x9a] sm:$0xff]
        %v1343 = vld [vmem:[#allocation2 + $0xaa] sm:$0xff]
        %v1344 = vld [vmem:[#allocation2 + $0xb2] sm:$0xff]
        %v1345 = vld [vmem:[#allocation2 + $0xc2] sm:$0xff]
        %v1346 = vld [vmem:[#allocation2 + $0xca] sm:$0xff]
        %v1347 = vld [vmem:[#allocation2 + $0xda] sm:$0xff]
        %v1348 = vld [vmem:[#allocation2 + $0xe2] sm:$0xff]
        %v1349 = vld [vmem:[#allocation2 + $0xf2] sm:$0xff]
        %v1350 = vld [vmem:[#allocation2 + $0xfa] sm:$0xff]
        %v1351 = vld [vmem:[#allocation2 + $0x10a] sm:$0xff]
        %v1352 = vld [vmem:[#allocation2 + $0x112] sm:$0xff]
        %v1353 = vld [vmem:[#allocation2 + $0x122] sm:$0xff]
        %v1354 = vld [vmem:[#allocation2 + $0x12a] sm:$0xff]
        %v1355 = vld [vmem:[#allocation2 + $0x13a] sm:$0xff]
        %v1356 = vld [vmem:[#allocation2 + $0x142] sm:$0xff]
        %v1357 = vld [vmem:[#allocation2 + $0x152] sm:$0xff]
        %v1358 = vld [vmem:[#allocation2 + $0x15a] sm:$0xff]
        %v1359 = vld [vmem:[#allocation2 + $0x16a] sm:$0xff]
        %v1360 = vld [vmem:[#allocation2 + $0x172] sm:$0xff]
        %v1361 = vpack.c.bf16 %v1330, %v1329
        %v1362 = vpack.c.bf16 %v1332, %v1331
        %v1363 = vpack.c.bf16 %v1334, %v1333
        %v1364 = vpack.c.bf16 %v1336, %v1335
        %v1365 = vpack.c.bf16 %v1338, %v1337
        %v1366 = vpack.c.bf16 %v1340, %v1339
        %v1367 = vpack.c.bf16 %v1342, %v1341
        %v1368 = vpack.c.bf16 %v1344, %v1343
        %v1369 = vpack.c.bf16 %v1346, %v1345
        %v1370 = vpack.c.bf16 %v1348, %v1347
        %v1371 = vpack.c.bf16 %v1350, %v1349
        %v1372 = vpack.c.bf16 %v1352, %v1351
        %v1373 = vpack.c.bf16 %v1354, %v1353
        %v1374 = vpack.c.bf16 %v1356, %v1355
        %v1375 = vpack.c.bf16 %v1358, %v1357
        %v1376 = vpack.c.bf16 %v1360, %v1359
        %s1377 = scalar_lea.vmem %s3, 32
        %v1378 = vld [vmem:[%s1377] sm:$0xf]
        %v1379 = vld [vmem:[%s1377 + $0x4] sm:$0xf]
        %v1380 = vld [vmem:[%s1377 + $0x8] sm:$0xf]
        %v1381 = vld [vmem:[%s1377 + $0xc] sm:$0xf]
        %v1386 = vunpack.c.l.b16 %v1378
        %v1387 = vunpack.c.l.b16 %v1379
        %v1388 = vunpack.c.l.b16 %v1380
        %v1389 = vunpack.c.l.b16 %v1381
        %v1390 = vpack.c.b16 %v1387, %v1386
        %v1391 = vpack.c.b16 %v1389, %v1388
        %v1395 = vsel %vm725, %v1361, 0
        %v1398 = vsel %vm725, %v1362, 0
        %v1401 = vsel %vm725, %v1363, 0
        %v1404 = vsel %vm725, %v1364, 0
        %v1407 = vsel %vm725, %v1365, 0
        %v1410 = vsel %vm725, %v1366, 0
        %v1413 = vsel %vm725, %v1367, 0
        %v1416 = vsel %vm725, %v1368, 0
        %v1419 = vsel %vm725, %v1369, 0
        %v1422 = vsel %vm725, %v1370, 0
        %v1425 = vsel %vm725, %v1371, 0
        %v1428 = vsel %vm725, %v1372, 0
        %v1431 = vsel %vm725, %v1373, 0
        %v1434 = vsel %vm725, %v1374, 0
        %v1437 = vsel %vm725, %v1375, 0
        %v1440 = vsel %vm725, %v1376, 0
        %1442 = vmatprep.subr.bf16.mxu0 0
        %1443 = vmatpush1.bf16.msra.mxu0 %v1390
        %1444 = vmatprep.subr.bf16.mxu0 0
        %1445 = vmatpush1.bf16.msra.mxu0 %v1391
        %1446 = vmatprep.subr.bf16.mxu0 0
        %1447 = vmatpush1.bf16.msra.mxu0 0
        %1448 = vmatprep.subr.bf16.mxu0 0
        %1449 = vmatpush1.bf16.msra.mxu0 0
        %1450 = vmatprep.subr.bf16.mxu0 0
        %1451 = vmatpush1.bf16.msra.mxu0 0
        %1452 = vmatprep.subr.bf16.mxu0 0
        %1453 = vmatpush1.bf16.msra.mxu0 0
        %1454 = vmatprep.subr.bf16.mxu0 0
        %1455 = vmatpush1.bf16.msra.mxu0 0
        %1456 = vmatprep.subr.bf16.mxu0 0
        %1457 = vmatpush1.bf16.msra.mxu0 0
        %1458 = vmatprep.subr.bf16.mxu0 0
        %1459 = vmatpush1.bf16.msra.mxu0 0
        %1460 = vmatprep.subr.bf16.mxu0 0
        %1461 = vmatpush1.bf16.msra.mxu0 0
        %1462 = vmatprep.subr.bf16.mxu0 0
        %1463 = vmatpush1.bf16.msra.mxu0 0
        %1464 = vmatprep.subr.bf16.mxu0 0
        %1465 = vmatpush1.bf16.msra.mxu0 0
        %1466 = vmatprep.subr.bf16.mxu0 0
        %1467 = vmatpush1.bf16.msra.mxu0 0
        %1468 = vmatprep.subr.bf16.mxu0 0
        %1469 = vmatpush1.bf16.msra.mxu0 0
        %1470 = vmatprep.subr.bf16.mxu0 0
        %1471 = vmatpush1.bf16.msra.mxu0 0
        %1472 = vmatprep.subr.bf16.mxu0 0
        %1473 = vmatpush1.bf16.msra.mxu0 0
        %1474 = vmatprep.mubr.bf16.mxu0 0
        %1475 = vmatmul.mubr.bf16.gmra.mrb[0].mxu0 %v1395
        %v1476 = vpop.f32.mrb[0].mxu0
        %v1477 = vadd.f32 0.0, %v1476
        %v1478 = vpop.f32.mrb[0].mxu0
        %v1479 = vpop.f32.mrb[0].mxu0
        %v1480 = vadd.f32 0.0, %v1479
        %v1481 = vpop.f32.mrb[0].mxu0
        %1482 = vmatprep.mubr.bf16.mxu0 0
        %1483 = vmatmul.mubr.bf16.gmra.mrb[0].mxu0 %v1398
        %v1484 = vpop.f32.mrb[0].mxu0
        %v1485 = vpop.f32.mrb[0].mxu0
        %v1486 = vpop.f32.mrb[0].mxu0
        %v1487 = vpop.f32.mrb[0].mxu0
        %1488 = vmatprep.mubr.bf16.mxu0 0
        %1489 = vmatmul.mubr.bf16.gmra.mrb[0].mxu0 %v1401
        %v1490 = vpop.f32.mrb[0].mxu0
        %v1491 = vadd.f32 0.0, %v1490
        %v1492 = vpop.f32.mrb[0].mxu0
        %v1493 = vpop.f32.mrb[0].mxu0
        %v1494 = vadd.f32 0.0, %v1493
        %v1495 = vpop.f32.mrb[0].mxu0
        %1496 = vmatprep.mubr.bf16.mxu0 0
        %1497 = vmatmul.mubr.bf16.gmra.mrb[0].mxu0 %v1404
        %v1498 = vpop.f32.mrb[0].mxu0
        %v1499 = vpop.f32.mrb[0].mxu0
        %v1500 = vpop.f32.mrb[0].mxu0
        %v1501 = vpop.f32.mrb[0].mxu0
        %1502 = vmatprep.mubr.bf16.mxu0 0
        %1503 = vmatmul.mubr.bf16.gmra.mrb[0].mxu0 %v1407
        %v1504 = vpop.f32.mrb[0].mxu0
        %v1505 = vadd.f32 0.0, %v1504
        %v1506 = vpop.f32.mrb[0].mxu0
        %v1507 = vpop.f32.mrb[0].mxu0
        %v1508 = vadd.f32 0.0, %v1507
        %v1509 = vpop.f32.mrb[0].mxu0
        %1510 = vmatprep.mubr.bf16.mxu0 0
        %1511 = vmatmul.mubr.bf16.gmra.mrb[0].mxu0 %v1410
        %v1512 = vpop.f32.mrb[0].mxu0
        %v1513 = vpop.f32.mrb[0].mxu0
        %v1514 = vpop.f32.mrb[0].mxu0
        %v1515 = vpop.f32.mrb[0].mxu0
        %1516 = vmatprep.mubr.bf16.mxu0 0
        %1517 = vmatmul.mubr.bf16.gmra.mrb[0].mxu0 %v1413
        %v1518 = vpop.f32.mrb[0].mxu0
        %v1519 = vadd.f32 0.0, %v1518
        %v1520 = vpop.f32.mrb[0].mxu0
        %v1521 = vpop.f32.mrb[0].mxu0
        %v1522 = vadd.f32 0.0, %v1521
        %v1523 = vpop.f32.mrb[0].mxu0
        %1524 = vmatprep.mubr.bf16.mxu0 0
        %1525 = vmatmul.mubr.bf16.gmra.mrb[0].mxu0 %v1416
        %v1526 = vpop.f32.mrb[0].mxu0
        %v1527 = vpop.f32.mrb[0].mxu0
        %v1528 = vpop.f32.mrb[0].mxu0
        %v1529 = vpop.f32.mrb[0].mxu0
        %1530 = vmatprep.mubr.bf16.mxu0 0
        %1531 = vmatmul.mubr.bf16.gmra.mrb[0].mxu0 %v1419
        %v1532 = vpop.f32.mrb[0].mxu0
        %v1533 = vadd.f32 0.0, %v1532
        %v1534 = vpop.f32.mrb[0].mxu0
        %v1535 = vpop.f32.mrb[0].mxu0
        %v1536 = vadd.f32 0.0, %v1535
        %v1537 = vpop.f32.mrb[0].mxu0
        %1538 = vmatprep.mubr.bf16.mxu0 0
        %1539 = vmatmul.mubr.bf16.gmra.mrb[0].mxu0 %v1422
        %v1540 = vpop.f32.mrb[0].mxu0
        %v1541 = vpop.f32.mrb[0].mxu0
        %v1542 = vpop.f32.mrb[0].mxu0
        %v1543 = vpop.f32.mrb[0].mxu0
        %1544 = vmatprep.mubr.bf16.mxu0 0
        %1545 = vmatmul.mubr.bf16.gmra.mrb[0].mxu0 %v1425
        %v1546 = vpop.f32.mrb[0].mxu0
        %v1547 = vadd.f32 0.0, %v1546
        %v1548 = vpop.f32.mrb[0].mxu0
        %v1549 = vpop.f32.mrb[0].mxu0
        %v1550 = vadd.f32 0.0, %v1549
        %v1551 = vpop.f32.mrb[0].mxu0
        %1552 = vmatprep.mubr.bf16.mxu0 0
        %1553 = vmatmul.mubr.bf16.gmra.mrb[0].mxu0 %v1428
        %v1554 = vpop.f32.mrb[0].mxu0
        %v1555 = vpop.f32.mrb[0].mxu0
        %v1556 = vpop.f32.mrb[0].mxu0
        %v1557 = vpop.f32.mrb[0].mxu0
        %1558 = vmatprep.mubr.bf16.mxu0 0
        %1559 = vmatmul.mubr.bf16.gmra.mrb[0].mxu0 %v1431
        %v1560 = vpop.f32.mrb[0].mxu0
        %v1561 = vadd.f32 0.0, %v1560
        %v1562 = vpop.f32.mrb[0].mxu0
        %v1563 = vpop.f32.mrb[0].mxu0
        %v1564 = vadd.f32 0.0, %v1563
        %v1565 = vpop.f32.mrb[0].mxu0
        %1566 = vmatprep.mubr.bf16.mxu0 0
        %1567 = vmatmul.mubr.bf16.gmra.mrb[0].mxu0 %v1434
        %v1568 = vpop.f32.mrb[0].mxu0
        %v1569 = vpop.f32.mrb[0].mxu0
        %v1570 = vpop.f32.mrb[0].mxu0
        %v1571 = vpop.f32.mrb[0].mxu0
        %1572 = vmatprep.mubr.bf16.mxu0 0
        %1573 = vmatmul.mubr.bf16.gmra.mrb[0].mxu0 %v1437
        %v1574 = vpop.f32.mrb[0].mxu0
        %v1575 = vadd.f32 0.0, %v1574
        %v1576 = vpop.f32.mrb[0].mxu0
        %v1577 = vpop.f32.mrb[0].mxu0
        %v1578 = vadd.f32 0.0, %v1577
        %v1579 = vpop.f32.mrb[0].mxu0
        %1580 = vmatprep.mubr.bf16.mxu0 0
        %1581 = vmatmul.mubr.bf16.gmra.mrb[0].mxu0 %v1440
        %v1582 = vpop.f32.mrb[0].mxu0
        %v1583 = vpop.f32.mrb[0].mxu0
        %v1584 = vpop.f32.mrb[0].mxu0
        %v1585 = vpop.f32.mrb[0].mxu0
        %1586 = vdwg.mxu0
        %v1587 = vadd.f32 %v1219, %v1477
        %v1588 = vadd.f32 %v1222, %v1480
        %v1589 = vadd.f32 %v1233, %v1491
        %v1590 = vadd.f32 %v1236, %v1494
        %v1591 = vadd.f32 %v1247, %v1505
        %v1592 = vadd.f32 %v1250, %v1508
        %v1593 = vadd.f32 %v1261, %v1519
        %v1594 = vadd.f32 %v1264, %v1522
        %v1595 = vadd.f32 %v1275, %v1533
        %v1596 = vadd.f32 %v1278, %v1536
        %v1597 = vadd.f32 %v1289, %v1547
        %v1598 = vadd.f32 %v1292, %v1550
        %v1599 = vadd.f32 %v1303, %v1561
        %v1600 = vadd.f32 %v1306, %v1564
        %v1601 = vadd.f32 %v1317, %v1575
        %v1602 = vadd.f32 %v1320, %v1578
        %v1603 = vld [vmem:[%s781] sm:$0xff]
        %v1604 = vld [vmem:[%s781 + $0x8] sm:$0xff]
        %v1605 = vld [vmem:[%s781 + $0x18] sm:$0xff]
        %v1606 = vld [vmem:[%s781 + $0x20] sm:$0xff]
        %v1607 = vld [vmem:[%s781 + $0x30] sm:$0xff]
        %v1608 = vld [vmem:[%s781 + $0x38] sm:$0xff]
        %v1609 = vld [vmem:[%s781 + $0x48] sm:$0xff]
        %v1610 = vld [vmem:[%s781 + $0x50] sm:$0xff]
        %v1611 = vld [vmem:[%s781 + $0x60] sm:$0xff]
        %v1612 = vld [vmem:[%s781 + $0x68] sm:$0xff]
        %v1613 = vld [vmem:[%s781 + $0x78] sm:$0xff]
        %v1614 = vld [vmem:[%s781 + $0x80] sm:$0xff]
        %v1615 = vld [vmem:[%s781 + $0x90] sm:$0xff]
        %v1616 = vld [vmem:[%s781 + $0x98] sm:$0xff]
        %v1617 = vld [vmem:[%s781 + $0xa8] sm:$0xff]
        %v1618 = vld [vmem:[%s781 + $0xb0] sm:$0xff]
        %v1619 = vld [vmem:[%s781 + $0xc0] sm:$0xff]
        %v1620 = vld [vmem:[%s781 + $0xc8] sm:$0xff]
        %v1621 = vld [vmem:[%s781 + $0xd8] sm:$0xff]
        %v1622 = vld [vmem:[%s781 + $0xe0] sm:$0xff]
        %v1623 = vld [vmem:[%s781 + $0xf0] sm:$0xff]
        %v1624 = vld [vmem:[%s781 + $0xf8] sm:$0xff]
        %v1625 = vld [vmem:[%s781 + $0x108] sm:$0xff]
        %v1626 = vld [vmem:[%s781 + $0x110] sm:$0xff]
        %v1627 = vld [vmem:[%s781 + $0x120] sm:$0xff]
        %v1628 = vld [vmem:[%s781 + $0x128] sm:$0xff]
        %v1629 = vld [vmem:[%s781 + $0x138] sm:$0xff]
        %v1630 = vld [vmem:[%s781 + $0x140] sm:$0xff]
        %v1631 = vld [vmem:[%s781 + $0x150] sm:$0xff]
        %v1632 = vld [vmem:[%s781 + $0x158] sm:$0xff]
        %v1633 = vld [vmem:[%s781 + $0x168] sm:$0xff]
        %v1634 = vld [vmem:[%s781 + $0x170] sm:$0xff]
        %v1635 = vpack.c.bf16 %v1604, %v1603
        %v1636 = vpack.c.bf16 %v1606, %v1605
        %v1637 = vpack.c.bf16 %v1608, %v1607
        %v1638 = vpack.c.bf16 %v1610, %v1609
        %v1639 = vpack.c.bf16 %v1612, %v1611
        %v1640 = vpack.c.bf16 %v1614, %v1613
        %v1641 = vpack.c.bf16 %v1616, %v1615
        %v1642 = vpack.c.bf16 %v1618, %v1617
        %v1643 = vpack.c.bf16 %v1620, %v1619
        %v1644 = vpack.c.bf16 %v1622, %v1621
        %v1645 = vpack.c.bf16 %v1624, %v1623
        %v1646 = vpack.c.bf16 %v1626, %v1625
        %v1647 = vpack.c.bf16 %v1628, %v1627
        %v1648 = vpack.c.bf16 %v1630, %v1629
        %v1649 = vpack.c.bf16 %v1632, %v1631
        %v1650 = vpack.c.bf16 %v1634, %v1633
        %s1651 = scalar_lea.vmem %s3, 48
        %v1652 = vld [vmem:[%s1651] sm:$0xf]
        %v1653 = vld [vmem:[%s1651 + $0x4] sm:$0xf]
        %v1654 = vld [vmem:[%s1651 + $0x8] sm:$0xf]
        %v1655 = vld [vmem:[%s1651 + $0xc] sm:$0xf]
        %v1660 = vunpack.c.l.b16 %v1652
        %v1661 = vunpack.c.l.b16 %v1653
        %v1662 = vunpack.c.l.b16 %v1654
        %v1663 = vunpack.c.l.b16 %v1655
        %v1664 = vpack.c.b16 %v1661, %v1660
        %v1665 = vpack.c.b16 %v1663, %v1662
        %v1669 = vsel %vm725, %v1635, 0
        %v1672 = vsel %vm725, %v1636, 0
        %v1675 = vsel %vm725, %v1637, 0
        %v1678 = vsel %vm725, %v1638, 0
        %v1681 = vsel %vm725, %v1639, 0
        %v1684 = vsel %vm725, %v1640, 0
        %v1687 = vsel %vm725, %v1641, 0
        %v1690 = vsel %vm725, %v1642, 0
        %v1693 = vsel %vm725, %v1643, 0
        %v1696 = vsel %vm725, %v1644, 0
        %v1699 = vsel %vm725, %v1645, 0
        %v1702 = vsel %vm725, %v1646, 0
        %v1705 = vsel %vm725, %v1647, 0
        %v1708 = vsel %vm725, %v1648, 0
        %v1711 = vsel %vm725, %v1649, 0
        %v1714 = vsel %vm725, %v1650, 0
        %1716 = vmatprep.subr.bf16.mxu0 0
        %1717 = vmatpush1.bf16.msra.mxu0 %v1664
        %1718 = vmatprep.subr.bf16.mxu0 0
        %1719 = vmatpush1.bf16.msra.mxu0 %v1665
        %1720 = vmatprep.subr.bf16.mxu0 0
        %1721 = vmatpush1.bf16.msra.mxu0 0
        %1722 = vmatprep.subr.bf16.mxu0 0
        %1723 = vmatpush1.bf16.msra.mxu0 0
        %1724 = vmatprep.subr.bf16.mxu0 0
        %1725 = vmatpush1.bf16.msra.mxu0 0
        %1726 = vmatprep.subr.bf16.mxu0 0
        %1727 = vmatpush1.bf16.msra.mxu0 0
        %1728 = vmatprep.subr.bf16.mxu0 0
        %1729 = vmatpush1.bf16.msra.mxu0 0
        %1730 = vmatprep.subr.bf16.mxu0 0
        %1731 = vmatpush1.bf16.msra.mxu0 0
        %1732 = vmatprep.subr.bf16.mxu0 0
        %1733 = vmatpush1.bf16.msra.mxu0 0
        %1734 = vmatprep.subr.bf16.mxu0 0
        %1735 = vmatpush1.bf16.msra.mxu0 0
        %1736 = vmatprep.subr.bf16.mxu0 0
        %1737 = vmatpush1.bf16.msra.mxu0 0
        %1738 = vmatprep.subr.bf16.mxu0 0
        %1739 = vmatpush1.bf16.msra.mxu0 0
        %1740 = vmatprep.subr.bf16.mxu0 0
        %1741 = vmatpush1.bf16.msra.mxu0 0
        %1742 = vmatprep.subr.bf16.mxu0 0
        %1743 = vmatpush1.bf16.msra.mxu0 0
        %1744 = vmatprep.subr.bf16.mxu0 0
        %1745 = vmatpush1.bf16.msra.mxu0 0
        %1746 = vmatprep.subr.bf16.mxu0 0
        %1747 = vmatpush1.bf16.msra.mxu0 0
        %1748 = vmatprep.mubr.bf16.mxu0 0
        %1749 = vmatmul.mubr.bf16.gmra.mrb[0].mxu0 %v1669
        %v1750 = vpop.f32.mrb[0].mxu0
        %v1751 = vadd.f32 0.0, %v1750
        %v1752 = vpop.f32.mrb[0].mxu0
        %v1753 = vpop.f32.mrb[0].mxu0
        %v1754 = vadd.f32 0.0, %v1753
        %v1755 = vpop.f32.mrb[0].mxu0
        %1756 = vmatprep.mubr.bf16.mxu0 0
        %1757 = vmatmul.mubr.bf16.gmra.mrb[0].mxu0 %v1672
        %v1758 = vpop.f32.mrb[0].mxu0
        %v1759 = vpop.f32.mrb[0].mxu0
        %v1760 = vpop.f32.mrb[0].mxu0
        %v1761 = vpop.f32.mrb[0].mxu0
        %1762 = vmatprep.mubr.bf16.mxu0 0
        %1763 = vmatmul.mubr.bf16.gmra.mrb[0].mxu0 %v1675
        %v1764 = vpop.f32.mrb[0].mxu0
        %v1765 = vadd.f32 0.0, %v1764
        %v1766 = vpop.f32.mrb[0].mxu0
        %v1767 = vpop.f32.mrb[0].mxu0
        %v1768 = vadd.f32 0.0, %v1767
        %v1769 = vpop.f32.mrb[0].mxu0
        %1770 = vmatprep.mubr.bf16.mxu0 0
        %1771 = vmatmul.mubr.bf16.gmra.mrb[0].mxu0 %v1678
        %v1772 = vpop.f32.mrb[0].mxu0
        %v1773 = vpop.f32.mrb[0].mxu0
        %v1774 = vpop.f32.mrb[0].mxu0
        %v1775 = vpop.f32.mrb[0].mxu0
        %1776 = vmatprep.mubr.bf16.mxu0 0
        %1777 = vmatmul.mubr.bf16.gmra.mrb[0].mxu0 %v1681
        %v1778 = vpop.f32.mrb[0].mxu0
        %v1779 = vadd.f32 0.0, %v1778
        %v1780 = vpop.f32.mrb[0].mxu0
        %v1781 = vpop.f32.mrb[0].mxu0
        %v1782 = vadd.f32 0.0, %v1781
        %v1783 = vpop.f32.mrb[0].mxu0
        %1784 = vmatprep.mubr.bf16.mxu0 0
        %1785 = vmatmul.mubr.bf16.gmra.mrb[0].mxu0 %v1684
        %v1786 = vpop.f32.mrb[0].mxu0
        %v1787 = vpop.f32.mrb[0].mxu0
        %v1788 = vpop.f32.mrb[0].mxu0
        %v1789 = vpop.f32.mrb[0].mxu0
        %1790 = vmatprep.mubr.bf16.mxu0 0
        %1791 = vmatmul.mubr.bf16.gmra.mrb[0].mxu0 %v1687
        %v1792 = vpop.f32.mrb[0].mxu0
        %v1793 = vadd.f32 0.0, %v1792
        %v1794 = vpop.f32.mrb[0].mxu0
        %v1795 = vpop.f32.mrb[0].mxu0
        %v1796 = vadd.f32 0.0, %v1795
        %v1797 = vpop.f32.mrb[0].mxu0
        %1798 = vmatprep.mubr.bf16.mxu0 0
        %1799 = vmatmul.mubr.bf16.gmra.mrb[0].mxu0 %v1690
        %v1800 = vpop.f32.mrb[0].mxu0
        %v1801 = vpop.f32.mrb[0].mxu0
        %v1802 = vpop.f32.mrb[0].mxu0
        %v1803 = vpop.f32.mrb[0].mxu0
        %1804 = vmatprep.mubr.bf16.mxu0 0
        %1805 = vmatmul.mubr.bf16.gmra.mrb[0].mxu0 %v1693
        %v1806 = vpop.f32.mrb[0].mxu0
        %v1807 = vadd.f32 0.0, %v1806
        %v1808 = vpop.f32.mrb[0].mxu0
        %v1809 = vpop.f32.mrb[0].mxu0
        %v1810 = vadd.f32 0.0, %v1809
        %v1811 = vpop.f32.mrb[0].mxu0
        %1812 = vmatprep.mubr.bf16.mxu0 0
        %1813 = vmatmul.mubr.bf16.gmra.mrb[0].mxu0 %v1696
        %v1814 = vpop.f32.mrb[0].mxu0
        %v1815 = vpop.f32.mrb[0].mxu0
        %v1816 = vpop.f32.mrb[0].mxu0
        %v1817 = vpop.f32.mrb[0].mxu0
        %1818 = vmatprep.mubr.bf16.mxu0 0
        %1819 = vmatmul.mubr.bf16.gmra.mrb[0].mxu0 %v1699
        %v1820 = vpop.f32.mrb[0].mxu0
        %v1821 = vadd.f32 0.0, %v1820
        %v1822 = vpop.f32.mrb[0].mxu0
        %v1823 = vpop.f32.mrb[0].mxu0
        %v1824 = vadd.f32 0.0, %v1823
        %v1825 = vpop.f32.mrb[0].mxu0
        %1826 = vmatprep.mubr.bf16.mxu0 0
        %1827 = vmatmul.mubr.bf16.gmra.mrb[0].mxu0 %v1702
        %v1828 = vpop.f32.mrb[0].mxu0
        %v1829 = vpop.f32.mrb[0].mxu0
        %v1830 = vpop.f32.mrb[0].mxu0
        %v1831 = vpop.f32.mrb[0].mxu0
        %1832 = vmatprep.mubr.bf16.mxu0 0
        %1833 = vmatmul.mubr.bf16.gmra.mrb[0].mxu0 %v1705
        %v1834 = vpop.f32.mrb[0].mxu0
        %v1835 = vadd.f32 0.0, %v1834
        %v1836 = vpop.f32.mrb[0].mxu0
        %v1837 = vpop.f32.mrb[0].mxu0
        %v1838 = vadd.f32 0.0, %v1837
        %v1839 = vpop.f32.mrb[0].mxu0
        %1840 = vmatprep.mubr.bf16.mxu0 0
        %1841 = vmatmul.mubr.bf16.gmra.mrb[0].mxu0 %v1708
        %v1842 = vpop.f32.mrb[0].mxu0
        %v1843 = vpop.f32.mrb[0].mxu0
        %v1844 = vpop.f32.mrb[0].mxu0
        %v1845 = vpop.f32.mrb[0].mxu0
        %1846 = vmatprep.mubr.bf16.mxu0 0
        %1847 = vmatmul.mubr.bf16.gmra.mrb[0].mxu0 %v1711
        %v1848 = vpop.f32.mrb[0].mxu0
        %v1849 = vadd.f32 0.0, %v1848
        %v1850 = vpop.f32.mrb[0].mxu0
        %v1851 = vpop.f32.mrb[0].mxu0
        %v1852 = vadd.f32 0.0, %v1851
        %v1853 = vpop.f32.mrb[0].mxu0
        %1854 = vmatprep.mubr.bf16.mxu0 0
        %1855 = vmatmul.mubr.bf16.gmra.mrb[0].mxu0 %v1714
        %v1856 = vpop.f32.mrb[0].mxu0
        %v1857 = vpop.f32.mrb[0].mxu0
        %v1858 = vpop.f32.mrb[0].mxu0
        %v1859 = vpop.f32.mrb[0].mxu0
        %1860 = vdwg.mxu0
        %v1861 = vadd.f32 %v1587, %v1751
        %v1862 = vadd.f32 %v1588, %v1754
        %v1863 = vadd.f32 %v1589, %v1765
        %v1864 = vadd.f32 %v1590, %v1768
        %v1865 = vadd.f32 %v1591, %v1779
        %v1866 = vadd.f32 %v1592, %v1782
        %v1867 = vadd.f32 %v1593, %v1793
        %v1868 = vadd.f32 %v1594, %v1796
        %v1869 = vadd.f32 %v1595, %v1807
        %v1870 = vadd.f32 %v1596, %v1810
        %v1871 = vadd.f32 %v1597, %v1821
        %v1872 = vadd.f32 %v1598, %v1824
        %v1873 = vadd.f32 %v1599, %v1835
        %v1874 = vadd.f32 %v1600, %v1838
        %v1875 = vadd.f32 %v1601, %v1849
        %v1876 = vadd.f32 %v1602, %v1852
        %v1877 = vld [vmem:[%s781 + $0x1] sm:$0xff]
        %v1878 = vld [vmem:[%s781 + $0x9] sm:$0xff]
        %v1879 = vld [vmem:[%s781 + $0x19] sm:$0xff]
        %v1880 = vld [vmem:[%s781 + $0x21] sm:$0xff]
        %v1881 = vld [vmem:[%s781 + $0x31] sm:$0xff]
        %v1882 = vld [vmem:[%s781 + $0x39] sm:$0xff]
        %v1883 = vld [vmem:[%s781 + $0x49] sm:$0xff]
        %v1884 = vld [vmem:[%s781 + $0x51] sm:$0xff]
        %v1885 = vld [vmem:[%s781 + $0x61] sm:$0xff]
        %v1886 = vld [vmem:[%s781 + $0x69] sm:$0xff]
        %v1887 = vld [vmem:[%s781 + $0x79] sm:$0xff]
        %v1888 = vld [vmem:[%s781 + $0x81] sm:$0xff]
        %v1889 = vld [vmem:[%s781 + $0x91] sm:$0xff]
        %v1890 = vld [vmem:[%s781 + $0x99] sm:$0xff]
        %v1891 = vld [vmem:[%s781 + $0xa9] sm:$0xff]
        %v1892 = vld [vmem:[%s781 + $0xb1] sm:$0xff]
        %v1893 = vld [vmem:[%s781 + $0xc1] sm:$0xff]
        %v1894 = vld [vmem:[%s781 + $0xc9] sm:$0xff]
        %v1895 = vld [vmem:[%s781 + $0xd9] sm:$0xff]
        %v1896 = vld [vmem:[%s781 + $0xe1] sm:$0xff]
        %v1897 = vld [vmem:[%s781 + $0xf1] sm:$0xff]
        %v1898 = vld [vmem:[%s781 + $0xf9] sm:$0xff]
        %v1899 = vld [vmem:[%s781 + $0x109] sm:$0xff]
        %v1900 = vld [vmem:[%s781 + $0x111] sm:$0xff]
        %v1901 = vld [vmem:[%s781 + $0x121] sm:$0xff]
        %v1902 = vld [vmem:[%s781 + $0x129] sm:$0xff]
        %v1903 = vld [vmem:[%s781 + $0x139] sm:$0xff]
        %v1904 = vld [vmem:[%s781 + $0x141] sm:$0xff]
        %v1905 = vld [vmem:[%s781 + $0x151] sm:$0xff]
        %v1906 = vld [vmem:[%s781 + $0x159] sm:$0xff]
        %v1907 = vld [vmem:[%s781 + $0x169] sm:$0xff]
        %v1908 = vld [vmem:[%s781 + $0x171] sm:$0xff]
        %v1909 = vpack.c.bf16 %v1878, %v1877
        %v1910 = vpack.c.bf16 %v1880, %v1879
        %v1911 = vpack.c.bf16 %v1882, %v1881
        %v1912 = vpack.c.bf16 %v1884, %v1883
        %v1913 = vpack.c.bf16 %v1886, %v1885
        %v1914 = vpack.c.bf16 %v1888, %v1887
        %v1915 = vpack.c.bf16 %v1890, %v1889
        %v1916 = vpack.c.bf16 %v1892, %v1891
        %v1917 = vpack.c.bf16 %v1894, %v1893
        %v1918 = vpack.c.bf16 %v1896, %v1895
        %v1919 = vpack.c.bf16 %v1898, %v1897
        %v1920 = vpack.c.bf16 %v1900, %v1899
        %v1921 = vpack.c.bf16 %v1902, %v1901
        %v1922 = vpack.c.bf16 %v1904, %v1903
        %v1923 = vpack.c.bf16 %v1906, %v1905
        %v1924 = vpack.c.bf16 %v1908, %v1907
        %s1925 = scalar_lea.vmem %s3, 64
        %v1926 = vld [vmem:[%s1925] sm:$0xf]
        %v1927 = vld [vmem:[%s1925 + $0x4] sm:$0xf]
        %v1928 = vld [vmem:[%s1925 + $0x8] sm:$0xf]
        %v1929 = vld [vmem:[%s1925 + $0xc] sm:$0xf]
        %v1934 = vunpack.c.l.b16 %v1926
        %v1935 = vunpack.c.l.b16 %v1927
        %v1936 = vunpack.c.l.b16 %v1928
        %v1937 = vunpack.c.l.b16 %v1929
        %v1938 = vpack.c.b16 %v1935, %v1934
        %v1939 = vpack.c.b16 %v1937, %v1936
        %v1943 = vsel %vm725, %v1909, 0
        %v1946 = vsel %vm725, %v1910, 0
        %v1949 = vsel %vm725, %v1911, 0
        %v1952 = vsel %vm725, %v1912, 0
        %v1955 = vsel %vm725, %v1913, 0
        %v1958 = vsel %vm725, %v1914, 0
        %v1961 = vsel %vm725, %v1915, 0
        %v1964 = vsel %vm725, %v1916, 0
        %v1967 = vsel %vm725, %v1917, 0
        %v1970 = vsel %vm725, %v1918, 0
        %v1973 = vsel %vm725, %v1919, 0
        %v1976 = vsel %vm725, %v1920, 0
        %v1979 = vsel %vm725, %v1921, 0
        %v1982 = vsel %vm725, %v1922, 0
        %v1985 = vsel %vm725, %v1923, 0
        %v1988 = vsel %vm725, %v1924, 0
        %1990 = vmatprep.subr.bf16.mxu0 0
        %1991 = vmatpush1.bf16.msra.mxu0 %v1938
        %1992 = vmatprep.subr.bf16.mxu0 0
        %1993 = vmatpush1.bf16.msra.mxu0 %v1939
        %1994 = vmatprep.subr.bf16.mxu0 0
        %1995 = vmatpush1.bf16.msra.mxu0 0
        %1996 = vmatprep.subr.bf16.mxu0 0
        %1997 = vmatpush1.bf16.msra.mxu0 0
        %1998 = vmatprep.subr.bf16.mxu0 0
        %1999 = vmatpush1.bf16.msra.mxu0 0
        %2000 = vmatprep.subr.bf16.mxu0 0
        %2001 = vmatpush1.bf16.msra.mxu0 0
        %2002 = vmatprep.subr.bf16.mxu0 0
        %2003 = vmatpush1.bf16.msra.mxu0 0
        %2004 = vmatprep.subr.bf16.mxu0 0
        %2005 = vmatpush1.bf16.msra.mxu0 0
        %2006 = vmatprep.subr.bf16.mxu0 0
        %2007 = vmatpush1.bf16.msra.mxu0 0
        %2008 = vmatprep.subr.bf16.mxu0 0
        %2009 = vmatpush1.bf16.msra.mxu0 0
        %2010 = vmatprep.subr.bf16.mxu0 0
        %2011 = vmatpush1.bf16.msra.mxu0 0
        %2012 = vmatprep.subr.bf16.mxu0 0
        %2013 = vmatpush1.bf16.msra.mxu0 0
        %2014 = vmatprep.subr.bf16.mxu0 0
        %2015 = vmatpush1.bf16.msra.mxu0 0
        %2016 = vmatprep.subr.bf16.mxu0 0
        %2017 = vmatpush1.bf16.msra.mxu0 0
        %2018 = vmatprep.subr.bf16.mxu0 0
        %2019 = vmatpush1.bf16.msra.mxu0 0
        %2020 = vmatprep.subr.bf16.mxu0 0
        %2021 = vmatpush1.bf16.msra.mxu0 0
        %2022 = vmatprep.mubr.bf16.mxu0 0
        %2023 = vmatmul.mubr.bf16.gmra.mrb[0].mxu0 %v1943
        %v2024 = vpop.f32.mrb[0].mxu0
        %v2025 = vadd.f32 0.0, %v2024
        %v2026 = vpop.f32.mrb[0].mxu0
        %v2027 = vpop.f32.mrb[0].mxu0
        %v2028 = vadd.f32 0.0, %v2027
        %v2029 = vpop.f32.mrb[0].mxu0
        %2030 = vmatprep.mubr.bf16.mxu0 0
        %2031 = vmatmul.mubr.bf16.gmra.mrb[0].mxu0 %v1946
        %v2032 = vpop.f32.mrb[0].mxu0
        %v2033 = vpop.f32.mrb[0].mxu0
        %v2034 = vpop.f32.mrb[0].mxu0
        %v2035 = vpop.f32.mrb[0].mxu0
        %2036 = vmatprep.mubr.bf16.mxu0 0
        %2037 = vmatmul.mubr.bf16.gmra.mrb[0].mxu0 %v1949
        %v2038 = vpop.f32.mrb[0].mxu0
        %v2039 = vadd.f32 0.0, %v2038
        %v2040 = vpop.f32.mrb[0].mxu0
        %v2041 = vpop.f32.mrb[0].mxu0
        %v2042 = vadd.f32 0.0, %v2041
        %v2043 = vpop.f32.mrb[0].mxu0
        %2044 = vmatprep.mubr.bf16.mxu0 0
        %2045 = vmatmul.mubr.bf16.gmra.mrb[0].mxu0 %v1952
        %v2046 = vpop.f32.mrb[0].mxu0
        %v2047 = vpop.f32.mrb[0].mxu0
        %v2048 = vpop.f32.mrb[0].mxu0
        %v2049 = vpop.f32.mrb[0].mxu0
        %2050 = vmatprep.mubr.bf16.mxu0 0
        %2051 = vmatmul.mubr.bf16.gmra.mrb[0].mxu0 %v1955
        %v2052 = vpop.f32.mrb[0].mxu0
        %v2053 = vadd.f32 0.0, %v2052
        %v2054 = vpop.f32.mrb[0].mxu0
        %v2055 = vpop.f32.mrb[0].mxu0
        %v2056 = vadd.f32 0.0, %v2055
        %v2057 = vpop.f32.mrb[0].mxu0
        %2058 = vmatprep.mubr.bf16.mxu0 0
        %2059 = vmatmul.mubr.bf16.gmra.mrb[0].mxu0 %v1958
        %v2060 = vpop.f32.mrb[0].mxu0
        %v2061 = vpop.f32.mrb[0].mxu0
        %v2062 = vpop.f32.mrb[0].mxu0
        %v2063 = vpop.f32.mrb[0].mxu0
        %2064 = vmatprep.mubr.bf16.mxu0 0
        %2065 = vmatmul.mubr.bf16.gmra.mrb[0].mxu0 %v1961
        %v2066 = vpop.f32.mrb[0].mxu0
        %v2067 = vadd.f32 0.0, %v2066
        %v2068 = vpop.f32.mrb[0].mxu0
        %v2069 = vpop.f32.mrb[0].mxu0
        %v2070 = vadd.f32 0.0, %v2069
        %v2071 = vpop.f32.mrb[0].mxu0
        %2072 = vmatprep.mubr.bf16.mxu0 0
        %2073 = vmatmul.mubr.bf16.gmra.mrb[0].mxu0 %v1964
        %v2074 = vpop.f32.mrb[0].mxu0
        %v2075 = vpop.f32.mrb[0].mxu0
        %v2076 = vpop.f32.mrb[0].mxu0
        %v2077 = vpop.f32.mrb[0].mxu0
        %2078 = vmatprep.mubr.bf16.mxu0 0
        %2079 = vmatmul.mubr.bf16.gmra.mrb[0].mxu0 %v1967
        %v2080 = vpop.f32.mrb[0].mxu0
        %v2081 = vadd.f32 0.0, %v2080
        %v2082 = vpop.f32.mrb[0].mxu0
        %v2083 = vpop.f32.mrb[0].mxu0
        %v2084 = vadd.f32 0.0, %v2083
        %v2085 = vpop.f32.mrb[0].mxu0
        %2086 = vmatprep.mubr.bf16.mxu0 0
        %2087 = vmatmul.mubr.bf16.gmra.mrb[0].mxu0 %v1970
        %v2088 = vpop.f32.mrb[0].mxu0
        %v2089 = vpop.f32.mrb[0].mxu0
        %v2090 = vpop.f32.mrb[0].mxu0
        %v2091 = vpop.f32.mrb[0].mxu0
        %2092 = vmatprep.mubr.bf16.mxu0 0
        %2093 = vmatmul.mubr.bf16.gmra.mrb[0].mxu0 %v1973
        %v2094 = vpop.f32.mrb[0].mxu0
        %v2095 = vadd.f32 0.0, %v2094
        %v2096 = vpop.f32.mrb[0].mxu0
        %v2097 = vpop.f32.mrb[0].mxu0
        %v2098 = vadd.f32 0.0, %v2097
        %v2099 = vpop.f32.mrb[0].mxu0
        %2100 = vmatprep.mubr.bf16.mxu0 0
        %2101 = vmatmul.mubr.bf16.gmra.mrb[0].mxu0 %v1976
        %v2102 = vpop.f32.mrb[0].mxu0
        %v2103 = vpop.f32.mrb[0].mxu0
        %v2104 = vpop.f32.mrb[0].mxu0
        %v2105 = vpop.f32.mrb[0].mxu0
        %2106 = vmatprep.mubr.bf16.mxu0 0
        %2107 = vmatmul.mubr.bf16.gmra.mrb[0].mxu0 %v1979
        %v2108 = vpop.f32.mrb[0].mxu0
        %v2109 = vadd.f32 0.0, %v2108
        %v2110 = vpop.f32.mrb[0].mxu0
        %v2111 = vpop.f32.mrb[0].mxu0
        %v2112 = vadd.f32 0.0, %v2111
        %v2113 = vpop.f32.mrb[0].mxu0
        %2114 = vmatprep.mubr.bf16.mxu0 0
        %2115 = vmatmul.mubr.bf16.gmra.mrb[0].mxu0 %v1982
        %v2116 = vpop.f32.mrb[0].mxu0
        %v2117 = vpop.f32.mrb[0].mxu0
        %v2118 = vpop.f32.mrb[0].mxu0
        %v2119 = vpop.f32.mrb[0].mxu0
        %2120 = vmatprep.mubr.bf16.mxu0 0
        %2121 = vmatmul.mubr.bf16.gmra.mrb[0].mxu0 %v1985
        %v2122 = vpop.f32.mrb[0].mxu0
        %v2123 = vadd.f32 0.0, %v2122
        %v2124 = vpop.f32.mrb[0].mxu0
        %v2125 = vpop.f32.mrb[0].mxu0
        %v2126 = vadd.f32 0.0, %v2125
        %v2127 = vpop.f32.mrb[0].mxu0
        %2128 = vmatprep.mubr.bf16.mxu0 0
        %2129 = vmatmul.mubr.bf16.gmra.mrb[0].mxu0 %v1988
        %v2130 = vpop.f32.mrb[0].mxu0
        %v2131 = vpop.f32.mrb[0].mxu0
        %v2132 = vpop.f32.mrb[0].mxu0
        %v2133 = vpop.f32.mrb[0].mxu0
        %2134 = vdwg.mxu0
        %v2135 = vadd.f32 %v1861, %v2025
        %v2136 = vadd.f32 %v1862, %v2028
        %v2137 = vadd.f32 %v1863, %v2039
        %v2138 = vadd.f32 %v1864, %v2042
        %v2139 = vadd.f32 %v1865, %v2053
        %v2140 = vadd.f32 %v1866, %v2056
        %v2141 = vadd.f32 %v1867, %v2067
        %v2142 = vadd.f32 %v1868, %v2070
        %v2143 = vadd.f32 %v1869, %v2081
        %v2144 = vadd.f32 %v1870, %v2084
        %v2145 = vadd.f32 %v1871, %v2095
        %v2146 = vadd.f32 %v1872, %v2098
        %v2147 = vadd.f32 %v1873, %v2109
        %v2148 = vadd.f32 %v1874, %v2112
        %v2149 = vadd.f32 %v1875, %v2123
        %v2150 = vadd.f32 %v1876, %v2126
        %v2151 = vld [vmem:[%s781 + $0x2] sm:$0xff]
        %v2152 = vld [vmem:[%s781 + $0xa] sm:$0xff]
        %v2153 = vld [vmem:[%s781 + $0x1a] sm:$0xff]
        %v2154 = vld [vmem:[%s781 + $0x22] sm:$0xff]
        %v2155 = vld [vmem:[%s781 + $0x32] sm:$0xff]
        %v2156 = vld [vmem:[%s781 + $0x3a] sm:$0xff]
        %v2157 = vld [vmem:[%s781 + $0x4a] sm:$0xff]
        %v2158 = vld [vmem:[%s781 + $0x52] sm:$0xff]
        %v2159 = vld [vmem:[%s781 + $0x62] sm:$0xff]
        %v2160 = vld [vmem:[%s781 + $0x6a] sm:$0xff]
        %v2161 = vld [vmem:[%s781 + $0x7a] sm:$0xff]
        %v2162 = vld [vmem:[%s781 + $0x82] sm:$0xff]
        %v2163 = vld [vmem:[%s781 + $0x92] sm:$0xff]
        %v2164 = vld [vmem:[%s781 + $0x9a] sm:$0xff]
        %v2165 = vld [vmem:[%s781 + $0xaa] sm:$0xff]
        %v2166 = vld [vmem:[%s781 + $0xb2] sm:$0xff]
        %v2167 = vld [vmem:[%s781 + $0xc2] sm:$0xff]
        %v2168 = vld [vmem:[%s781 + $0xca] sm:$0xff]
        %v2169 = vld [vmem:[%s781 + $0xda] sm:$0xff]
        %v2170 = vld [vmem:[%s781 + $0xe2] sm:$0xff]
        %v2171 = vld [vmem:[%s781 + $0xf2] sm:$0xff]
        %v2172 = vld [vmem:[%s781 + $0xfa] sm:$0xff]
        %v2173 = vld [vmem:[%s781 + $0x10a] sm:$0xff]
        %v2174 = vld [vmem:[%s781 + $0x112] sm:$0xff]
        %v2175 = vld [vmem:[%s781 + $0x122] sm:$0xff]
        %v2176 = vld [vmem:[%s781 + $0x12a] sm:$0xff]
        %v2177 = vld [vmem:[%s781 + $0x13a] sm:$0xff]
        %v2178 = vld [vmem:[%s781 + $0x142] sm:$0xff]
        %v2179 = vld [vmem:[%s781 + $0x152] sm:$0xff]
        %v2180 = vld [vmem:[%s781 + $0x15a] sm:$0xff]
        %v2181 = vld [vmem:[%s781 + $0x16a] sm:$0xff]
        %v2182 = vld [vmem:[%s781 + $0x172] sm:$0xff]
        %v2183 = vpack.c.bf16 %v2152, %v2151
        %v2184 = vpack.c.bf16 %v2154, %v2153
        %v2185 = vpack.c.bf16 %v2156, %v2155
        %v2186 = vpack.c.bf16 %v2158, %v2157
        %v2187 = vpack.c.bf16 %v2160, %v2159
        %v2188 = vpack.c.bf16 %v2162, %v2161
        %v2189 = vpack.c.bf16 %v2164, %v2163
        %v2190 = vpack.c.bf16 %v2166, %v2165
        %v2191 = vpack.c.bf16 %v2168, %v2167
        %v2192 = vpack.c.bf16 %v2170, %v2169
        %v2193 = vpack.c.bf16 %v2172, %v2171
        %v2194 = vpack.c.bf16 %v2174, %v2173
        %v2195 = vpack.c.bf16 %v2176, %v2175
        %v2196 = vpack.c.bf16 %v2178, %v2177
        %v2197 = vpack.c.bf16 %v2180, %v2179
        %v2198 = vpack.c.bf16 %v2182, %v2181
        %s2199 = scalar_lea.vmem %s3, 80
        %v2200 = vld [vmem:[%s2199] sm:$0xf]
        %v2201 = vld [vmem:[%s2199 + $0x4] sm:$0xf]
        %v2202 = vld [vmem:[%s2199 + $0x8] sm:$0xf]
        %v2203 = vld [vmem:[%s2199 + $0xc] sm:$0xf]
        %v2208 = vunpack.c.l.b16 %v2200
        %v2209 = vunpack.c.l.b16 %v2201
        %v2210 = vunpack.c.l.b16 %v2202
        %v2211 = vunpack.c.l.b16 %v2203
        %v2212 = vpack.c.b16 %v2209, %v2208
        %v2213 = vpack.c.b16 %v2211, %v2210
        %v2217 = vsel %vm725, %v2183, 0
        %v2220 = vsel %vm725, %v2184, 0
        %v2223 = vsel %vm725, %v2185, 0
        %v2226 = vsel %vm725, %v2186, 0
        %v2229 = vsel %vm725, %v2187, 0
        %v2232 = vsel %vm725, %v2188, 0
        %v2235 = vsel %vm725, %v2189, 0
        %v2238 = vsel %vm725, %v2190, 0
        %v2241 = vsel %vm725, %v2191, 0
        %v2244 = vsel %vm725, %v2192, 0
        %v2247 = vsel %vm725, %v2193, 0
        %v2250 = vsel %vm725, %v2194, 0
        %v2253 = vsel %vm725, %v2195, 0
        %v2256 = vsel %vm725, %v2196, 0
        %v2259 = vsel %vm725, %v2197, 0
        %v2262 = vsel %vm725, %v2198, 0
        %2264 = vmatprep.subr.bf16.mxu0 0
        %2265 = vmatpush1.bf16.msra.mxu0 %v2212
        %2266 = vmatprep.subr.bf16.mxu0 0
        %2267 = vmatpush1.bf16.msra.mxu0 %v2213
        %2268 = vmatprep.subr.bf16.mxu0 0
        %2269 = vmatpush1.bf16.msra.mxu0 0
        %2270 = vmatprep.subr.bf16.mxu0 0
        %2271 = vmatpush1.bf16.msra.mxu0 0
        %2272 = vmatprep.subr.bf16.mxu0 0
        %2273 = vmatpush1.bf16.msra.mxu0 0
        %2274 = vmatprep.subr.bf16.mxu0 0
        %2275 = vmatpush1.bf16.msra.mxu0 0
        %2276 = vmatprep.subr.bf16.mxu0 0
        %2277 = vmatpush1.bf16.msra.mxu0 0
        %2278 = vmatprep.subr.bf16.mxu0 0
        %2279 = vmatpush1.bf16.msra.mxu0 0
        %2280 = vmatprep.subr.bf16.mxu0 0
        %2281 = vmatpush1.bf16.msra.mxu0 0
        %2282 = vmatprep.subr.bf16.mxu0 0
        %2283 = vmatpush1.bf16.msra.mxu0 0
        %2284 = vmatprep.subr.bf16.mxu0 0
        %2285 = vmatpush1.bf16.msra.mxu0 0
        %2286 = vmatprep.subr.bf16.mxu0 0
        %2287 = vmatpush1.bf16.msra.mxu0 0
        %2288 = vmatprep.subr.bf16.mxu0 0
        %2289 = vmatpush1.bf16.msra.mxu0 0
        %2290 = vmatprep.subr.bf16.mxu0 0
        %2291 = vmatpush1.bf16.msra.mxu0 0
        %2292 = vmatprep.subr.bf16.mxu0 0
        %2293 = vmatpush1.bf16.msra.mxu0 0
        %2294 = vmatprep.subr.bf16.mxu0 0
        %2295 = vmatpush1.bf16.msra.mxu0 0
        %2296 = vmatprep.mubr.bf16.mxu0 0
        %2297 = vmatmul.mubr.bf16.gmra.mrb[0].mxu0 %v2217
        %v2298 = vpop.f32.mrb[0].mxu0
        %v2299 = vadd.f32 0.0, %v2298
        %v2300 = vpop.f32.mrb[0].mxu0
        %v2301 = vpop.f32.mrb[0].mxu0
        %v2302 = vadd.f32 0.0, %v2301
        %v2303 = vpop.f32.mrb[0].mxu0
        %2304 = vmatprep.mubr.bf16.mxu0 0
        %2305 = vmatmul.mubr.bf16.gmra.mrb[0].mxu0 %v2220
        %v2306 = vpop.f32.mrb[0].mxu0
        %v2307 = vpop.f32.mrb[0].mxu0
        %v2308 = vpop.f32.mrb[0].mxu0
        %v2309 = vpop.f32.mrb[0].mxu0
        %2310 = vmatprep.mubr.bf16.mxu0 0
        %2311 = vmatmul.mubr.bf16.gmra.mrb[0].mxu0 %v2223
        %v2312 = vpop.f32.mrb[0].mxu0
        %v2313 = vadd.f32 0.0, %v2312
        %v2314 = vpop.f32.mrb[0].mxu0
        %v2315 = vpop.f32.mrb[0].mxu0
        %v2316 = vadd.f32 0.0, %v2315
        %v2317 = vpop.f32.mrb[0].mxu0
        %2318 = vmatprep.mubr.bf16.mxu0 0
        %2319 = vmatmul.mubr.bf16.gmra.mrb[0].mxu0 %v2226
        %v2320 = vpop.f32.mrb[0].mxu0
        %v2321 = vpop.f32.mrb[0].mxu0
        %v2322 = vpop.f32.mrb[0].mxu0
        %v2323 = vpop.f32.mrb[0].mxu0
        %2324 = vmatprep.mubr.bf16.mxu0 0
        %2325 = vmatmul.mubr.bf16.gmra.mrb[0].mxu0 %v2229
        %v2326 = vpop.f32.mrb[0].mxu0
        %v2327 = vadd.f32 0.0, %v2326
        %v2328 = vpop.f32.mrb[0].mxu0
        %v2329 = vpop.f32.mrb[0].mxu0
        %v2330 = vadd.f32 0.0, %v2329
        %v2331 = vpop.f32.mrb[0].mxu0
        %2332 = vmatprep.mubr.bf16.mxu0 0
        %2333 = vmatmul.mubr.bf16.gmra.mrb[0].mxu0 %v2232
        %v2334 = vpop.f32.mrb[0].mxu0
        %v2335 = vpop.f32.mrb[0].mxu0
        %v2336 = vpop.f32.mrb[0].mxu0
        %v2337 = vpop.f32.mrb[0].mxu0
        %2338 = vmatprep.mubr.bf16.mxu0 0
        %2339 = vmatmul.mubr.bf16.gmra.mrb[0].mxu0 %v2235
        %v2340 = vpop.f32.mrb[0].mxu0
        %v2341 = vadd.f32 0.0, %v2340
        %v2342 = vpop.f32.mrb[0].mxu0
        %v2343 = vpop.f32.mrb[0].mxu0
        %v2344 = vadd.f32 0.0, %v2343
        %v2345 = vpop.f32.mrb[0].mxu0
        %2346 = vmatprep.mubr.bf16.mxu0 0
        %2347 = vmatmul.mubr.bf16.gmra.mrb[0].mxu0 %v2238
        %v2348 = vpop.f32.mrb[0].mxu0
        %v2349 = vpop.f32.mrb[0].mxu0
        %v2350 = vpop.f32.mrb[0].mxu0
        %v2351 = vpop.f32.mrb[0].mxu0
        %2352 = vmatprep.mubr.bf16.mxu0 0
        %2353 = vmatmul.mubr.bf16.gmra.mrb[0].mxu0 %v2241
        %v2354 = vpop.f32.mrb[0].mxu0
        %v2355 = vadd.f32 0.0, %v2354
        %v2356 = vpop.f32.mrb[0].mxu0
        %v2357 = vpop.f32.mrb[0].mxu0
        %v2358 = vadd.f32 0.0, %v2357
        %v2359 = vpop.f32.mrb[0].mxu0
        %2360 = vmatprep.mubr.bf16.mxu0 0
        %2361 = vmatmul.mubr.bf16.gmra.mrb[0].mxu0 %v2244
        %v2362 = vpop.f32.mrb[0].mxu0
        %v2363 = vpop.f32.mrb[0].mxu0
        %v2364 = vpop.f32.mrb[0].mxu0
        %v2365 = vpop.f32.mrb[0].mxu0
        %2366 = vmatprep.mubr.bf16.mxu0 0
        %2367 = vmatmul.mubr.bf16.gmra.mrb[0].mxu0 %v2247
        %v2368 = vpop.f32.mrb[0].mxu0
        %v2369 = vadd.f32 0.0, %v2368
        %v2370 = vpop.f32.mrb[0].mxu0
        %v2371 = vpop.f32.mrb[0].mxu0
        %v2372 = vadd.f32 0.0, %v2371
        %v2373 = vpop.f32.mrb[0].mxu0
        %2374 = vmatprep.mubr.bf16.mxu0 0
        %2375 = vmatmul.mubr.bf16.gmra.mrb[0].mxu0 %v2250
        %v2376 = vpop.f32.mrb[0].mxu0
        %v2377 = vpop.f32.mrb[0].mxu0
        %v2378 = vpop.f32.mrb[0].mxu0
        %v2379 = vpop.f32.mrb[0].mxu0
        %2380 = vmatprep.mubr.bf16.mxu0 0
        %2381 = vmatmul.mubr.bf16.gmra.mrb[0].mxu0 %v2253
        %v2382 = vpop.f32.mrb[0].mxu0
        %v2383 = vadd.f32 0.0, %v2382
        %v2384 = vpop.f32.mrb[0].mxu0
        %v2385 = vpop.f32.mrb[0].mxu0
        %v2386 = vadd.f32 0.0, %v2385
        %v2387 = vpop.f32.mrb[0].mxu0
        %2388 = vmatprep.mubr.bf16.mxu0 0
        %2389 = vmatmul.mubr.bf16.gmra.mrb[0].mxu0 %v2256
        %v2390 = vpop.f32.mrb[0].mxu0
        %v2391 = vpop.f32.mrb[0].mxu0
        %v2392 = vpop.f32.mrb[0].mxu0
        %v2393 = vpop.f32.mrb[0].mxu0
        %2394 = vmatprep.mubr.bf16.mxu0 0
        %2395 = vmatmul.mubr.bf16.gmra.mrb[0].mxu0 %v2259
        %v2396 = vpop.f32.mrb[0].mxu0
        %v2397 = vadd.f32 0.0, %v2396
        %v2398 = vpop.f32.mrb[0].mxu0
        %v2399 = vpop.f32.mrb[0].mxu0
        %v2400 = vadd.f32 0.0, %v2399
        %v2401 = vpop.f32.mrb[0].mxu0
        %2402 = vmatprep.mubr.bf16.mxu0 0
        %2403 = vmatmul.mubr.bf16.gmra.mrb[0].mxu0 %v2262
        %v2404 = vpop.f32.mrb[0].mxu0
        %v2405 = vpop.f32.mrb[0].mxu0
        %v2406 = vpop.f32.mrb[0].mxu0
        %v2407 = vpop.f32.mrb[0].mxu0
        %2408 = vdwg.mxu0
        %v2409 = vadd.f32 %v2135, %v2299
        %v2410 = vadd.f32 %v2136, %v2302
        %v2411 = vadd.f32 %v2137, %v2313
        %v2412 = vadd.f32 %v2138, %v2316
        %v2413 = vadd.f32 %v2139, %v2327
        %v2414 = vadd.f32 %v2140, %v2330
        %v2415 = vadd.f32 %v2141, %v2341
        %v2416 = vadd.f32 %v2142, %v2344
        %v2417 = vadd.f32 %v2143, %v2355
        %v2418 = vadd.f32 %v2144, %v2358
        %v2419 = vadd.f32 %v2145, %v2369
        %v2420 = vadd.f32 %v2146, %v2372
        %v2421 = vadd.f32 %v2147, %v2383
        %v2422 = vadd.f32 %v2148, %v2386
        %v2423 = vadd.f32 %v2149, %v2397
        %v2424 = vadd.f32 %v2150, %v2400
        %s2425 = scalar_lea.vmem [#allocation2], 48
        %v2426 = vld [vmem:[%s2425] sm:$0xff]
        %v2427 = vld [vmem:[%s2425 + $0x8] sm:$0xff]
        %v2428 = vld [vmem:[%s2425 + $0x18] sm:$0xff]
        %v2429 = vld [vmem:[%s2425 + $0x20] sm:$0xff]
        %v2430 = vld [vmem:[%s2425 + $0x30] sm:$0xff]
        %v2431 = vld [vmem:[%s2425 + $0x38] sm:$0xff]
        %v2432 = vld [vmem:[%s2425 + $0x48] sm:$0xff]
        %v2433 = vld [vmem:[%s2425 + $0x50] sm:$0xff]
        %v2434 = vld [vmem:[%s2425 + $0x60] sm:$0xff]
        %v2435 = vld [vmem:[%s2425 + $0x68] sm:$0xff]
        %v2436 = vld [vmem:[%s2425 + $0x78] sm:$0xff]
        %v2437 = vld [vmem:[%s2425 + $0x80] sm:$0xff]
        %v2438 = vld [vmem:[%s2425 + $0x90] sm:$0xff]
        %v2439 = vld [vmem:[%s2425 + $0x98] sm:$0xff]
        %v2440 = vld [vmem:[%s2425 + $0xa8] sm:$0xff]
        %v2441 = vld [vmem:[%s2425 + $0xb0] sm:$0xff]
        %v2442 = vld [vmem:[%s2425 + $0xc0] sm:$0xff]
        %v2443 = vld [vmem:[%s2425 + $0xc8] sm:$0xff]
        %v2444 = vld [vmem:[%s2425 + $0xd8] sm:$0xff]
        %v2445 = vld [vmem:[%s2425 + $0xe0] sm:$0xff]
        %v2446 = vld [vmem:[%s2425 + $0xf0] sm:$0xff]
        %v2447 = vld [vmem:[%s2425 + $0xf8] sm:$0xff]
        %v2448 = vld [vmem:[%s2425 + $0x108] sm:$0xff]
        %v2449 = vld [vmem:[%s2425 + $0x110] sm:$0xff]
        %v2450 = vld [vmem:[%s2425 + $0x120] sm:$0xff]
        %v2451 = vld [vmem:[%s2425 + $0x128] sm:$0xff]
        %v2452 = vld [vmem:[%s2425 + $0x138] sm:$0xff]
        %v2453 = vld [vmem:[%s2425 + $0x140] sm:$0xff]
        %v2454 = vld [vmem:[%s2425 + $0x150] sm:$0xff]
        %v2455 = vld [vmem:[%s2425 + $0x158] sm:$0xff]
        %v2456 = vld [vmem:[%s2425 + $0x168] sm:$0xff]
        %v2457 = vld [vmem:[%s2425 + $0x170] sm:$0xff]
        %v2458 = vpack.c.bf16 %v2427, %v2426
        %v2459 = vpack.c.bf16 %v2429, %v2428
        %v2460 = vpack.c.bf16 %v2431, %v2430
        %v2461 = vpack.c.bf16 %v2433, %v2432
        %v2462 = vpack.c.bf16 %v2435, %v2434
        %v2463 = vpack.c.bf16 %v2437, %v2436
        %v2464 = vpack.c.bf16 %v2439, %v2438
        %v2465 = vpack.c.bf16 %v2441, %v2440
        %v2466 = vpack.c.bf16 %v2443, %v2442
        %v2467 = vpack.c.bf16 %v2445, %v2444
        %v2468 = vpack.c.bf16 %v2447, %v2446
        %v2469 = vpack.c.bf16 %v2449, %v2448
        %v2470 = vpack.c.bf16 %v2451, %v2450
        %v2471 = vpack.c.bf16 %v2453, %v2452
        %v2472 = vpack.c.bf16 %v2455, %v2454
        %v2473 = vpack.c.bf16 %v2457, %v2456
        %s2474 = scalar_lea.vmem %s3, 96
        %v2475 = vld [vmem:[%s2474] sm:$0xf]
        %v2476 = vld [vmem:[%s2474 + $0x4] sm:$0xf]
        %v2477 = vld [vmem:[%s2474 + $0x8] sm:$0xf]
        %v2478 = vld [vmem:[%s2474 + $0xc] sm:$0xf]
        %v2483 = vunpack.c.l.b16 %v2475
        %v2484 = vunpack.c.l.b16 %v2476
        %v2485 = vunpack.c.l.b16 %v2477
        %v2486 = vunpack.c.l.b16 %v2478
        %v2487 = vpack.c.b16 %v2484, %v2483
        %v2488 = vpack.c.b16 %v2486, %v2485
        %v2492 = vsel %vm725, %v2458, 0
        %v2495 = vsel %vm725, %v2459, 0
        %v2498 = vsel %vm725, %v2460, 0
        %v2501 = vsel %vm725, %v2461, 0
        %v2504 = vsel %vm725, %v2462, 0
        %v2507 = vsel %vm725, %v2463, 0
        %v2510 = vsel %vm725, %v2464, 0
        %v2513 = vsel %vm725, %v2465, 0
        %v2516 = vsel %vm725, %v2466, 0
        %v2519 = vsel %vm725, %v2467, 0
        %v2522 = vsel %vm725, %v2468, 0
        %v2525 = vsel %vm725, %v2469, 0
        %v2528 = vsel %vm725, %v2470, 0
        %v2531 = vsel %vm725, %v2471, 0
        %v2534 = vsel %vm725, %v2472, 0
        %v2537 = vsel %vm725, %v2473, 0
        %2539 = vmatprep.subr.bf16.mxu0 0
        %2540 = vmatpush1.bf16.msra.mxu0 %v2487
        %2541 = vmatprep.subr.bf16.mxu0 0
        %2542 = vmatpush1.bf16.msra.mxu0 %v2488
        %2543 = vmatprep.subr.bf16.mxu0 0
        %2544 = vmatpush1.bf16.msra.mxu0 0
        %2545 = vmatprep.subr.bf16.mxu0 0
        %2546 = vmatpush1.bf16.msra.mxu0 0
        %2547 = vmatprep.subr.bf16.mxu0 0
        %2548 = vmatpush1.bf16.msra.mxu0 0
        %2549 = vmatprep.subr.bf16.mxu0 0
        %2550 = vmatpush1.bf16.msra.mxu0 0
        %2551 = vmatprep.subr.bf16.mxu0 0
        %2552 = vmatpush1.bf16.msra.mxu0 0
        %2553 = vmatprep.subr.bf16.mxu0 0
        %2554 = vmatpush1.bf16.msra.mxu0 0
        %2555 = vmatprep.subr.bf16.mxu0 0
        %2556 = vmatpush1.bf16.msra.mxu0 0
        %2557 = vmatprep.subr.bf16.mxu0 0
        %2558 = vmatpush1.bf16.msra.mxu0 0
        %2559 = vmatprep.subr.bf16.mxu0 0
        %2560 = vmatpush1.bf16.msra.mxu0 0
        %2561 = vmatprep.subr.bf16.mxu0 0
        %2562 = vmatpush1.bf16.msra.mxu0 0
        %2563 = vmatprep.subr.bf16.mxu0 0
        %2564 = vmatpush1.bf16.msra.mxu0 0
        %2565 = vmatprep.subr.bf16.mxu0 0
        %2566 = vmatpush1.bf16.msra.mxu0 0
        %2567 = vmatprep.subr.bf16.mxu0 0
        %2568 = vmatpush1.bf16.msra.mxu0 0
        %2569 = vmatprep.subr.bf16.mxu0 0
        %2570 = vmatpush1.bf16.msra.mxu0 0
        %2571 = vmatprep.mubr.bf16.mxu0 0
        %2572 = vmatmul.mubr.bf16.gmra.mrb[0].mxu0 %v2492
        %v2573 = vpop.f32.mrb[0].mxu0
        %v2574 = vadd.f32 0.0, %v2573
        %v2575 = vpop.f32.mrb[0].mxu0
        %v2576 = vpop.f32.mrb[0].mxu0
        %v2577 = vadd.f32 0.0, %v2576
        %v2578 = vpop.f32.mrb[0].mxu0
        %2579 = vmatprep.mubr.bf16.mxu0 0
        %2580 = vmatmul.mubr.bf16.gmra.mrb[0].mxu0 %v2495
        %v2581 = vpop.f32.mrb[0].mxu0
        %v2582 = vpop.f32.mrb[0].mxu0
        %v2583 = vpop.f32.mrb[0].mxu0
        %v2584 = vpop.f32.mrb[0].mxu0
        %2585 = vmatprep.mubr.bf16.mxu0 0
        %2586 = vmatmul.mubr.bf16.gmra.mrb[0].mxu0 %v2498
        %v2587 = vpop.f32.mrb[0].mxu0
        %v2588 = vadd.f32 0.0, %v2587
        %v2589 = vpop.f32.mrb[0].mxu0
        %v2590 = vpop.f32.mrb[0].mxu0
        %v2591 = vadd.f32 0.0, %v2590
        %v2592 = vpop.f32.mrb[0].mxu0
        %2593 = vmatprep.mubr.bf16.mxu0 0
        %2594 = vmatmul.mubr.bf16.gmra.mrb[0].mxu0 %v2501
        %v2595 = vpop.f32.mrb[0].mxu0
        %v2596 = vpop.f32.mrb[0].mxu0
        %v2597 = vpop.f32.mrb[0].mxu0
        %v2598 = vpop.f32.mrb[0].mxu0
        %2599 = vmatprep.mubr.bf16.mxu0 0
        %2600 = vmatmul.mubr.bf16.gmra.mrb[0].mxu0 %v2504
        %v2601 = vpop.f32.mrb[0].mxu0
        %v2602 = vadd.f32 0.0, %v2601
        %v2603 = vpop.f32.mrb[0].mxu0
        %v2604 = vpop.f32.mrb[0].mxu0
        %v2605 = vadd.f32 0.0, %v2604
        %v2606 = vpop.f32.mrb[0].mxu0
        %2607 = vmatprep.mubr.bf16.mxu0 0
        %2608 = vmatmul.mubr.bf16.gmra.mrb[0].mxu0 %v2507
        %v2609 = vpop.f32.mrb[0].mxu0
        %v2610 = vpop.f32.mrb[0].mxu0
        %v2611 = vpop.f32.mrb[0].mxu0
        %v2612 = vpop.f32.mrb[0].mxu0
        %2613 = vmatprep.mubr.bf16.mxu0 0
        %2614 = vmatmul.mubr.bf16.gmra.mrb[0].mxu0 %v2510
        %v2615 = vpop.f32.mrb[0].mxu0
        %v2616 = vadd.f32 0.0, %v2615
        %v2617 = vpop.f32.mrb[0].mxu0
        %v2618 = vpop.f32.mrb[0].mxu0
        %v2619 = vadd.f32 0.0, %v2618
        %v2620 = vpop.f32.mrb[0].mxu0
        %2621 = vmatprep.mubr.bf16.mxu0 0
        %2622 = vmatmul.mubr.bf16.gmra.mrb[0].mxu0 %v2513
        %v2623 = vpop.f32.mrb[0].mxu0
        %v2624 = vpop.f32.mrb[0].mxu0
        %v2625 = vpop.f32.mrb[0].mxu0
        %v2626 = vpop.f32.mrb[0].mxu0
        %2627 = vmatprep.mubr.bf16.mxu0 0
        %2628 = vmatmul.mubr.bf16.gmra.mrb[0].mxu0 %v2516
        %v2629 = vpop.f32.mrb[0].mxu0
        %v2630 = vadd.f32 0.0, %v2629
        %v2631 = vpop.f32.mrb[0].mxu0
        %v2632 = vpop.f32.mrb[0].mxu0
        %v2633 = vadd.f32 0.0, %v2632
        %v2634 = vpop.f32.mrb[0].mxu0
        %2635 = vmatprep.mubr.bf16.mxu0 0
        %2636 = vmatmul.mubr.bf16.gmra.mrb[0].mxu0 %v2519
        %v2637 = vpop.f32.mrb[0].mxu0
        %v2638 = vpop.f32.mrb[0].mxu0
        %v2639 = vpop.f32.mrb[0].mxu0
        %v2640 = vpop.f32.mrb[0].mxu0
        %2641 = vmatprep.mubr.bf16.mxu0 0
        %2642 = vmatmul.mubr.bf16.gmra.mrb[0].mxu0 %v2522
        %v2643 = vpop.f32.mrb[0].mxu0
        %v2644 = vadd.f32 0.0, %v2643
        %v2645 = vpop.f32.mrb[0].mxu0
        %v2646 = vpop.f32.mrb[0].mxu0
        %v2647 = vadd.f32 0.0, %v2646
        %v2648 = vpop.f32.mrb[0].mxu0
        %2649 = vmatprep.mubr.bf16.mxu0 0
        %2650 = vmatmul.mubr.bf16.gmra.mrb[0].mxu0 %v2525
        %v2651 = vpop.f32.mrb[0].mxu0
        %v2652 = vpop.f32.mrb[0].mxu0
        %v2653 = vpop.f32.mrb[0].mxu0
        %v2654 = vpop.f32.mrb[0].mxu0
        %2655 = vmatprep.mubr.bf16.mxu0 0
        %2656 = vmatmul.mubr.bf16.gmra.mrb[0].mxu0 %v2528
        %v2657 = vpop.f32.mrb[0].mxu0
        %v2658 = vadd.f32 0.0, %v2657
        %v2659 = vpop.f32.mrb[0].mxu0
        %v2660 = vpop.f32.mrb[0].mxu0
        %v2661 = vadd.f32 0.0, %v2660
        %v2662 = vpop.f32.mrb[0].mxu0
        %2663 = vmatprep.mubr.bf16.mxu0 0
        %2664 = vmatmul.mubr.bf16.gmra.mrb[0].mxu0 %v2531
        %v2665 = vpop.f32.mrb[0].mxu0
        %v2666 = vpop.f32.mrb[0].mxu0
        %v2667 = vpop.f32.mrb[0].mxu0
        %v2668 = vpop.f32.mrb[0].mxu0
        %2669 = vmatprep.mubr.bf16.mxu0 0
        %2670 = vmatmul.mubr.bf16.gmra.mrb[0].mxu0 %v2534
        %v2671 = vpop.f32.mrb[0].mxu0
        %v2672 = vadd.f32 0.0, %v2671
        %v2673 = vpop.f32.mrb[0].mxu0
        %v2674 = vpop.f32.mrb[0].mxu0
        %v2675 = vadd.f32 0.0, %v2674
        %v2676 = vpop.f32.mrb[0].mxu0
        %2677 = vmatprep.mubr.bf16.mxu0 0
        %2678 = vmatmul.mubr.bf16.gmra.mrb[0].mxu0 %v2537
        %v2679 = vpop.f32.mrb[0].mxu0
        %v2680 = vpop.f32.mrb[0].mxu0
        %v2681 = vpop.f32.mrb[0].mxu0
        %v2682 = vpop.f32.mrb[0].mxu0
        %2683 = vdwg.mxu0
        %v2684 = vadd.f32 %v2409, %v2574
        %v2685 = vadd.f32 %v2410, %v2577
        %v2686 = vadd.f32 %v2411, %v2588
        %v2687 = vadd.f32 %v2412, %v2591
        %v2688 = vadd.f32 %v2413, %v2602
        %v2689 = vadd.f32 %v2414, %v2605
        %v2690 = vadd.f32 %v2415, %v2616
        %v2691 = vadd.f32 %v2416, %v2619
        %v2692 = vadd.f32 %v2417, %v2630
        %v2693 = vadd.f32 %v2418, %v2633
        %v2694 = vadd.f32 %v2419, %v2644
        %v2695 = vadd.f32 %v2420, %v2647
        %v2696 = vadd.f32 %v2421, %v2658
        %v2697 = vadd.f32 %v2422, %v2661
        %v2698 = vadd.f32 %v2423, %v2672
        %v2699 = vadd.f32 %v2424, %v2675
        %v2700 = vld [vmem:[%s2425 + $0x1] sm:$0xff]
        %v2701 = vld [vmem:[%s2425 + $0x9] sm:$0xff]
        %v2702 = vld [vmem:[%s2425 + $0x19] sm:$0xff]
        %v2703 = vld [vmem:[%s2425 + $0x21] sm:$0xff]
        %v2704 = vld [vmem:[%s2425 + $0x31] sm:$0xff]
        %v2705 = vld [vmem:[%s2425 + $0x39] sm:$0xff]
        %v2706 = vld [vmem:[%s2425 + $0x49] sm:$0xff]
        %v2707 = vld [vmem:[%s2425 + $0x51] sm:$0xff]
        %v2708 = vld [vmem:[%s2425 + $0x61] sm:$0xff]
        %v2709 = vld [vmem:[%s2425 + $0x69] sm:$0xff]
        %v2710 = vld [vmem:[%s2425 + $0x79] sm:$0xff]
        %v2711 = vld [vmem:[%s2425 + $0x81] sm:$0xff]
        %v2712 = vld [vmem:[%s2425 + $0x91] sm:$0xff]
        %v2713 = vld [vmem:[%s2425 + $0x99] sm:$0xff]
        %v2714 = vld [vmem:[%s2425 + $0xa9] sm:$0xff]
        %v2715 = vld [vmem:[%s2425 + $0xb1] sm:$0xff]
        %v2716 = vld [vmem:[%s2425 + $0xc1] sm:$0xff]
        %v2717 = vld [vmem:[%s2425 + $0xc9] sm:$0xff]
        %v2718 = vld [vmem:[%s2425 + $0xd9] sm:$0xff]
        %v2719 = vld [vmem:[%s2425 + $0xe1] sm:$0xff]
        %v2720 = vld [vmem:[%s2425 + $0xf1] sm:$0xff]
        %v2721 = vld [vmem:[%s2425 + $0xf9] sm:$0xff]
        %v2722 = vld [vmem:[%s2425 + $0x109] sm:$0xff]
        %v2723 = vld [vmem:[%s2425 + $0x111] sm:$0xff]
        %v2724 = vld [vmem:[%s2425 + $0x121] sm:$0xff]
        %v2725 = vld [vmem:[%s2425 + $0x129] sm:$0xff]
        %v2726 = vld [vmem:[%s2425 + $0x139] sm:$0xff]
        %v2727 = vld [vmem:[%s2425 + $0x141] sm:$0xff]
        %v2728 = vld [vmem:[%s2425 + $0x151] sm:$0xff]
        %v2729 = vld [vmem:[%s2425 + $0x159] sm:$0xff]
        %v2730 = vld [vmem:[%s2425 + $0x169] sm:$0xff]
        %v2731 = vld [vmem:[%s2425 + $0x171] sm:$0xff]
        %v2732 = vpack.c.bf16 %v2701, %v2700
        %v2733 = vpack.c.bf16 %v2703, %v2702
        %v2734 = vpack.c.bf16 %v2705, %v2704
        %v2735 = vpack.c.bf16 %v2707, %v2706
        %v2736 = vpack.c.bf16 %v2709, %v2708
        %v2737 = vpack.c.bf16 %v2711, %v2710
        %v2738 = vpack.c.bf16 %v2713, %v2712
        %v2739 = vpack.c.bf16 %v2715, %v2714
        %v2740 = vpack.c.bf16 %v2717, %v2716
        %v2741 = vpack.c.bf16 %v2719, %v2718
        %v2742 = vpack.c.bf16 %v2721, %v2720
        %v2743 = vpack.c.bf16 %v2723, %v2722
        %v2744 = vpack.c.bf16 %v2725, %v2724
        %v2745 = vpack.c.bf16 %v2727, %v2726
        %v2746 = vpack.c.bf16 %v2729, %v2728
        %v2747 = vpack.c.bf16 %v2731, %v2730
        %s2748 = scalar_lea.vmem %s3, 112
        %v2749 = vld [vmem:[%s2748] sm:$0xf]
        %v2750 = vld [vmem:[%s2748 + $0x4] sm:$0xf]
        %v2751 = vld [vmem:[%s2748 + $0x8] sm:$0xf]
        %v2752 = vld [vmem:[%s2748 + $0xc] sm:$0xf]
        %v2757 = vunpack.c.l.b16 %v2749
        %v2758 = vunpack.c.l.b16 %v2750
        %v2759 = vunpack.c.l.b16 %v2751
        %v2760 = vunpack.c.l.b16 %v2752
        %v2761 = vpack.c.b16 %v2758, %v2757
        %v2762 = vpack.c.b16 %v2760, %v2759
        %v2766 = vsel %vm725, %v2732, 0
        %v2769 = vsel %vm725, %v2733, 0
        %v2772 = vsel %vm725, %v2734, 0
        %v2775 = vsel %vm725, %v2735, 0
        %v2778 = vsel %vm725, %v2736, 0
        %v2781 = vsel %vm725, %v2737, 0
        %v2784 = vsel %vm725, %v2738, 0
        %v2787 = vsel %vm725, %v2739, 0
        %v2790 = vsel %vm725, %v2740, 0
        %v2793 = vsel %vm725, %v2741, 0
        %v2796 = vsel %vm725, %v2742, 0
        %v2799 = vsel %vm725, %v2743, 0
        %v2802 = vsel %vm725, %v2744, 0
        %v2805 = vsel %vm725, %v2745, 0
        %v2808 = vsel %vm725, %v2746, 0
        %v2811 = vsel %vm725, %v2747, 0
        %2813 = vmatprep.subr.bf16.mxu0 0
        %2814 = vmatpush1.bf16.msra.mxu0 %v2761
        %2815 = vmatprep.subr.bf16.mxu0 0
        %2816 = vmatpush1.bf16.msra.mxu0 %v2762
        %2817 = vmatprep.subr.bf16.mxu0 0
        %2818 = vmatpush1.bf16.msra.mxu0 0
        %2819 = vmatprep.subr.bf16.mxu0 0
        %2820 = vmatpush1.bf16.msra.mxu0 0
        %2821 = vmatprep.subr.bf16.mxu0 0
        %2822 = vmatpush1.bf16.msra.mxu0 0
        %2823 = vmatprep.subr.bf16.mxu0 0
        %2824 = vmatpush1.bf16.msra.mxu0 0
        %2825 = vmatprep.subr.bf16.mxu0 0
        %2826 = vmatpush1.bf16.msra.mxu0 0
        %2827 = vmatprep.subr.bf16.mxu0 0
        %2828 = vmatpush1.bf16.msra.mxu0 0
        %2829 = vmatprep.subr.bf16.mxu0 0
        %2830 = vmatpush1.bf16.msra.mxu0 0
        %2831 = vmatprep.subr.bf16.mxu0 0
        %2832 = vmatpush1.bf16.msra.mxu0 0
        %2833 = vmatprep.subr.bf16.mxu0 0
        %2834 = vmatpush1.bf16.msra.mxu0 0
        %2835 = vmatprep.subr.bf16.mxu0 0
        %2836 = vmatpush1.bf16.msra.mxu0 0
        %2837 = vmatprep.subr.bf16.mxu0 0
        %2838 = vmatpush1.bf16.msra.mxu0 0
        %2839 = vmatprep.subr.bf16.mxu0 0
        %2840 = vmatpush1.bf16.msra.mxu0 0
        %2841 = vmatprep.subr.bf16.mxu0 0
        %2842 = vmatpush1.bf16.msra.mxu0 0
        %2843 = vmatprep.subr.bf16.mxu0 0
        %2844 = vmatpush1.bf16.msra.mxu0 0
        %2845 = vmatprep.mubr.bf16.mxu0 0
        %2846 = vmatmul.mubr.bf16.gmra.mrb[0].mxu0 %v2766
        %v2847 = vpop.f32.mrb[0].mxu0
        %v2848 = vadd.f32 0.0, %v2847
        %v2849 = vpop.f32.mrb[0].mxu0
        %v2850 = vpop.f32.mrb[0].mxu0
        %v2851 = vadd.f32 0.0, %v2850
        %v2852 = vpop.f32.mrb[0].mxu0
        %2853 = vmatprep.mubr.bf16.mxu0 0
        %2854 = vmatmul.mubr.bf16.gmra.mrb[0].mxu0 %v2769
        %v2855 = vpop.f32.mrb[0].mxu0
        %v2856 = vpop.f32.mrb[0].mxu0
        %v2857 = vpop.f32.mrb[0].mxu0
        %v2858 = vpop.f32.mrb[0].mxu0
        %2859 = vmatprep.mubr.bf16.mxu0 0
        %2860 = vmatmul.mubr.bf16.gmra.mrb[0].mxu0 %v2772
        %v2861 = vpop.f32.mrb[0].mxu0
        %v2862 = vadd.f32 0.0, %v2861
        %v2863 = vpop.f32.mrb[0].mxu0
        %v2864 = vpop.f32.mrb[0].mxu0
        %v2865 = vadd.f32 0.0, %v2864
        %v2866 = vpop.f32.mrb[0].mxu0
        %2867 = vmatprep.mubr.bf16.mxu0 0
        %2868 = vmatmul.mubr.bf16.gmra.mrb[0].mxu0 %v2775
        %v2869 = vpop.f32.mrb[0].mxu0
        %v2870 = vpop.f32.mrb[0].mxu0
        %v2871 = vpop.f32.mrb[0].mxu0
        %v2872 = vpop.f32.mrb[0].mxu0
        %2873 = vmatprep.mubr.bf16.mxu0 0
        %2874 = vmatmul.mubr.bf16.gmra.mrb[0].mxu0 %v2778
        %v2875 = vpop.f32.mrb[0].mxu0
        %v2876 = vadd.f32 0.0, %v2875
        %v2877 = vpop.f32.mrb[0].mxu0
        %v2878 = vpop.f32.mrb[0].mxu0
        %v2879 = vadd.f32 0.0, %v2878
        %v2880 = vpop.f32.mrb[0].mxu0
        %2881 = vmatprep.mubr.bf16.mxu0 0
        %2882 = vmatmul.mubr.bf16.gmra.mrb[0].mxu0 %v2781
        %v2883 = vpop.f32.mrb[0].mxu0
        %v2884 = vpop.f32.mrb[0].mxu0
        %v2885 = vpop.f32.mrb[0].mxu0
        %v2886 = vpop.f32.mrb[0].mxu0
        %2887 = vmatprep.mubr.bf16.mxu0 0
        %2888 = vmatmul.mubr.bf16.gmra.mrb[0].mxu0 %v2784
        %v2889 = vpop.f32.mrb[0].mxu0
        %v2890 = vadd.f32 0.0, %v2889
        %v2891 = vpop.f32.mrb[0].mxu0
        %v2892 = vpop.f32.mrb[0].mxu0
        %v2893 = vadd.f32 0.0, %v2892
        %v2894 = vpop.f32.mrb[0].mxu0
        %2895 = vmatprep.mubr.bf16.mxu0 0
        %2896 = vmatmul.mubr.bf16.gmra.mrb[0].mxu0 %v2787
        %v2897 = vpop.f32.mrb[0].mxu0
        %v2898 = vpop.f32.mrb[0].mxu0
        %v2899 = vpop.f32.mrb[0].mxu0
        %v2900 = vpop.f32.mrb[0].mxu0
        %2901 = vmatprep.mubr.bf16.mxu0 0
        %2902 = vmatmul.mubr.bf16.gmra.mrb[0].mxu0 %v2790
        %v2903 = vpop.f32.mrb[0].mxu0
        %v2904 = vadd.f32 0.0, %v2903
        %v2905 = vpop.f32.mrb[0].mxu0
        %v2906 = vpop.f32.mrb[0].mxu0
        %v2907 = vadd.f32 0.0, %v2906
        %v2908 = vpop.f32.mrb[0].mxu0
        %2909 = vmatprep.mubr.bf16.mxu0 0
        %2910 = vmatmul.mubr.bf16.gmra.mrb[0].mxu0 %v2793
        %v2911 = vpop.f32.mrb[0].mxu0
        %v2912 = vpop.f32.mrb[0].mxu0
        %v2913 = vpop.f32.mrb[0].mxu0
        %v2914 = vpop.f32.mrb[0].mxu0
        %2915 = vmatprep.mubr.bf16.mxu0 0
        %2916 = vmatmul.mubr.bf16.gmra.mrb[0].mxu0 %v2796
        %v2917 = vpop.f32.mrb[0].mxu0
        %v2918 = vadd.f32 0.0, %v2917
        %v2919 = vpop.f32.mrb[0].mxu0
        %v2920 = vpop.f32.mrb[0].mxu0
        %v2921 = vadd.f32 0.0, %v2920
        %v2922 = vpop.f32.mrb[0].mxu0
        %2923 = vmatprep.mubr.bf16.mxu0 0
        %2924 = vmatmul.mubr.bf16.gmra.mrb[0].mxu0 %v2799
        %v2925 = vpop.f32.mrb[0].mxu0
        %v2926 = vpop.f32.mrb[0].mxu0
        %v2927 = vpop.f32.mrb[0].mxu0
        %v2928 = vpop.f32.mrb[0].mxu0
        %2929 = vmatprep.mubr.bf16.mxu0 0
        %2930 = vmatmul.mubr.bf16.gmra.mrb[0].mxu0 %v2802
        %v2931 = vpop.f32.mrb[0].mxu0
        %v2932 = vadd.f32 0.0, %v2931
        %v2933 = vpop.f32.mrb[0].mxu0
        %v2934 = vpop.f32.mrb[0].mxu0
        %v2935 = vadd.f32 0.0, %v2934
        %v2936 = vpop.f32.mrb[0].mxu0
        %2937 = vmatprep.mubr.bf16.mxu0 0
        %2938 = vmatmul.mubr.bf16.gmra.mrb[0].mxu0 %v2805
        %v2939 = vpop.f32.mrb[0].mxu0
        %v2940 = vpop.f32.mrb[0].mxu0
        %v2941 = vpop.f32.mrb[0].mxu0
        %v2942 = vpop.f32.mrb[0].mxu0
        %2943 = vmatprep.mubr.bf16.mxu0 0
        %2944 = vmatmul.mubr.bf16.gmra.mrb[0].mxu0 %v2808
        %v2945 = vpop.f32.mrb[0].mxu0
        %v2946 = vadd.f32 0.0, %v2945
        %v2947 = vpop.f32.mrb[0].mxu0
        %v2948 = vpop.f32.mrb[0].mxu0
        %v2949 = vadd.f32 0.0, %v2948
        %v2950 = vpop.f32.mrb[0].mxu0
        %2951 = vmatprep.mubr.bf16.mxu0 0
        %2952 = vmatmul.mubr.bf16.gmra.mrb[0].mxu0 %v2811
        %v2953 = vpop.f32.mrb[0].mxu0
        %v2954 = vpop.f32.mrb[0].mxu0
        %v2955 = vpop.f32.mrb[0].mxu0
        %v2956 = vpop.f32.mrb[0].mxu0
        %2957 = vdwg.mxu0
        %v2958 = vadd.f32 %v2684, %v2848
        %v2959 = vadd.f32 %v2685, %v2851
        %v2960 = vadd.f32 %v2686, %v2862
        %v2961 = vadd.f32 %v2687, %v2865
        %v2962 = vadd.f32 %v2688, %v2876
        %v2963 = vadd.f32 %v2689, %v2879
        %v2964 = vadd.f32 %v2690, %v2890
        %v2965 = vadd.f32 %v2691, %v2893
        %v2966 = vadd.f32 %v2692, %v2904
        %v2967 = vadd.f32 %v2693, %v2907
        %v2968 = vadd.f32 %v2694, %v2918
        %v2969 = vadd.f32 %v2695, %v2921
        %v2970 = vadd.f32 %v2696, %v2932
        %v2971 = vadd.f32 %v2697, %v2935
        %v2972 = vadd.f32 %v2698, %v2946
        %v2973 = vadd.f32 %v2699, %v2949
        %v2974 = vld [vmem:[%s2425 + $0x2] sm:$0xff]
        %v2975 = vld [vmem:[%s2425 + $0xa] sm:$0xff]
        %v2976 = vld [vmem:[%s2425 + $0x1a] sm:$0xff]
        %v2977 = vld [vmem:[%s2425 + $0x22] sm:$0xff]
        %v2978 = vld [vmem:[%s2425 + $0x32] sm:$0xff]
        %v2979 = vld [vmem:[%s2425 + $0x3a] sm:$0xff]
        %v2980 = vld [vmem:[%s2425 + $0x4a] sm:$0xff]
        %v2981 = vld [vmem:[%s2425 + $0x52] sm:$0xff]
        %v2982 = vld [vmem:[%s2425 + $0x62] sm:$0xff]
        %v2983 = vld [vmem:[%s2425 + $0x6a] sm:$0xff]
        %v2984 = vld [vmem:[%s2425 + $0x7a] sm:$0xff]
        %v2985 = vld [vmem:[%s2425 + $0x82] sm:$0xff]
        %v2986 = vld [vmem:[%s2425 + $0x92] sm:$0xff]
        %v2987 = vld [vmem:[%s2425 + $0x9a] sm:$0xff]
        %v2988 = vld [vmem:[%s2425 + $0xaa] sm:$0xff]
        %v2989 = vld [vmem:[%s2425 + $0xb2] sm:$0xff]
        %v2990 = vld [vmem:[%s2425 + $0xc2] sm:$0xff]
        %v2991 = vld [vmem:[%s2425 + $0xca] sm:$0xff]
        %v2992 = vld [vmem:[%s2425 + $0xda] sm:$0xff]
        %v2993 = vld [vmem:[%s2425 + $0xe2] sm:$0xff]
        %v2994 = vld [vmem:[%s2425 + $0xf2] sm:$0xff]
        %v2995 = vld [vmem:[%s2425 + $0xfa] sm:$0xff]
        %v2996 = vld [vmem:[%s2425 + $0x10a] sm:$0xff]
        %v2997 = vld [vmem:[%s2425 + $0x112] sm:$0xff]
        %v2998 = vld [vmem:[%s2425 + $0x122] sm:$0xff]
        %v2999 = vld [vmem:[%s2425 + $0x12a] sm:$0xff]
        %v3000 = vld [vmem:[%s2425 + $0x13a] sm:$0xff]
        %v3001 = vld [vmem:[%s2425 + $0x142] sm:$0xff]
        %v3002 = vld [vmem:[%s2425 + $0x152] sm:$0xff]
        %v3003 = vld [vmem:[%s2425 + $0x15a] sm:$0xff]
        %v3004 = vld [vmem:[%s2425 + $0x16a] sm:$0xff]
        %v3005 = vld [vmem:[%s2425 + $0x172] sm:$0xff]
        %v3006 = vpack.c.bf16 %v2975, %v2974
        %v3007 = vpack.c.bf16 %v2977, %v2976
        %v3008 = vpack.c.bf16 %v2979, %v2978
        %v3009 = vpack.c.bf16 %v2981, %v2980
        %v3010 = vpack.c.bf16 %v2983, %v2982
        %v3011 = vpack.c.bf16 %v2985, %v2984
        %v3012 = vpack.c.bf16 %v2987, %v2986
        %v3013 = vpack.c.bf16 %v2989, %v2988
        %v3014 = vpack.c.bf16 %v2991, %v2990
        %v3015 = vpack.c.bf16 %v2993, %v2992
        %v3016 = vpack.c.bf16 %v2995, %v2994
        %v3017 = vpack.c.bf16 %v2997, %v2996
        %v3018 = vpack.c.bf16 %v2999, %v2998
        %v3019 = vpack.c.bf16 %v3001, %v3000
        %v3020 = vpack.c.bf16 %v3003, %v3002
        %v3021 = vpack.c.bf16 %v3005, %v3004
        %s3022 = scalar_lea.vmem %s3, 128
        %v3023 = vld [vmem:[%s3022] sm:$0xf]
        %v3024 = vld [vmem:[%s3022 + $0x4] sm:$0xf]
        %v3025 = vld [vmem:[%s3022 + $0x8] sm:$0xf]
        %v3026 = vld [vmem:[%s3022 + $0xc] sm:$0xf]
        %v3031 = vunpack.c.l.b16 %v3023
        %v3032 = vunpack.c.l.b16 %v3024
        %v3033 = vunpack.c.l.b16 %v3025
        %v3034 = vunpack.c.l.b16 %v3026
        %v3035 = vpack.c.b16 %v3032, %v3031
        %v3036 = vpack.c.b16 %v3034, %v3033
        %v3040 = vsel %vm725, %v3006, 0
        %v3043 = vsel %vm725, %v3007, 0
        %v3046 = vsel %vm725, %v3008, 0
        %v3049 = vsel %vm725, %v3009, 0
        %v3052 = vsel %vm725, %v3010, 0
        %v3055 = vsel %vm725, %v3011, 0
        %v3058 = vsel %vm725, %v3012, 0
        %v3061 = vsel %vm725, %v3013, 0
        %v3064 = vsel %vm725, %v3014, 0
        %v3067 = vsel %vm725, %v3015, 0
        %v3070 = vsel %vm725, %v3016, 0
        %v3073 = vsel %vm725, %v3017, 0
        %v3076 = vsel %vm725, %v3018, 0
        %v3079 = vsel %vm725, %v3019, 0
        %v3082 = vsel %vm725, %v3020, 0
        %v3085 = vsel %vm725, %v3021, 0
        %3087 = vmatprep.subr.bf16.mxu0 0
        %3088 = vmatpush1.bf16.msra.mxu0 %v3035
        %3089 = vmatprep.subr.bf16.mxu0 0
        %3090 = vmatpush1.bf16.msra.mxu0 %v3036
        %3091 = vmatprep.subr.bf16.mxu0 0
        %3092 = vmatpush1.bf16.msra.mxu0 0
        %3093 = vmatprep.subr.bf16.mxu0 0
        %3094 = vmatpush1.bf16.msra.mxu0 0
        %3095 = vmatprep.subr.bf16.mxu0 0
        %3096 = vmatpush1.bf16.msra.mxu0 0
        %3097 = vmatprep.subr.bf16.mxu0 0
        %3098 = vmatpush1.bf16.msra.mxu0 0
        %3099 = vmatprep.subr.bf16.mxu0 0
        %3100 = vmatpush1.bf16.msra.mxu0 0
        %3101 = vmatprep.subr.bf16.mxu0 0
        %3102 = vmatpush1.bf16.msra.mxu0 0
        %3103 = vmatprep.subr.bf16.mxu0 0
        %3104 = vmatpush1.bf16.msra.mxu0 0
        %3105 = vmatprep.subr.bf16.mxu0 0
        %3106 = vmatpush1.bf16.msra.mxu0 0
        %3107 = vmatprep.subr.bf16.mxu0 0
        %3108 = vmatpush1.bf16.msra.mxu0 0
        %3109 = vmatprep.subr.bf16.mxu0 0
        %3110 = vmatpush1.bf16.msra.mxu0 0
        %3111 = vmatprep.subr.bf16.mxu0 0
        %3112 = vmatpush1.bf16.msra.mxu0 0
        %3113 = vmatprep.subr.bf16.mxu0 0
        %3114 = vmatpush1.bf16.msra.mxu0 0
        %3115 = vmatprep.subr.bf16.mxu0 0
        %3116 = vmatpush1.bf16.msra.mxu0 0
        %3117 = vmatprep.subr.bf16.mxu0 0
        %3118 = vmatpush1.bf16.msra.mxu0 0
        %3119 = vmatprep.mubr.bf16.mxu0 0
        %3120 = vmatmul.mubr.bf16.gmra.mrb[0].mxu0 %v3040
        %v3121 = vpop.f32.mrb[0].mxu0
        %v3122 = vadd.f32 0.0, %v3121
        %v3123 = vpop.f32.mrb[0].mxu0
        %v3124 = vpop.f32.mrb[0].mxu0
        %v3125 = vadd.f32 0.0, %v3124
        %v3126 = vpop.f32.mrb[0].mxu0
        %3127 = vmatprep.mubr.bf16.mxu0 0
        %3128 = vmatmul.mubr.bf16.gmra.mrb[0].mxu0 %v3043
        %v3129 = vpop.f32.mrb[0].mxu0
        %v3130 = vpop.f32.mrb[0].mxu0
        %v3131 = vpop.f32.mrb[0].mxu0
        %v3132 = vpop.f32.mrb[0].mxu0
        %3133 = vmatprep.mubr.bf16.mxu0 0
        %3134 = vmatmul.mubr.bf16.gmra.mrb[0].mxu0 %v3046
        %v3135 = vpop.f32.mrb[0].mxu0
        %v3136 = vadd.f32 0.0, %v3135
        %v3137 = vpop.f32.mrb[0].mxu0
        %v3138 = vpop.f32.mrb[0].mxu0
        %v3139 = vadd.f32 0.0, %v3138
        %v3140 = vpop.f32.mrb[0].mxu0
        %3141 = vmatprep.mubr.bf16.mxu0 0
        %3142 = vmatmul.mubr.bf16.gmra.mrb[0].mxu0 %v3049
        %v3143 = vpop.f32.mrb[0].mxu0
        %v3144 = vpop.f32.mrb[0].mxu0
        %v3145 = vpop.f32.mrb[0].mxu0
        %v3146 = vpop.f32.mrb[0].mxu0
        %3147 = vmatprep.mubr.bf16.mxu0 0
        %3148 = vmatmul.mubr.bf16.gmra.mrb[0].mxu0 %v3052
        %v3149 = vpop.f32.mrb[0].mxu0
        %v3150 = vadd.f32 0.0, %v3149
        %v3151 = vpop.f32.mrb[0].mxu0
        %v3152 = vpop.f32.mrb[0].mxu0
        %v3153 = vadd.f32 0.0, %v3152
        %v3154 = vpop.f32.mrb[0].mxu0
        %3155 = vmatprep.mubr.bf16.mxu0 0
        %3156 = vmatmul.mubr.bf16.gmra.mrb[0].mxu0 %v3055
        %v3157 = vpop.f32.mrb[0].mxu0
        %v3158 = vpop.f32.mrb[0].mxu0
        %v3159 = vpop.f32.mrb[0].mxu0
        %v3160 = vpop.f32.mrb[0].mxu0
        %3161 = vmatprep.mubr.bf16.mxu0 0
        %3162 = vmatmul.mubr.bf16.gmra.mrb[0].mxu0 %v3058
        %v3163 = vpop.f32.mrb[0].mxu0
        %v3164 = vadd.f32 0.0, %v3163
        %v3165 = vpop.f32.mrb[0].mxu0
        %v3166 = vpop.f32.mrb[0].mxu0
        %v3167 = vadd.f32 0.0, %v3166
        %v3168 = vpop.f32.mrb[0].mxu0
        %3169 = vmatprep.mubr.bf16.mxu0 0
        %3170 = vmatmul.mubr.bf16.gmra.mrb[0].mxu0 %v3061
        %v3171 = vpop.f32.mrb[0].mxu0
        %v3172 = vpop.f32.mrb[0].mxu0
        %v3173 = vpop.f32.mrb[0].mxu0
        %v3174 = vpop.f32.mrb[0].mxu0
        %3175 = vmatprep.mubr.bf16.mxu0 0
        %3176 = vmatmul.mubr.bf16.gmra.mrb[0].mxu0 %v3064
        %v3177 = vpop.f32.mrb[0].mxu0
        %v3178 = vadd.f32 0.0, %v3177
        %v3179 = vpop.f32.mrb[0].mxu0
        %v3180 = vpop.f32.mrb[0].mxu0
        %v3181 = vadd.f32 0.0, %v3180
        %v3182 = vpop.f32.mrb[0].mxu0
        %3183 = vmatprep.mubr.bf16.mxu0 0
        %3184 = vmatmul.mubr.bf16.gmra.mrb[0].mxu0 %v3067
        %v3185 = vpop.f32.mrb[0].mxu0
        %v3186 = vpop.f32.mrb[0].mxu0
        %v3187 = vpop.f32.mrb[0].mxu0
        %v3188 = vpop.f32.mrb[0].mxu0
        %3189 = vmatprep.mubr.bf16.mxu0 0
        %3190 = vmatmul.mubr.bf16.gmra.mrb[0].mxu0 %v3070
        %v3191 = vpop.f32.mrb[0].mxu0
        %v3192 = vadd.f32 0.0, %v3191
        %v3193 = vpop.f32.mrb[0].mxu0
        %v3194 = vpop.f32.mrb[0].mxu0
        %v3195 = vadd.f32 0.0, %v3194
        %v3196 = vpop.f32.mrb[0].mxu0
        %3197 = vmatprep.mubr.bf16.mxu0 0
        %3198 = vmatmul.mubr.bf16.gmra.mrb[0].mxu0 %v3073
        %v3199 = vpop.f32.mrb[0].mxu0
        %v3200 = vpop.f32.mrb[0].mxu0
        %v3201 = vpop.f32.mrb[0].mxu0
        %v3202 = vpop.f32.mrb[0].mxu0
        %3203 = vmatprep.mubr.bf16.mxu0 0
        %3204 = vmatmul.mubr.bf16.gmra.mrb[0].mxu0 %v3076
        %v3205 = vpop.f32.mrb[0].mxu0
        %v3206 = vadd.f32 0.0, %v3205
        %v3207 = vpop.f32.mrb[0].mxu0
        %v3208 = vpop.f32.mrb[0].mxu0
        %v3209 = vadd.f32 0.0, %v3208
        %v3210 = vpop.f32.mrb[0].mxu0
        %3211 = vmatprep.mubr.bf16.mxu0 0
        %3212 = vmatmul.mubr.bf16.gmra.mrb[0].mxu0 %v3079
        %v3213 = vpop.f32.mrb[0].mxu0
        %v3214 = vpop.f32.mrb[0].mxu0
        %v3215 = vpop.f32.mrb[0].mxu0
        %v3216 = vpop.f32.mrb[0].mxu0
        %3217 = vmatprep.mubr.bf16.mxu0 0
        %3218 = vmatmul.mubr.bf16.gmra.mrb[0].mxu0 %v3082
        %v3219 = vpop.f32.mrb[0].mxu0
        %v3220 = vadd.f32 0.0, %v3219
        %v3221 = vpop.f32.mrb[0].mxu0
        %v3222 = vpop.f32.mrb[0].mxu0
        %v3223 = vadd.f32 0.0, %v3222
        %v3224 = vpop.f32.mrb[0].mxu0
        %3225 = vmatprep.mubr.bf16.mxu0 0
        %3226 = vmatmul.mubr.bf16.gmra.mrb[0].mxu0 %v3085
        %v3227 = vpop.f32.mrb[0].mxu0
        %v3228 = vpop.f32.mrb[0].mxu0
        %v3229 = vpop.f32.mrb[0].mxu0
        %v3230 = vpop.f32.mrb[0].mxu0
        %3231 = vdwg.mxu0
        %v3232 = vadd.f32 %v2958, %v3122
        %v3233 = vadd.f32 %v2959, %v3125
        %v3234 = vadd.f32 %v2960, %v3136
        %v3235 = vadd.f32 %v2961, %v3139
        %v3236 = vadd.f32 %v2962, %v3150
        %v3237 = vadd.f32 %v2963, %v3153
        %v3238 = vadd.f32 %v2964, %v3164
        %v3239 = vadd.f32 %v2965, %v3167
        %v3240 = vadd.f32 %v2966, %v3178
        %v3241 = vadd.f32 %v2967, %v3181
        %v3242 = vadd.f32 %v2968, %v3192
        %v3243 = vadd.f32 %v2969, %v3195
        %v3244 = vadd.f32 %v2970, %v3206
        %v3245 = vadd.f32 %v2971, %v3209
        %v3246 = vadd.f32 %v2972, %v3220
        %v3247 = vadd.f32 %v2973, %v3223
        %v3248 = vld [vmem:[%s4] sm:$0x1]
        %v3250 = vlaneseq
        %v3251 = vshrl.u32 %v3250, 7
        %v3252 = vsub.s32 0, %v3251
        %v3253 = vrot.slane %v3248, %v3252
        %v3255 = vadd.f32 %v3232, %v3253
        %v3256 = vadd.f32 %v3233, %v3253
        %v3257 = vadd.f32 %v3234, %v3253
        %v3258 = vadd.f32 %v3235, %v3253
        %v3259 = vadd.f32 %v3236, %v3253
        %v3260 = vadd.f32 %v3237, %v3253
        %v3261 = vadd.f32 %v3238, %v3253
        %v3262 = vadd.f32 %v3239, %v3253
        %v3263 = vadd.f32 %v3240, %v3253
        %v3264 = vadd.f32 %v3241, %v3253
        %v3265 = vadd.f32 %v3242, %v3253
        %v3266 = vadd.f32 %v3243, %v3253
        %v3267 = vadd.f32 %v3244, %v3253
        %v3268 = vadd.f32 %v3245, %v3253
        %v3269 = vadd.f32 %v3246, %v3253
        %v3270 = vadd.f32 %v3247, %v3253
        %v3271 = vmax.f32 %v3255, 0.0
        %v3272 = vmax.f32 %v3256, 0.0
        %v3273 = vmax.f32 %v3257, 0.0
        %v3274 = vmax.f32 %v3258, 0.0
        %v3275 = vmax.f32 %v3259, 0.0
        %v3276 = vmax.f32 %v3260, 0.0
        %v3277 = vmax.f32 %v3261, 0.0
        %v3278 = vmax.f32 %v3262, 0.0
        %v3279 = vmax.f32 %v3263, 0.0
        %v3280 = vmax.f32 %v3264, 0.0
        %v3281 = vmax.f32 %v3265, 0.0
        %v3282 = vmax.f32 %v3266, 0.0
        %v3283 = vmax.f32 %v3267, 0.0
        %v3284 = vmax.f32 %v3268, 0.0
        %v3285 = vmax.f32 %v3269, 0.0
        %v3286 = vmax.f32 %v3270, 0.0
        %v3303 = vcombine.high %v3271, %v3271
        %v3305 = vunpack.c.l.s4 1983009808
        %v3306 = vunpack.c.0.s8 %v3305
        %v3307 = vlaneseq
        %v3308 = vshrl.u32 %v3307, 7
        %v3309 = vsub.s32 %v3306, %v3308
        %v3310 = vrot.slane %v3271, %v3309
        %v3312 = vunpack.c.l.s4 1983009808
        %v3313 = vunpack.c.0.s8 %v3312
        %v3314 = vlaneseq
        %v3315 = vshrl.u32 %v3314, 7
        %v3316 = vsub.s32 %v3313, %v3315
        %v3317 = vrot.slane %v3303, %v3316
        %v3318 = vcombine.high %v3310, %v3310
        %v3319 = vcombine.high %v3317, %v3317
        %v3320 = vcombine.high %v3272, %v3272
        %v3322 = vunpack.c.l.s4 1983009808
        %v3323 = vunpack.c.0.s8 %v3322
        %v3324 = vlaneseq
        %v3325 = vshrl.u32 %v3324, 7
        %v3326 = vsub.s32 %v3323, %v3325
        %v3327 = vrot.slane %v3272, %v3326
        %v3329 = vunpack.c.l.s4 1983009808
        %v3330 = vunpack.c.0.s8 %v3329
        %v3331 = vlaneseq
        %v3332 = vshrl.u32 %v3331, 7
        %v3333 = vsub.s32 %v3330, %v3332
        %v3334 = vrot.slane %v3320, %v3333
        %v3335 = vcombine.high %v3327, %v3327
        %v3336 = vcombine.high %v3334, %v3334
        %v3337 = vcombine.high %v3273, %v3273
        %v3339 = vunpack.c.l.s4 1983009808
        %v3340 = vunpack.c.0.s8 %v3339
        %v3341 = vlaneseq
        %v3342 = vshrl.u32 %v3341, 7
        %v3343 = vsub.s32 %v3340, %v3342
        %v3344 = vrot.slane %v3273, %v3343
        %v3346 = vunpack.c.l.s4 1983009808
        %v3347 = vunpack.c.0.s8 %v3346
        %v3348 = vlaneseq
        %v3349 = vshrl.u32 %v3348, 7
        %v3350 = vsub.s32 %v3347, %v3349
        %v3351 = vrot.slane %v3337, %v3350
        %v3352 = vcombine.high %v3344, %v3344
        %v3353 = vcombine.high %v3351, %v3351
        %v3354 = vcombine.high %v3274, %v3274
        %v3356 = vunpack.c.l.s4 1983009808
        %v3357 = vunpack.c.0.s8 %v3356
        %v3358 = vlaneseq
        %v3359 = vshrl.u32 %v3358, 7
        %v3360 = vsub.s32 %v3357, %v3359
        %v3361 = vrot.slane %v3274, %v3360
        %v3363 = vunpack.c.l.s4 1983009808
        %v3364 = vunpack.c.0.s8 %v3363
        %v3365 = vlaneseq
        %v3366 = vshrl.u32 %v3365, 7
        %v3367 = vsub.s32 %v3364, %v3366
        %v3368 = vrot.slane %v3354, %v3367
        %v3369 = vcombine.high %v3361, %v3361
        %v3370 = vcombine.high %v3368, %v3368
        %v3371 = vcombine.high %v3275, %v3275
        %v3373 = vunpack.c.l.s4 1983009808
        %v3374 = vunpack.c.0.s8 %v3373
        %v3375 = vlaneseq
        %v3376 = vshrl.u32 %v3375, 7
        %v3377 = vsub.s32 %v3374, %v3376
        %v3378 = vrot.slane %v3275, %v3377
        %v3380 = vunpack.c.l.s4 1983009808
        %v3381 = vunpack.c.0.s8 %v3380
        %v3382 = vlaneseq
        %v3383 = vshrl.u32 %v3382, 7
        %v3384 = vsub.s32 %v3381, %v3383
        %v3385 = vrot.slane %v3371, %v3384
        %v3386 = vcombine.high %v3378, %v3378
        %v3387 = vcombine.high %v3385, %v3385
        %v3388 = vcombine.high %v3276, %v3276
        %v3390 = vunpack.c.l.s4 1983009808
        %v3391 = vunpack.c.0.s8 %v3390
        %v3392 = vlaneseq
        %v3393 = vshrl.u32 %v3392, 7
        %v3394 = vsub.s32 %v3391, %v3393
        %v3395 = vrot.slane %v3276, %v3394
        %v3397 = vunpack.c.l.s4 1983009808
        %v3398 = vunpack.c.0.s8 %v3397
        %v3399 = vlaneseq
        %v3400 = vshrl.u32 %v3399, 7
        %v3401 = vsub.s32 %v3398, %v3400
        %v3402 = vrot.slane %v3388, %v3401
        %v3403 = vcombine.high %v3395, %v3395
        %v3404 = vcombine.high %v3402, %v3402
        %v3405 = vcombine.high %v3277, %v3277
        %v3407 = vunpack.c.l.s4 1983009808
        %v3408 = vunpack.c.0.s8 %v3407
        %v3409 = vlaneseq
        %v3410 = vshrl.u32 %v3409, 7
        %v3411 = vsub.s32 %v3408, %v3410
        %v3412 = vrot.slane %v3277, %v3411
        %v3414 = vunpack.c.l.s4 1983009808
        %v3415 = vunpack.c.0.s8 %v3414
        %v3416 = vlaneseq
        %v3417 = vshrl.u32 %v3416, 7
        %v3418 = vsub.s32 %v3415, %v3417
        %v3419 = vrot.slane %v3405, %v3418
        %v3420 = vcombine.high %v3412, %v3412
        %v3421 = vcombine.high %v3419, %v3419
        %v3422 = vcombine.high %v3278, %v3278
        %v3424 = vunpack.c.l.s4 1983009808
        %v3425 = vunpack.c.0.s8 %v3424
        %v3426 = vlaneseq
        %v3427 = vshrl.u32 %v3426, 7
        %v3428 = vsub.s32 %v3425, %v3427
        %v3429 = vrot.slane %v3278, %v3428
        %v3431 = vunpack.c.l.s4 1983009808
        %v3432 = vunpack.c.0.s8 %v3431
        %v3433 = vlaneseq
        %v3434 = vshrl.u32 %v3433, 7
        %v3435 = vsub.s32 %v3432, %v3434
        %v3436 = vrot.slane %v3422, %v3435
        %v3437 = vcombine.high %v3429, %v3429
        %v3438 = vcombine.high %v3436, %v3436
        %v3439 = vcombine.high %v3279, %v3279
        %v3441 = vunpack.c.l.s4 1983009808
        %v3442 = vunpack.c.0.s8 %v3441
        %v3443 = vlaneseq
        %v3444 = vshrl.u32 %v3443, 7
        %v3445 = vsub.s32 %v3442, %v3444
        %v3446 = vrot.slane %v3279, %v3445
        %v3448 = vunpack.c.l.s4 1983009808
        %v3449 = vunpack.c.0.s8 %v3448
        %v3450 = vlaneseq
        %v3451 = vshrl.u32 %v3450, 7
        %v3452 = vsub.s32 %v3449, %v3451
        %v3453 = vrot.slane %v3439, %v3452
        %v3454 = vcombine.high %v3446, %v3446
        %v3455 = vcombine.high %v3453, %v3453
        %v3456 = vcombine.high %v3280, %v3280
        %v3458 = vunpack.c.l.s4 1983009808
        %v3459 = vunpack.c.0.s8 %v3458
        %v3460 = vlaneseq
        %v3461 = vshrl.u32 %v3460, 7
        %v3462 = vsub.s32 %v3459, %v3461
        %v3463 = vrot.slane %v3280, %v3462
        %v3465 = vunpack.c.l.s4 1983009808
        %v3466 = vunpack.c.0.s8 %v3465
        %v3467 = vlaneseq
        %v3468 = vshrl.u32 %v3467, 7
        %v3469 = vsub.s32 %v3466, %v3468
        %v3470 = vrot.slane %v3456, %v3469
        %v3471 = vcombine.high %v3463, %v3463
        %v3472 = vcombine.high %v3470, %v3470
        %v3473 = vcombine.high %v3281, %v3281
        %v3475 = vunpack.c.l.s4 1983009808
        %v3476 = vunpack.c.0.s8 %v3475
        %v3477 = vlaneseq
        %v3478 = vshrl.u32 %v3477, 7
        %v3479 = vsub.s32 %v3476, %v3478
        %v3480 = vrot.slane %v3281, %v3479
        %v3482 = vunpack.c.l.s4 1983009808
        %v3483 = vunpack.c.0.s8 %v3482
        %v3484 = vlaneseq
        %v3485 = vshrl.u32 %v3484, 7
        %v3486 = vsub.s32 %v3483, %v3485
        %v3487 = vrot.slane %v3473, %v3486
        %v3488 = vcombine.high %v3480, %v3480
        %v3489 = vcombine.high %v3487, %v3487
        %v3490 = vcombine.high %v3282, %v3282
        %v3492 = vunpack.c.l.s4 1983009808
        %v3493 = vunpack.c.0.s8 %v3492
        %v3494 = vlaneseq
        %v3495 = vshrl.u32 %v3494, 7
        %v3496 = vsub.s32 %v3493, %v3495
        %v3497 = vrot.slane %v3282, %v3496
        %v3499 = vunpack.c.l.s4 1983009808
        %v3500 = vunpack.c.0.s8 %v3499
        %v3501 = vlaneseq
        %v3502 = vshrl.u32 %v3501, 7
        %v3503 = vsub.s32 %v3500, %v3502
        %v3504 = vrot.slane %v3490, %v3503
        %v3505 = vcombine.high %v3497, %v3497
        %v3506 = vcombine.high %v3504, %v3504
        %v3507 = vcombine.high %v3283, %v3283
        %v3509 = vunpack.c.l.s4 1983009808
        %v3510 = vunpack.c.0.s8 %v3509
        %v3511 = vlaneseq
        %v3512 = vshrl.u32 %v3511, 7
        %v3513 = vsub.s32 %v3510, %v3512
        %v3514 = vrot.slane %v3283, %v3513
        %v3516 = vunpack.c.l.s4 1983009808
        %v3517 = vunpack.c.0.s8 %v3516
        %v3518 = vlaneseq
        %v3519 = vshrl.u32 %v3518, 7
        %v3520 = vsub.s32 %v3517, %v3519
        %v3521 = vrot.slane %v3507, %v3520
        %v3522 = vcombine.high %v3514, %v3514
        %v3523 = vcombine.high %v3521, %v3521
        %v3524 = vcombine.high %v3284, %v3284
        %v3526 = vunpack.c.l.s4 1983009808
        %v3527 = vunpack.c.0.s8 %v3526
        %v3528 = vlaneseq
        %v3529 = vshrl.u32 %v3528, 7
        %v3530 = vsub.s32 %v3527, %v3529
        %v3531 = vrot.slane %v3284, %v3530
        %v3533 = vunpack.c.l.s4 1983009808
        %v3534 = vunpack.c.0.s8 %v3533
        %v3535 = vlaneseq
        %v3536 = vshrl.u32 %v3535, 7
        %v3537 = vsub.s32 %v3534, %v3536
        %v3538 = vrot.slane %v3524, %v3537
        %v3539 = vcombine.high %v3531, %v3531
        %v3540 = vcombine.high %v3538, %v3538
        %v3541 = vcombine.high %v3285, %v3285
        %v3543 = vunpack.c.l.s4 1983009808
        %v3544 = vunpack.c.0.s8 %v3543
        %v3545 = vlaneseq
        %v3546 = vshrl.u32 %v3545, 7
        %v3547 = vsub.s32 %v3544, %v3546
        %v3548 = vrot.slane %v3285, %v3547
        %v3550 = vunpack.c.l.s4 1983009808
        %v3551 = vunpack.c.0.s8 %v3550
        %v3552 = vlaneseq
        %v3553 = vshrl.u32 %v3552, 7
        %v3554 = vsub.s32 %v3551, %v3553
        %v3555 = vrot.slane %v3541, %v3554
        %v3556 = vcombine.high %v3548, %v3548
        %v3557 = vcombine.high %v3555, %v3555
        %v3558 = vcombine.high %v3286, %v3286
        %v3560 = vunpack.c.l.s4 1983009808
        %v3561 = vunpack.c.0.s8 %v3560
        %v3562 = vlaneseq
        %v3563 = vshrl.u32 %v3562, 7
        %v3564 = vsub.s32 %v3561, %v3563
        %v3565 = vrot.slane %v3286, %v3564
        %v3567 = vunpack.c.l.s4 1983009808
        %v3568 = vunpack.c.0.s8 %v3567
        %v3569 = vlaneseq
        %v3570 = vshrl.u32 %v3569, 7
        %v3571 = vsub.s32 %v3568, %v3570
        %v3572 = vrot.slane %v3558, %v3571
        %v3573 = vcombine.high %v3565, %v3565
        %v3574 = vcombine.high %v3572, %v3572
        %v3639 = vpack.c.bf16 %v3310, %v3310
        %v3640 = vpack.c.bf16 %v3318, %v3318
        %v3641 = vpack.c.bf16 %v3317, %v3317
        %v3642 = vpack.c.bf16 %v3319, %v3319
        %v3643 = vpack.c.bf16 %v3327, %v3327
        %v3644 = vpack.c.bf16 %v3335, %v3335
        %v3645 = vpack.c.bf16 %v3334, %v3334
        %v3646 = vpack.c.bf16 %v3336, %v3336
        %v3647 = vpack.c.bf16 %v3344, %v3344
        %v3648 = vpack.c.bf16 %v3352, %v3352
        %v3649 = vpack.c.bf16 %v3351, %v3351
        %v3650 = vpack.c.bf16 %v3353, %v3353
        %v3651 = vpack.c.bf16 %v3361, %v3361
        %v3652 = vpack.c.bf16 %v3369, %v3369
        %v3653 = vpack.c.bf16 %v3368, %v3368
        %v3654 = vpack.c.bf16 %v3370, %v3370
        %v3655 = vpack.c.bf16 %v3378, %v3378
        %v3656 = vpack.c.bf16 %v3386, %v3386
        %v3657 = vpack.c.bf16 %v3385, %v3385
        %v3658 = vpack.c.bf16 %v3387, %v3387
        %v3659 = vpack.c.bf16 %v3395, %v3395
        %v3660 = vpack.c.bf16 %v3403, %v3403
        %v3661 = vpack.c.bf16 %v3402, %v3402
        %v3662 = vpack.c.bf16 %v3404, %v3404
        %v3663 = vpack.c.bf16 %v3412, %v3412
        %v3664 = vpack.c.bf16 %v3420, %v3420
        %v3665 = vpack.c.bf16 %v3419, %v3419
        %v3666 = vpack.c.bf16 %v3421, %v3421
        %v3667 = vpack.c.bf16 %v3429, %v3429
        %v3668 = vpack.c.bf16 %v3437, %v3437
        %v3669 = vpack.c.bf16 %v3436, %v3436
        %v3670 = vpack.c.bf16 %v3438, %v3438
        %v3671 = vpack.c.bf16 %v3446, %v3446
        %v3672 = vpack.c.bf16 %v3454, %v3454
        %v3673 = vpack.c.bf16 %v3453, %v3453
        %v3674 = vpack.c.bf16 %v3455, %v3455
        %v3675 = vpack.c.bf16 %v3463, %v3463
        %v3676 = vpack.c.bf16 %v3471, %v3471
        %v3677 = vpack.c.bf16 %v3470, %v3470
        %v3678 = vpack.c.bf16 %v3472, %v3472
        %v3679 = vpack.c.bf16 %v3480, %v3480
        %v3680 = vpack.c.bf16 %v3488, %v3488
        %v3681 = vpack.c.bf16 %v3487, %v3487
        %v3682 = vpack.c.bf16 %v3489, %v3489
        %v3683 = vpack.c.bf16 %v3497, %v3497
        %v3684 = vpack.c.bf16 %v3505, %v3505
        %v3685 = vpack.c.bf16 %v3504, %v3504
        %v3686 = vpack.c.bf16 %v3506, %v3506
        %v3687 = vpack.c.bf16 %v3514, %v3514
        %v3688 = vpack.c.bf16 %v3522, %v3522
        %v3689 = vpack.c.bf16 %v3521, %v3521
        %v3690 = vpack.c.bf16 %v3523, %v3523
        %v3691 = vpack.c.bf16 %v3531, %v3531
        %v3692 = vpack.c.bf16 %v3539, %v3539
        %v3693 = vpack.c.bf16 %v3538, %v3538
        %v3694 = vpack.c.bf16 %v3540, %v3540
        %v3695 = vpack.c.bf16 %v3548, %v3548
        %v3696 = vpack.c.bf16 %v3556, %v3556
        %v3697 = vpack.c.bf16 %v3555, %v3555
        %v3698 = vpack.c.bf16 %v3557, %v3557
        %v3699 = vpack.c.bf16 %v3565, %v3565
        %v3700 = vpack.c.bf16 %v3573, %v3573
        %v3701 = vpack.c.bf16 %v3572, %v3572
        %v3702 = vpack.c.bf16 %v3574, %v3574
        %v3703 = vld [vmem:[%s5] sm:$0xf]
        %v3704 = vld [vmem:[%s5 + $0x4] sm:$0xf]
        %v3705 = vld [vmem:[%s5 + $0x8] sm:$0xf]
        %v3706 = vld [vmem:[%s5 + $0xc] sm:$0xf]
        %v3707 = vld [vmem:[%s6] sm:$0x1]
        %v3709 = vlaneseq
        %v3710 = vshrl.u32 %v3709, 7
        %v3711 = vsub.s32 0, %v3710
        %v3712 = vrot.slane %v3707, %v3711
        %v3778 = vunpack.c.l.b16 %v3639
        %v3779 = vunpack.c.l.b16 %v3640
        %v3780 = vunpack.c.l.b16 %v3641
        %v3781 = vunpack.c.l.b16 %v3642
        %v3782 = vunpack.c.l.b16 %v3643
        %v3783 = vunpack.c.l.b16 %v3644
        %v3784 = vunpack.c.l.b16 %v3645
        %v3785 = vunpack.c.l.b16 %v3646
        %v3786 = vunpack.c.l.b16 %v3647
        %v3787 = vunpack.c.l.b16 %v3648
        %v3788 = vunpack.c.l.b16 %v3649
        %v3789 = vunpack.c.l.b16 %v3650
        %v3790 = vunpack.c.l.b16 %v3651
        %v3791 = vunpack.c.l.b16 %v3652
        %v3792 = vunpack.c.l.b16 %v3653
        %v3793 = vunpack.c.l.b16 %v3654
        %v3794 = vunpack.c.l.b16 %v3655
        %v3795 = vunpack.c.l.b16 %v3656
        %v3796 = vunpack.c.l.b16 %v3657
        %v3797 = vunpack.c.l.b16 %v3658
        %v3798 = vunpack.c.l.b16 %v3659
        %v3799 = vunpack.c.l.b16 %v3660
        %v3800 = vunpack.c.l.b16 %v3661
        %v3801 = vunpack.c.l.b16 %v3662
        %v3802 = vunpack.c.l.b16 %v3663
        %v3803 = vunpack.c.l.b16 %v3664
        %v3804 = vunpack.c.l.b16 %v3665
        %v3805 = vunpack.c.l.b16 %v3666
        %v3806 = vunpack.c.l.b16 %v3667
        %v3807 = vunpack.c.l.b16 %v3668
        %v3808 = vunpack.c.l.b16 %v3669
        %v3809 = vunpack.c.l.b16 %v3670
        %v3810 = vunpack.c.l.b16 %v3671
        %v3811 = vunpack.c.l.b16 %v3672
        %v3812 = vunpack.c.l.b16 %v3673
        %v3813 = vunpack.c.l.b16 %v3674
        %v3814 = vunpack.c.l.b16 %v3675
        %v3815 = vunpack.c.l.b16 %v3676
        %v3816 = vunpack.c.l.b16 %v3677
        %v3817 = vunpack.c.l.b16 %v3678
        %v3818 = vunpack.c.l.b16 %v3679
        %v3819 = vunpack.c.l.b16 %v3680
        %v3820 = vunpack.c.l.b16 %v3681
        %v3821 = vunpack.c.l.b16 %v3682
        %v3822 = vunpack.c.l.b16 %v3683
        %v3823 = vunpack.c.l.b16 %v3684
        %v3824 = vunpack.c.l.b16 %v3685
        %v3825 = vunpack.c.l.b16 %v3686
        %v3826 = vunpack.c.l.b16 %v3687
        %v3827 = vunpack.c.l.b16 %v3688
        %v3828 = vunpack.c.l.b16 %v3689
        %v3829 = vunpack.c.l.b16 %v3690
        %v3830 = vunpack.c.l.b16 %v3691
        %v3831 = vunpack.c.l.b16 %v3692
        %v3832 = vunpack.c.l.b16 %v3693
        %v3833 = vunpack.c.l.b16 %v3694
        %v3834 = vunpack.c.l.b16 %v3695
        %v3835 = vunpack.c.l.b16 %v3696
        %v3836 = vunpack.c.l.b16 %v3697
        %v3837 = vunpack.c.l.b16 %v3698
        %v3838 = vunpack.c.l.b16 %v3699
        %v3839 = vunpack.c.l.b16 %v3700
        %v3840 = vunpack.c.l.b16 %v3701
        %v3841 = vunpack.c.l.b16 %v3702
        %v3842 = vrot.slane %v3779, 7
        %vm3843 = vcmask 1041409
        %v3844 = vsel %vm3843, %v3842, %v3778
        %v3845 = vrot.slane %v3780, 6
        %vm3846 = vcmask 1042434
        %v3847 = vsel %vm3846, %v3845, %v3844
        %v3848 = vrot.slane %v3781, 5
        %vm3849 = vcmask 1043459
        %v3850 = vsel %vm3849, %v3848, %v3847
        %v3851 = vrot.slane %v3782, 4
        %vm3852 = vcmask 1044484
        %v3853 = vsel %vm3852, %v3851, %v3850
        %v3854 = vrot.slane %v3783, 3
        %vm3855 = vcmask 1045509
        %v3856 = vsel %vm3855, %v3854, %v3853
        %v3857 = vrot.slane %v3784, 2
        %vm3858 = vcmask 1046534
        %v3859 = vsel %vm3858, %v3857, %v3856
        %v3860 = vrot.slane %v3785, 1
        %vm3861 = vcmask 1047559
        %v3862 = vsel %vm3861, %v3860, %v3859
        %v3863 = vrot.slane %v3787, 7
        %v3864 = vsel %vm3843, %v3863, %v3786
        %v3865 = vrot.slane %v3788, 6
        %v3866 = vsel %vm3846, %v3865, %v3864
        %v3867 = vrot.slane %v3789, 5
        %v3868 = vsel %vm3849, %v3867, %v3866
        %v3869 = vrot.slane %v3790, 4
        %v3870 = vsel %vm3852, %v3869, %v3868
        %v3871 = vrot.slane %v3791, 3
        %v3872 = vsel %vm3855, %v3871, %v3870
        %v3873 = vrot.slane %v3792, 2
        %v3874 = vsel %vm3858, %v3873, %v3872
        %v3875 = vrot.slane %v3793, 1
        %v3876 = vsel %vm3861, %v3875, %v3874
        %v3877 = vrot.slane %v3795, 7
        %v3878 = vsel %vm3843, %v3877, %v3794
        %v3879 = vrot.slane %v3796, 6
        %v3880 = vsel %vm3846, %v3879, %v3878
        %v3881 = vrot.slane %v3797, 5
        %v3882 = vsel %vm3849, %v3881, %v3880
        %v3883 = vrot.slane %v3798, 4
        %v3884 = vsel %vm3852, %v3883, %v3882
        %v3885 = vrot.slane %v3799, 3
        %v3886 = vsel %vm3855, %v3885, %v3884
        %v3887 = vrot.slane %v3800, 2
        %v3888 = vsel %vm3858, %v3887, %v3886
        %v3889 = vrot.slane %v3801, 1
        %v3890 = vsel %vm3861, %v3889, %v3888
        %v3891 = vrot.slane %v3803, 7
        %v3892 = vsel %vm3843, %v3891, %v3802
        %v3893 = vrot.slane %v3804, 6
        %v3894 = vsel %vm3846, %v3893, %v3892
        %v3895 = vrot.slane %v3805, 5
        %v3896 = vsel %vm3849, %v3895, %v3894
        %v3897 = vrot.slane %v3806, 4
        %v3898 = vsel %vm3852, %v3897, %v3896
        %v3899 = vrot.slane %v3807, 3
        %v3900 = vsel %vm3855, %v3899, %v3898
        %v3901 = vrot.slane %v3808, 2
        %v3902 = vsel %vm3858, %v3901, %v3900
        %v3903 = vrot.slane %v3809, 1
        %v3904 = vsel %vm3861, %v3903, %v3902
        %v3905 = vrot.slane %v3811, 7
        %v3906 = vsel %vm3843, %v3905, %v3810
        %v3907 = vrot.slane %v3812, 6
        %v3908 = vsel %vm3846, %v3907, %v3906
        %v3909 = vrot.slane %v3813, 5
        %v3910 = vsel %vm3849, %v3909, %v3908
        %v3911 = vrot.slane %v3814, 4
        %v3912 = vsel %vm3852, %v3911, %v3910
        %v3913 = vrot.slane %v3815, 3
        %v3914 = vsel %vm3855, %v3913, %v3912
        %v3915 = vrot.slane %v3816, 2
        %v3916 = vsel %vm3858, %v3915, %v3914
        %v3917 = vrot.slane %v3817, 1
        %v3918 = vsel %vm3861, %v3917, %v3916
        %v3919 = vrot.slane %v3819, 7
        %v3920 = vsel %vm3843, %v3919, %v3818
        %v3921 = vrot.slane %v3820, 6
        %v3922 = vsel %vm3846, %v3921, %v3920
        %v3923 = vrot.slane %v3821, 5
        %v3924 = vsel %vm3849, %v3923, %v3922
        %v3925 = vrot.slane %v3822, 4
        %v3926 = vsel %vm3852, %v3925, %v3924
        %v3927 = vrot.slane %v3823, 3
        %v3928 = vsel %vm3855, %v3927, %v3926
        %v3929 = vrot.slane %v3824, 2
        %v3930 = vsel %vm3858, %v3929, %v3928
        %v3931 = vrot.slane %v3825, 1
        %v3932 = vsel %vm3861, %v3931, %v3930
        %v3933 = vrot.slane %v3827, 7
        %v3934 = vsel %vm3843, %v3933, %v3826
        %v3935 = vrot.slane %v3828, 6
        %v3936 = vsel %vm3846, %v3935, %v3934
        %v3937 = vrot.slane %v3829, 5
        %v3938 = vsel %vm3849, %v3937, %v3936
        %v3939 = vrot.slane %v3830, 4
        %v3940 = vsel %vm3852, %v3939, %v3938
        %v3941 = vrot.slane %v3831, 3
        %v3942 = vsel %vm3855, %v3941, %v3940
        %v3943 = vrot.slane %v3832, 2
        %v3944 = vsel %vm3858, %v3943, %v3942
        %v3945 = vrot.slane %v3833, 1
        %v3946 = vsel %vm3861, %v3945, %v3944
        %v3947 = vrot.slane %v3835, 7
        %v3948 = vsel %vm3843, %v3947, %v3834
        %v3949 = vrot.slane %v3836, 6
        %v3950 = vsel %vm3846, %v3949, %v3948
        %v3951 = vrot.slane %v3837, 5
        %v3952 = vsel %vm3849, %v3951, %v3950
        %v3953 = vrot.slane %v3838, 4
        %v3954 = vsel %vm3852, %v3953, %v3952
        %v3955 = vrot.slane %v3839, 3
        %v3956 = vsel %vm3855, %v3955, %v3954
        %v3957 = vrot.slane %v3840, 2
        %v3958 = vsel %vm3858, %v3957, %v3956
        %v3959 = vrot.slane %v3841, 1
        %v3960 = vsel %vm3861, %v3959, %v3958
        %v3961 = vpack.c.b16 %v3876, %v3862
        %v3962 = vpack.c.b16 %v3904, %v3890
        %v3963 = vpack.c.b16 %v3932, %v3918
        %v3964 = vpack.c.b16 %v3960, %v3946
        %v3969 = vunpack.c.l.b16 %v3703
        %v3970 = vunpack.c.l.b16 %v3704
        %v3971 = vunpack.c.l.b16 %v3705
        %v3972 = vunpack.c.l.b16 %v3706
        %v3973 = vpack.c.b16 %v3970, %v3969
        %v3974 = vpack.c.b16 %v3972, %v3971
        %v3978 = vsel %vm725, %v3961, 0
        %v3981 = vsel %vm725, %v3962, 0
        %v3984 = vsel %vm725, %v3963, 0
        %v3987 = vsel %vm725, %v3964, 0
        %3989 = vmatprep.subr.bf16.mxu0 0
        %3990 = vmatpush1.bf16.msra.mxu0 %v3973
        %3991 = vmatprep.subr.bf16.mxu0 0
        %3992 = vmatpush1.bf16.msra.mxu0 %v3974
        %3993 = vmatprep.subr.bf16.mxu0 0
        %3994 = vmatpush1.bf16.msra.mxu0 0
        %3995 = vmatprep.subr.bf16.mxu0 0
        %3996 = vmatpush1.bf16.msra.mxu0 0
        %3997 = vmatprep.subr.bf16.mxu0 0
        %3998 = vmatpush1.bf16.msra.mxu0 0
        %3999 = vmatprep.subr.bf16.mxu0 0
        %4000 = vmatpush1.bf16.msra.mxu0 0
        %4001 = vmatprep.subr.bf16.mxu0 0
        %4002 = vmatpush1.bf16.msra.mxu0 0
        %4003 = vmatprep.subr.bf16.mxu0 0
        %4004 = vmatpush1.bf16.msra.mxu0 0
        %4005 = vmatprep.subr.bf16.mxu0 0
        %4006 = vmatpush1.bf16.msra.mxu0 0
        %4007 = vmatprep.subr.bf16.mxu0 0
        %4008 = vmatpush1.bf16.msra.mxu0 0
        %4009 = vmatprep.subr.bf16.mxu0 0
        %4010 = vmatpush1.bf16.msra.mxu0 0
        %4011 = vmatprep.subr.bf16.mxu0 0
        %4012 = vmatpush1.bf16.msra.mxu0 0
        %4013 = vmatprep.subr.bf16.mxu0 0
        %4014 = vmatpush1.bf16.msra.mxu0 0
        %4015 = vmatprep.subr.bf16.mxu0 0
        %4016 = vmatpush1.bf16.msra.mxu0 0
        %4017 = vmatprep.subr.bf16.mxu0 0
        %4018 = vmatpush1.bf16.msra.mxu0 0
        %4019 = vmatprep.subr.bf16.mxu0 0
        %4020 = vmatpush1.bf16.msra.mxu0 0
        %4021 = vmatprep.mubr.bf16.mxu0 0
        %4022 = vmatmul.mubr.bf16.gmra.mrb[0].mxu0 %v3978
        %v4023 = vpop.f32.mrb[0].mxu0
        %v4024 = vadd.f32 %v3712, %v4023
        %v4025 = vpop.f32.mrb[0].mxu0
        %v4026 = vpop.f32.mrb[0].mxu0
        %v4027 = vadd.f32 %v3712, %v4026
        %v4028 = vpop.f32.mrb[0].mxu0
        %4029 = vmatprep.mubr.bf16.mxu0 0
        %4030 = vmatmul.mubr.bf16.gmra.mrb[0].mxu0 %v3981
        %v4031 = vpop.f32.mrb[0].mxu0
        %v4032 = vadd.f32 %v3712, %v4031
        %v4033 = vpop.f32.mrb[0].mxu0
        %v4034 = vpop.f32.mrb[0].mxu0
        %v4035 = vadd.f32 %v3712, %v4034
        %v4036 = vpop.f32.mrb[0].mxu0
        %4037 = vmatprep.mubr.bf16.mxu0 0
        %4038 = vmatmul.mubr.bf16.gmra.mrb[0].mxu0 %v3984
        %v4039 = vpop.f32.mrb[0].mxu0
        %v4040 = vadd.f32 %v3712, %v4039
        %v4041 = vpop.f32.mrb[0].mxu0
        %v4042 = vpop.f32.mrb[0].mxu0
        %v4043 = vadd.f32 %v3712, %v4042
        %v4044 = vpop.f32.mrb[0].mxu0
        %4045 = vmatprep.mubr.bf16.mxu0 0
        %4046 = vmatmul.mubr.bf16.gmra.mrb[0].mxu0 %v3987
        %v4047 = vpop.f32.mrb[0].mxu0
        %v4048 = vadd.f32 %v3712, %v4047
        %v4049 = vpop.f32.mrb[0].mxu0
        %v4050 = vpop.f32.mrb[0].mxu0
        %v4051 = vadd.f32 %v3712, %v4050
        %v4052 = vpop.f32.mrb[0].mxu0
        %4053 = vdwg.mxu0
        %v4055 = vunpack.c.l.s4 1966171168
        %v4056 = vunpack.c.0.s8 %v4055
        %v4057 = vlaneseq
        %v4058 = vshrl.u32 %v4057, 7
        %v4059 = vsub.s32 %v4056, %v4058
        %v4060 = vrot.slane %v332, %v4059
        %v4061 = vcombine.high %v4060, %v4060
        %v4063 = vunpack.c.l.s4 1966171168
        %v4064 = vunpack.c.0.s8 %v4063
        %v4065 = vlaneseq
        %v4066 = vshrl.u32 %v4065, 7
        %v4067 = vsub.s32 %v4064, %v4066
        %v4068 = vrot.slane %v4060, %v4067
        %v4070 = vunpack.c.l.s4 1966171168
        %v4071 = vunpack.c.0.s8 %v4070
        %v4072 = vlaneseq
        %v4073 = vshrl.u32 %v4072, 7
        %v4074 = vsub.s32 %v4071, %v4073
        %v4075 = vrot.slane %v4061, %v4074
        %v4076 = vcombine.high %v4068, %v4068
        %v4077 = vcombine.high %v4075, %v4075
        %v4079 = vunpack.c.l.s4 1966171168
        %v4080 = vunpack.c.0.s8 %v4079
        %v4081 = vlaneseq
        %v4082 = vshrl.u32 %v4081, 7
        %v4083 = vsub.s32 %v4080, %v4082
        %v4084 = vrot.slane %v333, %v4083
        %v4085 = vcombine.high %v4084, %v4084
        %v4087 = vunpack.c.l.s4 1966171168
        %v4088 = vunpack.c.0.s8 %v4087
        %v4089 = vlaneseq
        %v4090 = vshrl.u32 %v4089, 7
        %v4091 = vsub.s32 %v4088, %v4090
        %v4092 = vrot.slane %v4084, %v4091
        %v4094 = vunpack.c.l.s4 1966171168
        %v4095 = vunpack.c.0.s8 %v4094
        %v4096 = vlaneseq
        %v4097 = vshrl.u32 %v4096, 7
        %v4098 = vsub.s32 %v4095, %v4097
        %v4099 = vrot.slane %v4085, %v4098
        %v4100 = vcombine.high %v4092, %v4092
        %v4101 = vcombine.high %v4099, %v4099
        %v4103 = vunpack.c.l.s4 1966171168
        %v4104 = vunpack.c.0.s8 %v4103
        %v4105 = vlaneseq
        %v4106 = vshrl.u32 %v4105, 7
        %v4107 = vsub.s32 %v4104, %v4106
        %v4108 = vrot.slane %v336, %v4107
        %v4109 = vcombine.high %v4108, %v4108
        %v4111 = vunpack.c.l.s4 1966171168
        %v4112 = vunpack.c.0.s8 %v4111
        %v4113 = vlaneseq
        %v4114 = vshrl.u32 %v4113, 7
        %v4115 = vsub.s32 %v4112, %v4114
        %v4116 = vrot.slane %v4108, %v4115
        %v4118 = vunpack.c.l.s4 1966171168
        %v4119 = vunpack.c.0.s8 %v4118
        %v4120 = vlaneseq
        %v4121 = vshrl.u32 %v4120, 7
        %v4122 = vsub.s32 %v4119, %v4121
        %v4123 = vrot.slane %v4109, %v4122
        %v4124 = vcombine.high %v4116, %v4116
        %v4125 = vcombine.high %v4123, %v4123
        %v4127 = vunpack.c.l.s4 1966171168
        %v4128 = vunpack.c.0.s8 %v4127
        %v4129 = vlaneseq
        %v4130 = vshrl.u32 %v4129, 7
        %v4131 = vsub.s32 %v4128, %v4130
        %v4132 = vrot.slane %v337, %v4131
        %v4133 = vcombine.high %v4132, %v4132
        %v4135 = vunpack.c.l.s4 1966171168
        %v4136 = vunpack.c.0.s8 %v4135
        %v4137 = vlaneseq
        %v4138 = vshrl.u32 %v4137, 7
        %v4139 = vsub.s32 %v4136, %v4138
        %v4140 = vrot.slane %v4132, %v4139
        %v4142 = vunpack.c.l.s4 1966171168
        %v4143 = vunpack.c.0.s8 %v4142
        %v4144 = vlaneseq
        %v4145 = vshrl.u32 %v4144, 7
        %v4146 = vsub.s32 %v4143, %v4145
        %v4147 = vrot.slane %v4133, %v4146
        %v4148 = vcombine.high %v4140, %v4140
        %v4149 = vcombine.high %v4147, %v4147
        %v4151 = vunpack.c.l.s4 1966171168
        %v4152 = vunpack.c.0.s8 %v4151
        %v4153 = vlaneseq
        %v4154 = vshrl.u32 %v4153, 7
        %v4155 = vsub.s32 %v4152, %v4154
        %v4156 = vrot.slane %v340, %v4155
        %v4157 = vcombine.high %v4156, %v4156
        %v4159 = vunpack.c.l.s4 1966171168
        %v4160 = vunpack.c.0.s8 %v4159
        %v4161 = vlaneseq
        %v4162 = vshrl.u32 %v4161, 7
        %v4163 = vsub.s32 %v4160, %v4162
        %v4164 = vrot.slane %v4156, %v4163
        %v4166 = vunpack.c.l.s4 1966171168
        %v4167 = vunpack.c.0.s8 %v4166
        %v4168 = vlaneseq
        %v4169 = vshrl.u32 %v4168, 7
        %v4170 = vsub.s32 %v4167, %v4169
        %v4171 = vrot.slane %v4157, %v4170
        %v4172 = vcombine.high %v4164, %v4164
        %v4173 = vcombine.high %v4171, %v4171
        %v4175 = vunpack.c.l.s4 1966171168
        %v4176 = vunpack.c.0.s8 %v4175
        %v4177 = vlaneseq
        %v4178 = vshrl.u32 %v4177, 7
        %v4179 = vsub.s32 %v4176, %v4178
        %v4180 = vrot.slane %v341, %v4179
        %v4181 = vcombine.high %v4180, %v4180
        %v4183 = vunpack.c.l.s4 1966171168
        %v4184 = vunpack.c.0.s8 %v4183
        %v4185 = vlaneseq
        %v4186 = vshrl.u32 %v4185, 7
        %v4187 = vsub.s32 %v4184, %v4186
        %v4188 = vrot.slane %v4180, %v4187
        %v4190 = vunpack.c.l.s4 1966171168
        %v4191 = vunpack.c.0.s8 %v4190
        %v4192 = vlaneseq
        %v4193 = vshrl.u32 %v4192, 7
        %v4194 = vsub.s32 %v4191, %v4193
        %v4195 = vrot.slane %v4181, %v4194
        %v4196 = vcombine.high %v4188, %v4188
        %v4197 = vcombine.high %v4195, %v4195
        %v4199 = vunpack.c.l.s4 1966171168
        %v4200 = vunpack.c.0.s8 %v4199
        %v4201 = vlaneseq
        %v4202 = vshrl.u32 %v4201, 7
        %v4203 = vsub.s32 %v4200, %v4202
        %v4204 = vrot.slane %v344, %v4203
        %v4205 = vcombine.high %v4204, %v4204
        %v4207 = vunpack.c.l.s4 1966171168
        %v4208 = vunpack.c.0.s8 %v4207
        %v4209 = vlaneseq
        %v4210 = vshrl.u32 %v4209, 7
        %v4211 = vsub.s32 %v4208, %v4210
        %v4212 = vrot.slane %v4204, %v4211
        %v4214 = vunpack.c.l.s4 1966171168
        %v4215 = vunpack.c.0.s8 %v4214
        %v4216 = vlaneseq
        %v4217 = vshrl.u32 %v4216, 7
        %v4218 = vsub.s32 %v4215, %v4217
        %v4219 = vrot.slane %v4205, %v4218
        %v4220 = vcombine.high %v4212, %v4212
        %v4221 = vcombine.high %v4219, %v4219
        %v4223 = vunpack.c.l.s4 1966171168
        %v4224 = vunpack.c.0.s8 %v4223
        %v4225 = vlaneseq
        %v4226 = vshrl.u32 %v4225, 7
        %v4227 = vsub.s32 %v4224, %v4226
        %v4228 = vrot.slane %v345, %v4227
        %v4229 = vcombine.high %v4228, %v4228
        %v4231 = vunpack.c.l.s4 1966171168
        %v4232 = vunpack.c.0.s8 %v4231
        %v4233 = vlaneseq
        %v4234 = vshrl.u32 %v4233, 7
        %v4235 = vsub.s32 %v4232, %v4234
        %v4236 = vrot.slane %v4228, %v4235
        %v4238 = vunpack.c.l.s4 1966171168
        %v4239 = vunpack.c.0.s8 %v4238
        %v4240 = vlaneseq
        %v4241 = vshrl.u32 %v4240, 7
        %v4242 = vsub.s32 %v4239, %v4241
        %v4243 = vrot.slane %v4229, %v4242
        %v4244 = vcombine.high %v4236, %v4236
        %v4245 = vcombine.high %v4243, %v4243
        %v4247 = vunpack.c.l.s4 1966171168
        %v4248 = vunpack.c.0.s8 %v4247
        %v4249 = vlaneseq
        %v4250 = vshrl.u32 %v4249, 7
        %v4251 = vsub.s32 %v4248, %v4250
        %v4252 = vrot.slane %v348, %v4251
        %v4253 = vcombine.high %v4252, %v4252
        %v4255 = vunpack.c.l.s4 1966171168
        %v4256 = vunpack.c.0.s8 %v4255
        %v4257 = vlaneseq
        %v4258 = vshrl.u32 %v4257, 7
        %v4259 = vsub.s32 %v4256, %v4258
        %v4260 = vrot.slane %v4252, %v4259
        %v4262 = vunpack.c.l.s4 1966171168
        %v4263 = vunpack.c.0.s8 %v4262
        %v4264 = vlaneseq
        %v4265 = vshrl.u32 %v4264, 7
        %v4266 = vsub.s32 %v4263, %v4265
        %v4267 = vrot.slane %v4253, %v4266
        %v4268 = vcombine.high %v4260, %v4260
        %v4269 = vcombine.high %v4267, %v4267
        %v4271 = vunpack.c.l.s4 1966171168
        %v4272 = vunpack.c.0.s8 %v4271
        %v4273 = vlaneseq
        %v4274 = vshrl.u32 %v4273, 7
        %v4275 = vsub.s32 %v4272, %v4274
        %v4276 = vrot.slane %v349, %v4275
        %v4277 = vcombine.high %v4276, %v4276
        %v4279 = vunpack.c.l.s4 1966171168
        %v4280 = vunpack.c.0.s8 %v4279
        %v4281 = vlaneseq
        %v4282 = vshrl.u32 %v4281, 7
        %v4283 = vsub.s32 %v4280, %v4282
        %v4284 = vrot.slane %v4276, %v4283
        %v4286 = vunpack.c.l.s4 1966171168
        %v4287 = vunpack.c.0.s8 %v4286
        %v4288 = vlaneseq
        %v4289 = vshrl.u32 %v4288, 7
        %v4290 = vsub.s32 %v4287, %v4289
        %v4291 = vrot.slane %v4277, %v4290
        %v4292 = vcombine.high %v4284, %v4284
        %v4293 = vcombine.high %v4291, %v4291
        %v4295 = vunpack.c.l.s4 1966171168
        %v4296 = vunpack.c.0.s8 %v4295
        %v4297 = vlaneseq
        %v4298 = vshrl.u32 %v4297, 7
        %v4299 = vsub.s32 %v4296, %v4298
        %v4300 = vrot.slane %v352, %v4299
        %v4301 = vcombine.high %v4300, %v4300
        %v4303 = vunpack.c.l.s4 1966171168
        %v4304 = vunpack.c.0.s8 %v4303
        %v4305 = vlaneseq
        %v4306 = vshrl.u32 %v4305, 7
        %v4307 = vsub.s32 %v4304, %v4306
        %v4308 = vrot.slane %v4300, %v4307
        %v4310 = vunpack.c.l.s4 1966171168
        %v4311 = vunpack.c.0.s8 %v4310
        %v4312 = vlaneseq
        %v4313 = vshrl.u32 %v4312, 7
        %v4314 = vsub.s32 %v4311, %v4313
        %v4315 = vrot.slane %v4301, %v4314
        %v4316 = vcombine.high %v4308, %v4308
        %v4317 = vcombine.high %v4315, %v4315
        %v4319 = vunpack.c.l.s4 1966171168
        %v4320 = vunpack.c.0.s8 %v4319
        %v4321 = vlaneseq
        %v4322 = vshrl.u32 %v4321, 7
        %v4323 = vsub.s32 %v4320, %v4322
        %v4324 = vrot.slane %v353, %v4323
        %v4325 = vcombine.high %v4324, %v4324
        %v4327 = vunpack.c.l.s4 1966171168
        %v4328 = vunpack.c.0.s8 %v4327
        %v4329 = vlaneseq
        %v4330 = vshrl.u32 %v4329, 7
        %v4331 = vsub.s32 %v4328, %v4330
        %v4332 = vrot.slane %v4324, %v4331
        %v4334 = vunpack.c.l.s4 1966171168
        %v4335 = vunpack.c.0.s8 %v4334
        %v4336 = vlaneseq
        %v4337 = vshrl.u32 %v4336, 7
        %v4338 = vsub.s32 %v4335, %v4337
        %v4339 = vrot.slane %v4325, %v4338
        %v4340 = vcombine.high %v4332, %v4332
        %v4341 = vcombine.high %v4339, %v4339
        %v4343 = vunpack.c.l.s4 1966171168
        %v4344 = vunpack.c.0.s8 %v4343
        %v4345 = vlaneseq
        %v4346 = vshrl.u32 %v4345, 7
        %v4347 = vsub.s32 %v4344, %v4346
        %v4348 = vrot.slane %v356, %v4347
        %v4349 = vcombine.high %v4348, %v4348
        %v4351 = vunpack.c.l.s4 1966171168
        %v4352 = vunpack.c.0.s8 %v4351
        %v4353 = vlaneseq
        %v4354 = vshrl.u32 %v4353, 7
        %v4355 = vsub.s32 %v4352, %v4354
        %v4356 = vrot.slane %v4348, %v4355
        %v4358 = vunpack.c.l.s4 1966171168
        %v4359 = vunpack.c.0.s8 %v4358
        %v4360 = vlaneseq
        %v4361 = vshrl.u32 %v4360, 7
        %v4362 = vsub.s32 %v4359, %v4361
        %v4363 = vrot.slane %v4349, %v4362
        %v4364 = vcombine.high %v4356, %v4356
        %v4365 = vcombine.high %v4363, %v4363
        %v4367 = vunpack.c.l.s4 1966171168
        %v4368 = vunpack.c.0.s8 %v4367
        %v4369 = vlaneseq
        %v4370 = vshrl.u32 %v4369, 7
        %v4371 = vsub.s32 %v4368, %v4370
        %v4372 = vrot.slane %v357, %v4371
        %v4373 = vcombine.high %v4372, %v4372
        %v4375 = vunpack.c.l.s4 1966171168
        %v4376 = vunpack.c.0.s8 %v4375
        %v4377 = vlaneseq
        %v4378 = vshrl.u32 %v4377, 7
        %v4379 = vsub.s32 %v4376, %v4378
        %v4380 = vrot.slane %v4372, %v4379
        %v4382 = vunpack.c.l.s4 1966171168
        %v4383 = vunpack.c.0.s8 %v4382
        %v4384 = vlaneseq
        %v4385 = vshrl.u32 %v4384, 7
        %v4386 = vsub.s32 %v4383, %v4385
        %v4387 = vrot.slane %v4373, %v4386
        %v4388 = vcombine.high %v4380, %v4380
        %v4389 = vcombine.high %v4387, %v4387
        %v4391 = vunpack.c.l.s4 1966171168
        %v4392 = vunpack.c.0.s8 %v4391
        %v4393 = vlaneseq
        %v4394 = vshrl.u32 %v4393, 7
        %v4395 = vsub.s32 %v4392, %v4394
        %v4396 = vrot.slane %v360, %v4395
        %v4397 = vcombine.high %v4396, %v4396
        %v4399 = vunpack.c.l.s4 1966171168
        %v4400 = vunpack.c.0.s8 %v4399
        %v4401 = vlaneseq
        %v4402 = vshrl.u32 %v4401, 7
        %v4403 = vsub.s32 %v4400, %v4402
        %v4404 = vrot.slane %v4396, %v4403
        %v4406 = vunpack.c.l.s4 1966171168
        %v4407 = vunpack.c.0.s8 %v4406
        %v4408 = vlaneseq
        %v4409 = vshrl.u32 %v4408, 7
        %v4410 = vsub.s32 %v4407, %v4409
        %v4411 = vrot.slane %v4397, %v4410
        %v4412 = vcombine.high %v4404, %v4404
        %v4413 = vcombine.high %v4411, %v4411
        %v4415 = vunpack.c.l.s4 1966171168
        %v4416 = vunpack.c.0.s8 %v4415
        %v4417 = vlaneseq
        %v4418 = vshrl.u32 %v4417, 7
        %v4419 = vsub.s32 %v4416, %v4418
        %v4420 = vrot.slane %v361, %v4419
        %v4421 = vcombine.high %v4420, %v4420
        %v4423 = vunpack.c.l.s4 1966171168
        %v4424 = vunpack.c.0.s8 %v4423
        %v4425 = vlaneseq
        %v4426 = vshrl.u32 %v4425, 7
        %v4427 = vsub.s32 %v4424, %v4426
        %v4428 = vrot.slane %v4420, %v4427
        %v4430 = vunpack.c.l.s4 1966171168
        %v4431 = vunpack.c.0.s8 %v4430
        %v4432 = vlaneseq
        %v4433 = vshrl.u32 %v4432, 7
        %v4434 = vsub.s32 %v4431, %v4433
        %v4435 = vrot.slane %v4421, %v4434
        %v4436 = vcombine.high %v4428, %v4428
        %v4437 = vcombine.high %v4435, %v4435
        %v4438 = vld [vmem:[%s7] sm:$0xf]
        %v4439 = vld [vmem:[%s7 + $0x4] sm:$0xf]
        %v4440 = vld [vmem:[%s7 + $0x8] sm:$0xf]
        %v4441 = vld [vmem:[%s7 + $0xc] sm:$0xf]
        %v4442 = vld [vmem:[%s7 + $0x10] sm:$0xf]
        %v4443 = vld [vmem:[%s7 + $0x14] sm:$0xf]
        %v4444 = vld [vmem:[%s7 + $0x18] sm:$0xf]
        %v4445 = vld [vmem:[%s7 + $0x1c] sm:$0xf]
        %v4447 = vunpack.c.l.s4 1966171168
        %v4448 = vunpack.c.0.s8 %v4447
        %v4449 = vlaneseq
        %v4450 = vshrl.u32 %v4449, 7
        %v4451 = vsub.s32 %v4448, %v4450
        %v4452 = vrot.slane %v4068, %v4451
        %v4454 = vunpack.c.l.s4 1966171168
        %v4455 = vunpack.c.0.s8 %v4454
        %v4456 = vlaneseq
        %v4457 = vshrl.u32 %v4456, 7
        %v4458 = vsub.s32 %v4455, %v4457
        %v4459 = vrot.slane %v4452, %v4458
        %v4461 = vunpack.c.l.s4 1966171168
        %v4462 = vunpack.c.0.s8 %v4461
        %v4463 = vlaneseq
        %v4464 = vshrl.u32 %v4463, 7
        %v4465 = vsub.s32 %v4462, %v4464
        %v4466 = vrot.slane %v4075, %v4465
        %v4468 = vunpack.c.l.s4 1966171168
        %v4469 = vunpack.c.0.s8 %v4468
        %v4470 = vlaneseq
        %v4471 = vshrl.u32 %v4470, 7
        %v4472 = vsub.s32 %v4469, %v4471
        %v4473 = vrot.slane %v4466, %v4472
        %v4475 = vunpack.c.l.s4 1966171168
        %v4476 = vunpack.c.0.s8 %v4475
        %v4477 = vlaneseq
        %v4478 = vshrl.u32 %v4477, 7
        %v4479 = vsub.s32 %v4476, %v4478
        %v4480 = vrot.slane %v4076, %v4479
        %v4482 = vunpack.c.l.s4 1966171168
        %v4483 = vunpack.c.0.s8 %v4482
        %v4484 = vlaneseq
        %v4485 = vshrl.u32 %v4484, 7
        %v4486 = vsub.s32 %v4483, %v4485
        %v4487 = vrot.slane %v4480, %v4486
        %v4489 = vunpack.c.l.s4 1966171168
        %v4490 = vunpack.c.0.s8 %v4489
        %v4491 = vlaneseq
        %v4492 = vshrl.u32 %v4491, 7
        %v4493 = vsub.s32 %v4490, %v4492
        %v4494 = vrot.slane %v4077, %v4493
        %v4496 = vunpack.c.l.s4 1966171168
        %v4497 = vunpack.c.0.s8 %v4496
        %v4498 = vlaneseq
        %v4499 = vshrl.u32 %v4498, 7
        %v4500 = vsub.s32 %v4497, %v4499
        %v4501 = vrot.slane %v4494, %v4500
        %v4503 = vunpack.c.l.s4 1966171168
        %v4504 = vunpack.c.0.s8 %v4503
        %v4505 = vlaneseq
        %v4506 = vshrl.u32 %v4505, 7
        %v4507 = vsub.s32 %v4504, %v4506
        %v4508 = vrot.slane %v4092, %v4507
        %v4510 = vunpack.c.l.s4 1966171168
        %v4511 = vunpack.c.0.s8 %v4510
        %v4512 = vlaneseq
        %v4513 = vshrl.u32 %v4512, 7
        %v4514 = vsub.s32 %v4511, %v4513
        %v4515 = vrot.slane %v4508, %v4514
        %v4517 = vunpack.c.l.s4 1966171168
        %v4518 = vunpack.c.0.s8 %v4517
        %v4519 = vlaneseq
        %v4520 = vshrl.u32 %v4519, 7
        %v4521 = vsub.s32 %v4518, %v4520
        %v4522 = vrot.slane %v4099, %v4521
        %v4524 = vunpack.c.l.s4 1966171168
        %v4525 = vunpack.c.0.s8 %v4524
        %v4526 = vlaneseq
        %v4527 = vshrl.u32 %v4526, 7
        %v4528 = vsub.s32 %v4525, %v4527
        %v4529 = vrot.slane %v4522, %v4528
        %v4531 = vunpack.c.l.s4 1966171168
        %v4532 = vunpack.c.0.s8 %v4531
        %v4533 = vlaneseq
        %v4534 = vshrl.u32 %v4533, 7
        %v4535 = vsub.s32 %v4532, %v4534
        %v4536 = vrot.slane %v4100, %v4535
        %v4538 = vunpack.c.l.s4 1966171168
        %v4539 = vunpack.c.0.s8 %v4538
        %v4540 = vlaneseq
        %v4541 = vshrl.u32 %v4540, 7
        %v4542 = vsub.s32 %v4539, %v4541
        %v4543 = vrot.slane %v4536, %v4542
        %v4545 = vunpack.c.l.s4 1966171168
        %v4546 = vunpack.c.0.s8 %v4545
        %v4547 = vlaneseq
        %v4548 = vshrl.u32 %v4547, 7
        %v4549 = vsub.s32 %v4546, %v4548
        %v4550 = vrot.slane %v4101, %v4549
        %v4552 = vunpack.c.l.s4 1966171168
        %v4553 = vunpack.c.0.s8 %v4552
        %v4554 = vlaneseq
        %v4555 = vshrl.u32 %v4554, 7
        %v4556 = vsub.s32 %v4553, %v4555
        %v4557 = vrot.slane %v4550, %v4556
        %v4559 = vunpack.c.l.s4 1966171168
        %v4560 = vunpack.c.0.s8 %v4559
        %v4561 = vlaneseq
        %v4562 = vshrl.u32 %v4561, 7
        %v4563 = vsub.s32 %v4560, %v4562
        %v4564 = vrot.slane %v4116, %v4563
        %v4566 = vunpack.c.l.s4 1966171168
        %v4567 = vunpack.c.0.s8 %v4566
        %v4568 = vlaneseq
        %v4569 = vshrl.u32 %v4568, 7
        %v4570 = vsub.s32 %v4567, %v4569
        %v4571 = vrot.slane %v4564, %v4570
        %v4573 = vunpack.c.l.s4 1966171168
        %v4574 = vunpack.c.0.s8 %v4573
        %v4575 = vlaneseq
        %v4576 = vshrl.u32 %v4575, 7
        %v4577 = vsub.s32 %v4574, %v4576
        %v4578 = vrot.slane %v4123, %v4577
        %v4580 = vunpack.c.l.s4 1966171168
        %v4581 = vunpack.c.0.s8 %v4580
        %v4582 = vlaneseq
        %v4583 = vshrl.u32 %v4582, 7
        %v4584 = vsub.s32 %v4581, %v4583
        %v4585 = vrot.slane %v4578, %v4584
        %v4587 = vunpack.c.l.s4 1966171168
        %v4588 = vunpack.c.0.s8 %v4587
        %v4589 = vlaneseq
        %v4590 = vshrl.u32 %v4589, 7
        %v4591 = vsub.s32 %v4588, %v4590
        %v4592 = vrot.slane %v4124, %v4591
        %v4594 = vunpack.c.l.s4 1966171168
        %v4595 = vunpack.c.0.s8 %v4594
        %v4596 = vlaneseq
        %v4597 = vshrl.u32 %v4596, 7
        %v4598 = vsub.s32 %v4595, %v4597
        %v4599 = vrot.slane %v4592, %v4598
        %v4601 = vunpack.c.l.s4 1966171168
        %v4602 = vunpack.c.0.s8 %v4601
        %v4603 = vlaneseq
        %v4604 = vshrl.u32 %v4603, 7
        %v4605 = vsub.s32 %v4602, %v4604
        %v4606 = vrot.slane %v4125, %v4605
        %v4608 = vunpack.c.l.s4 1966171168
        %v4609 = vunpack.c.0.s8 %v4608
        %v4610 = vlaneseq
        %v4611 = vshrl.u32 %v4610, 7
        %v4612 = vsub.s32 %v4609, %v4611
        %v4613 = vrot.slane %v4606, %v4612
        %v4615 = vunpack.c.l.s4 1966171168
        %v4616 = vunpack.c.0.s8 %v4615
        %v4617 = vlaneseq
        %v4618 = vshrl.u32 %v4617, 7
        %v4619 = vsub.s32 %v4616, %v4618
        %v4620 = vrot.slane %v4140, %v4619
        %v4622 = vunpack.c.l.s4 1966171168
        %v4623 = vunpack.c.0.s8 %v4622
        %v4624 = vlaneseq
        %v4625 = vshrl.u32 %v4624, 7
        %v4626 = vsub.s32 %v4623, %v4625
        %v4627 = vrot.slane %v4620, %v4626
        %v4629 = vunpack.c.l.s4 1966171168
        %v4630 = vunpack.c.0.s8 %v4629
        %v4631 = vlaneseq
        %v4632 = vshrl.u32 %v4631, 7
        %v4633 = vsub.s32 %v4630, %v4632
        %v4634 = vrot.slane %v4147, %v4633
        %v4636 = vunpack.c.l.s4 1966171168
        %v4637 = vunpack.c.0.s8 %v4636
        %v4638 = vlaneseq
        %v4639 = vshrl.u32 %v4638, 7
        %v4640 = vsub.s32 %v4637, %v4639
        %v4641 = vrot.slane %v4634, %v4640
        %v4643 = vunpack.c.l.s4 1966171168
        %v4644 = vunpack.c.0.s8 %v4643
        %v4645 = vlaneseq
        %v4646 = vshrl.u32 %v4645, 7
        %v4647 = vsub.s32 %v4644, %v4646
        %v4648 = vrot.slane %v4148, %v4647
        %v4650 = vunpack.c.l.s4 1966171168
        %v4651 = vunpack.c.0.s8 %v4650
        %v4652 = vlaneseq
        %v4653 = vshrl.u32 %v4652, 7
        %v4654 = vsub.s32 %v4651, %v4653
        %v4655 = vrot.slane %v4648, %v4654
        %v4657 = vunpack.c.l.s4 1966171168
        %v4658 = vunpack.c.0.s8 %v4657
        %v4659 = vlaneseq
        %v4660 = vshrl.u32 %v4659, 7
        %v4661 = vsub.s32 %v4658, %v4660
        %v4662 = vrot.slane %v4149, %v4661
        %v4664 = vunpack.c.l.s4 1966171168
        %v4665 = vunpack.c.0.s8 %v4664
        %v4666 = vlaneseq
        %v4667 = vshrl.u32 %v4666, 7
        %v4668 = vsub.s32 %v4665, %v4667
        %v4669 = vrot.slane %v4662, %v4668
        %v4671 = vunpack.c.l.s4 1966171168
        %v4672 = vunpack.c.0.s8 %v4671
        %v4673 = vlaneseq
        %v4674 = vshrl.u32 %v4673, 7
        %v4675 = vsub.s32 %v4672, %v4674
        %v4676 = vrot.slane %v4164, %v4675
        %v4678 = vunpack.c.l.s4 1966171168
        %v4679 = vunpack.c.0.s8 %v4678
        %v4680 = vlaneseq
        %v4681 = vshrl.u32 %v4680, 7
        %v4682 = vsub.s32 %v4679, %v4681
        %v4683 = vrot.slane %v4676, %v4682
        %v4685 = vunpack.c.l.s4 1966171168
        %v4686 = vunpack.c.0.s8 %v4685
        %v4687 = vlaneseq
        %v4688 = vshrl.u32 %v4687, 7
        %v4689 = vsub.s32 %v4686, %v4688
        %v4690 = vrot.slane %v4171, %v4689
        %v4692 = vunpack.c.l.s4 1966171168
        %v4693 = vunpack.c.0.s8 %v4692
        %v4694 = vlaneseq
        %v4695 = vshrl.u32 %v4694, 7
        %v4696 = vsub.s32 %v4693, %v4695
        %v4697 = vrot.slane %v4690, %v4696
        %v4699 = vunpack.c.l.s4 1966171168
        %v4700 = vunpack.c.0.s8 %v4699
        %v4701 = vlaneseq
        %v4702 = vshrl.u32 %v4701, 7
        %v4703 = vsub.s32 %v4700, %v4702
        %v4704 = vrot.slane %v4172, %v4703
        %v4706 = vunpack.c.l.s4 1966171168
        %v4707 = vunpack.c.0.s8 %v4706
        %v4708 = vlaneseq
        %v4709 = vshrl.u32 %v4708, 7
        %v4710 = vsub.s32 %v4707, %v4709
        %v4711 = vrot.slane %v4704, %v4710
        %v4713 = vunpack.c.l.s4 1966171168
        %v4714 = vunpack.c.0.s8 %v4713
        %v4715 = vlaneseq
        %v4716 = vshrl.u32 %v4715, 7
        %v4717 = vsub.s32 %v4714, %v4716
        %v4718 = vrot.slane %v4173, %v4717
        %v4720 = vunpack.c.l.s4 1966171168
        %v4721 = vunpack.c.0.s8 %v4720
        %v4722 = vlaneseq
        %v4723 = vshrl.u32 %v4722, 7
        %v4724 = vsub.s32 %v4721, %v4723
        %v4725 = vrot.slane %v4718, %v4724
        %v4727 = vunpack.c.l.s4 1966171168
        %v4728 = vunpack.c.0.s8 %v4727
        %v4729 = vlaneseq
        %v4730 = vshrl.u32 %v4729, 7
        %v4731 = vsub.s32 %v4728, %v4730
        %v4732 = vrot.slane %v4188, %v4731
        %v4734 = vunpack.c.l.s4 1966171168
        %v4735 = vunpack.c.0.s8 %v4734
        %v4736 = vlaneseq
        %v4737 = vshrl.u32 %v4736, 7
        %v4738 = vsub.s32 %v4735, %v4737
        %v4739 = vrot.slane %v4732, %v4738
        %v4741 = vunpack.c.l.s4 1966171168
        %v4742 = vunpack.c.0.s8 %v4741
        %v4743 = vlaneseq
        %v4744 = vshrl.u32 %v4743, 7
        %v4745 = vsub.s32 %v4742, %v4744
        %v4746 = vrot.slane %v4195, %v4745
        %v4748 = vunpack.c.l.s4 1966171168
        %v4749 = vunpack.c.0.s8 %v4748
        %v4750 = vlaneseq
        %v4751 = vshrl.u32 %v4750, 7
        %v4752 = vsub.s32 %v4749, %v4751
        %v4753 = vrot.slane %v4746, %v4752
        %v4755 = vunpack.c.l.s4 1966171168
        %v4756 = vunpack.c.0.s8 %v4755
        %v4757 = vlaneseq
        %v4758 = vshrl.u32 %v4757, 7
        %v4759 = vsub.s32 %v4756, %v4758
        %v4760 = vrot.slane %v4196, %v4759
        %v4762 = vunpack.c.l.s4 1966171168
        %v4763 = vunpack.c.0.s8 %v4762
        %v4764 = vlaneseq
        %v4765 = vshrl.u32 %v4764, 7
        %v4766 = vsub.s32 %v4763, %v4765
        %v4767 = vrot.slane %v4760, %v4766
        %v4769 = vunpack.c.l.s4 1966171168
        %v4770 = vunpack.c.0.s8 %v4769
        %v4771 = vlaneseq
        %v4772 = vshrl.u32 %v4771, 7
        %v4773 = vsub.s32 %v4770, %v4772
        %v4774 = vrot.slane %v4197, %v4773
        %v4776 = vunpack.c.l.s4 1966171168
        %v4777 = vunpack.c.0.s8 %v4776
        %v4778 = vlaneseq
        %v4779 = vshrl.u32 %v4778, 7
        %v4780 = vsub.s32 %v4777, %v4779
        %v4781 = vrot.slane %v4774, %v4780
        %v4783 = vunpack.c.l.s4 1966171168
        %v4784 = vunpack.c.0.s8 %v4783
        %v4785 = vlaneseq
        %v4786 = vshrl.u32 %v4785, 7
        %v4787 = vsub.s32 %v4784, %v4786
        %v4788 = vrot.slane %v4212, %v4787
        %v4790 = vunpack.c.l.s4 1966171168
        %v4791 = vunpack.c.0.s8 %v4790
        %v4792 = vlaneseq
        %v4793 = vshrl.u32 %v4792, 7
        %v4794 = vsub.s32 %v4791, %v4793
        %v4795 = vrot.slane %v4788, %v4794
        %v4797 = vunpack.c.l.s4 1966171168
        %v4798 = vunpack.c.0.s8 %v4797
        %v4799 = vlaneseq
        %v4800 = vshrl.u32 %v4799, 7
        %v4801 = vsub.s32 %v4798, %v4800
        %v4802 = vrot.slane %v4219, %v4801
        %v4804 = vunpack.c.l.s4 1966171168
        %v4805 = vunpack.c.0.s8 %v4804
        %v4806 = vlaneseq
        %v4807 = vshrl.u32 %v4806, 7
        %v4808 = vsub.s32 %v4805, %v4807
        %v4809 = vrot.slane %v4802, %v4808
        %v4811 = vunpack.c.l.s4 1966171168
        %v4812 = vunpack.c.0.s8 %v4811
        %v4813 = vlaneseq
        %v4814 = vshrl.u32 %v4813, 7
        %v4815 = vsub.s32 %v4812, %v4814
        %v4816 = vrot.slane %v4220, %v4815
        %v4818 = vunpack.c.l.s4 1966171168
        %v4819 = vunpack.c.0.s8 %v4818
        %v4820 = vlaneseq
        %v4821 = vshrl.u32 %v4820, 7
        %v4822 = vsub.s32 %v4819, %v4821
        %v4823 = vrot.slane %v4816, %v4822
        %v4825 = vunpack.c.l.s4 1966171168
        %v4826 = vunpack.c.0.s8 %v4825
        %v4827 = vlaneseq
        %v4828 = vshrl.u32 %v4827, 7
        %v4829 = vsub.s32 %v4826, %v4828
        %v4830 = vrot.slane %v4221, %v4829
        %v4832 = vunpack.c.l.s4 1966171168
        %v4833 = vunpack.c.0.s8 %v4832
        %v4834 = vlaneseq
        %v4835 = vshrl.u32 %v4834, 7
        %v4836 = vsub.s32 %v4833, %v4835
        %v4837 = vrot.slane %v4830, %v4836
        %v4839 = vunpack.c.l.s4 1966171168
        %v4840 = vunpack.c.0.s8 %v4839
        %v4841 = vlaneseq
        %v4842 = vshrl.u32 %v4841, 7
        %v4843 = vsub.s32 %v4840, %v4842
        %v4844 = vrot.slane %v4236, %v4843
        %v4846 = vunpack.c.l.s4 1966171168
        %v4847 = vunpack.c.0.s8 %v4846
        %v4848 = vlaneseq
        %v4849 = vshrl.u32 %v4848, 7
        %v4850 = vsub.s32 %v4847, %v4849
        %v4851 = vrot.slane %v4844, %v4850
        %v4853 = vunpack.c.l.s4 1966171168
        %v4854 = vunpack.c.0.s8 %v4853
        %v4855 = vlaneseq
        %v4856 = vshrl.u32 %v4855, 7
        %v4857 = vsub.s32 %v4854, %v4856
        %v4858 = vrot.slane %v4243, %v4857
        %v4860 = vunpack.c.l.s4 1966171168
        %v4861 = vunpack.c.0.s8 %v4860
        %v4862 = vlaneseq
        %v4863 = vshrl.u32 %v4862, 7
        %v4864 = vsub.s32 %v4861, %v4863
        %v4865 = vrot.slane %v4858, %v4864
        %v4867 = vunpack.c.l.s4 1966171168
        %v4868 = vunpack.c.0.s8 %v4867
        %v4869 = vlaneseq
        %v4870 = vshrl.u32 %v4869, 7
        %v4871 = vsub.s32 %v4868, %v4870
        %v4872 = vrot.slane %v4244, %v4871
        %v4874 = vunpack.c.l.s4 1966171168
        %v4875 = vunpack.c.0.s8 %v4874
        %v4876 = vlaneseq
        %v4877 = vshrl.u32 %v4876, 7
        %v4878 = vsub.s32 %v4875, %v4877
        %v4879 = vrot.slane %v4872, %v4878
        %v4881 = vunpack.c.l.s4 1966171168
        %v4882 = vunpack.c.0.s8 %v4881
        %v4883 = vlaneseq
        %v4884 = vshrl.u32 %v4883, 7
        %v4885 = vsub.s32 %v4882, %v4884
        %v4886 = vrot.slane %v4245, %v4885
        %v4888 = vunpack.c.l.s4 1966171168
        %v4889 = vunpack.c.0.s8 %v4888
        %v4890 = vlaneseq
        %v4891 = vshrl.u32 %v4890, 7
        %v4892 = vsub.s32 %v4889, %v4891
        %v4893 = vrot.slane %v4886, %v4892
        %v4895 = vunpack.c.l.s4 1966171168
        %v4896 = vunpack.c.0.s8 %v4895
        %v4897 = vlaneseq
        %v4898 = vshrl.u32 %v4897, 7
        %v4899 = vsub.s32 %v4896, %v4898
        %v4900 = vrot.slane %v4260, %v4899
        %v4902 = vunpack.c.l.s4 1966171168
        %v4903 = vunpack.c.0.s8 %v4902
        %v4904 = vlaneseq
        %v4905 = vshrl.u32 %v4904, 7
        %v4906 = vsub.s32 %v4903, %v4905
        %v4907 = vrot.slane %v4900, %v4906
        %v4909 = vunpack.c.l.s4 1966171168
        %v4910 = vunpack.c.0.s8 %v4909
        %v4911 = vlaneseq
        %v4912 = vshrl.u32 %v4911, 7
        %v4913 = vsub.s32 %v4910, %v4912
        %v4914 = vrot.slane %v4267, %v4913
        %v4916 = vunpack.c.l.s4 1966171168
        %v4917 = vunpack.c.0.s8 %v4916
        %v4918 = vlaneseq
        %v4919 = vshrl.u32 %v4918, 7
        %v4920 = vsub.s32 %v4917, %v4919
        %v4921 = vrot.slane %v4914, %v4920
        %v4923 = vunpack.c.l.s4 1966171168
        %v4924 = vunpack.c.0.s8 %v4923
        %v4925 = vlaneseq
        %v4926 = vshrl.u32 %v4925, 7
        %v4927 = vsub.s32 %v4924, %v4926
        %v4928 = vrot.slane %v4268, %v4927
        %v4930 = vunpack.c.l.s4 1966171168
        %v4931 = vunpack.c.0.s8 %v4930
        %v4932 = vlaneseq
        %v4933 = vshrl.u32 %v4932, 7
        %v4934 = vsub.s32 %v4931, %v4933
        %v4935 = vrot.slane %v4928, %v4934
        %v4937 = vunpack.c.l.s4 1966171168
        %v4938 = vunpack.c.0.s8 %v4937
        %v4939 = vlaneseq
        %v4940 = vshrl.u32 %v4939, 7
        %v4941 = vsub.s32 %v4938, %v4940
        %v4942 = vrot.slane %v4269, %v4941
        %v4944 = vunpack.c.l.s4 1966171168
        %v4945 = vunpack.c.0.s8 %v4944
        %v4946 = vlaneseq
        %v4947 = vshrl.u32 %v4946, 7
        %v4948 = vsub.s32 %v4945, %v4947
        %v4949 = vrot.slane %v4942, %v4948
        %v4951 = vunpack.c.l.s4 1966171168
        %v4952 = vunpack.c.0.s8 %v4951
        %v4953 = vlaneseq
        %v4954 = vshrl.u32 %v4953, 7
        %v4955 = vsub.s32 %v4952, %v4954
        %v4956 = vrot.slane %v4284, %v4955
        %v4958 = vunpack.c.l.s4 1966171168
        %v4959 = vunpack.c.0.s8 %v4958
        %v4960 = vlaneseq
        %v4961 = vshrl.u32 %v4960, 7
        %v4962 = vsub.s32 %v4959, %v4961
        %v4963 = vrot.slane %v4956, %v4962
        %v4965 = vunpack.c.l.s4 1966171168
        %v4966 = vunpack.c.0.s8 %v4965
        %v4967 = vlaneseq
        %v4968 = vshrl.u32 %v4967, 7
        %v4969 = vsub.s32 %v4966, %v4968
        %v4970 = vrot.slane %v4291, %v4969
        %v4972 = vunpack.c.l.s4 1966171168
        %v4973 = vunpack.c.0.s8 %v4972
        %v4974 = vlaneseq
        %v4975 = vshrl.u32 %v4974, 7
        %v4976 = vsub.s32 %v4973, %v4975
        %v4977 = vrot.slane %v4970, %v4976
        %v4979 = vunpack.c.l.s4 1966171168
        %v4980 = vunpack.c.0.s8 %v4979
        %v4981 = vlaneseq
        %v4982 = vshrl.u32 %v4981, 7
        %v4983 = vsub.s32 %v4980, %v4982
        %v4984 = vrot.slane %v4292, %v4983
        %v4986 = vunpack.c.l.s4 1966171168
        %v4987 = vunpack.c.0.s8 %v4986
        %v4988 = vlaneseq
        %v4989 = vshrl.u32 %v4988, 7
        %v4990 = vsub.s32 %v4987, %v4989
        %v4991 = vrot.slane %v4984, %v4990
        %v4993 = vunpack.c.l.s4 1966171168
        %v4994 = vunpack.c.0.s8 %v4993
        %v4995 = vlaneseq
        %v4996 = vshrl.u32 %v4995, 7
        %v4997 = vsub.s32 %v4994, %v4996
        %v4998 = vrot.slane %v4293, %v4997
        %v5000 = vunpack.c.l.s4 1966171168
        %v5001 = vunpack.c.0.s8 %v5000
        %v5002 = vlaneseq
        %v5003 = vshrl.u32 %v5002, 7
        %v5004 = vsub.s32 %v5001, %v5003
        %v5005 = vrot.slane %v4998, %v5004
        %v5007 = vunpack.c.l.s4 1966171168
        %v5008 = vunpack.c.0.s8 %v5007
        %v5009 = vlaneseq
        %v5010 = vshrl.u32 %v5009, 7
        %v5011 = vsub.s32 %v5008, %v5010
        %v5012 = vrot.slane %v4308, %v5011
        %v5014 = vunpack.c.l.s4 1966171168
        %v5015 = vunpack.c.0.s8 %v5014
        %v5016 = vlaneseq
        %v5017 = vshrl.u32 %v5016, 7
        %v5018 = vsub.s32 %v5015, %v5017
        %v5019 = vrot.slane %v5012, %v5018
        %v5021 = vunpack.c.l.s4 1966171168
        %v5022 = vunpack.c.0.s8 %v5021
        %v5023 = vlaneseq
        %v5024 = vshrl.u32 %v5023, 7
        %v5025 = vsub.s32 %v5022, %v5024
        %v5026 = vrot.slane %v4315, %v5025
        %v5028 = vunpack.c.l.s4 1966171168
        %v5029 = vunpack.c.0.s8 %v5028
        %v5030 = vlaneseq
        %v5031 = vshrl.u32 %v5030, 7
        %v5032 = vsub.s32 %v5029, %v5031
        %v5033 = vrot.slane %v5026, %v5032
        %v5035 = vunpack.c.l.s4 1966171168
        %v5036 = vunpack.c.0.s8 %v5035
        %v5037 = vlaneseq
        %v5038 = vshrl.u32 %v5037, 7
        %v5039 = vsub.s32 %v5036, %v5038
        %v5040 = vrot.slane %v4316, %v5039
        %v5042 = vunpack.c.l.s4 1966171168
        %v5043 = vunpack.c.0.s8 %v5042
        %v5044 = vlaneseq
        %v5045 = vshrl.u32 %v5044, 7
        %v5046 = vsub.s32 %v5043, %v5045
        %v5047 = vrot.slane %v5040, %v5046
        %v5049 = vunpack.c.l.s4 1966171168
        %v5050 = vunpack.c.0.s8 %v5049
        %v5051 = vlaneseq
        %v5052 = vshrl.u32 %v5051, 7
        %v5053 = vsub.s32 %v5050, %v5052
        %v5054 = vrot.slane %v4317, %v5053
        %v5056 = vunpack.c.l.s4 1966171168
        %v5057 = vunpack.c.0.s8 %v5056
        %v5058 = vlaneseq
        %v5059 = vshrl.u32 %v5058, 7
        %v5060 = vsub.s32 %v5057, %v5059
        %v5061 = vrot.slane %v5054, %v5060
        %v5063 = vunpack.c.l.s4 1966171168
        %v5064 = vunpack.c.0.s8 %v5063
        %v5065 = vlaneseq
        %v5066 = vshrl.u32 %v5065, 7
        %v5067 = vsub.s32 %v5064, %v5066
        %v5068 = vrot.slane %v4332, %v5067
        %v5070 = vunpack.c.l.s4 1966171168
        %v5071 = vunpack.c.0.s8 %v5070
        %v5072 = vlaneseq
        %v5073 = vshrl.u32 %v5072, 7
        %v5074 = vsub.s32 %v5071, %v5073
        %v5075 = vrot.slane %v5068, %v5074
        %v5077 = vunpack.c.l.s4 1966171168
        %v5078 = vunpack.c.0.s8 %v5077
        %v5079 = vlaneseq
        %v5080 = vshrl.u32 %v5079, 7
        %v5081 = vsub.s32 %v5078, %v5080
        %v5082 = vrot.slane %v4339, %v5081
        %v5084 = vunpack.c.l.s4 1966171168
        %v5085 = vunpack.c.0.s8 %v5084
        %v5086 = vlaneseq
        %v5087 = vshrl.u32 %v5086, 7
        %v5088 = vsub.s32 %v5085, %v5087
        %v5089 = vrot.slane %v5082, %v5088
        %v5091 = vunpack.c.l.s4 1966171168
        %v5092 = vunpack.c.0.s8 %v5091
        %v5093 = vlaneseq
        %v5094 = vshrl.u32 %v5093, 7
        %v5095 = vsub.s32 %v5092, %v5094
        %v5096 = vrot.slane %v4340, %v5095
        %v5098 = vunpack.c.l.s4 1966171168
        %v5099 = vunpack.c.0.s8 %v5098
        %v5100 = vlaneseq
        %v5101 = vshrl.u32 %v5100, 7
        %v5102 = vsub.s32 %v5099, %v5101
        %v5103 = vrot.slane %v5096, %v5102
        %v5105 = vunpack.c.l.s4 1966171168
        %v5106 = vunpack.c.0.s8 %v5105
        %v5107 = vlaneseq
        %v5108 = vshrl.u32 %v5107, 7
        %v5109 = vsub.s32 %v5106, %v5108
        %v5110 = vrot.slane %v4341, %v5109
        %v5112 = vunpack.c.l.s4 1966171168
        %v5113 = vunpack.c.0.s8 %v5112
        %v5114 = vlaneseq
        %v5115 = vshrl.u32 %v5114, 7
        %v5116 = vsub.s32 %v5113, %v5115
        %v5117 = vrot.slane %v5110, %v5116
        %v5119 = vunpack.c.l.s4 1966171168
        %v5120 = vunpack.c.0.s8 %v5119
        %v5121 = vlaneseq
        %v5122 = vshrl.u32 %v5121, 7
        %v5123 = vsub.s32 %v5120, %v5122
        %v5124 = vrot.slane %v4356, %v5123
        %v5126 = vunpack.c.l.s4 1966171168
        %v5127 = vunpack.c.0.s8 %v5126
        %v5128 = vlaneseq
        %v5129 = vshrl.u32 %v5128, 7
        %v5130 = vsub.s32 %v5127, %v5129
        %v5131 = vrot.slane %v5124, %v5130
        %v5133 = vunpack.c.l.s4 1966171168
        %v5134 = vunpack.c.0.s8 %v5133
        %v5135 = vlaneseq
        %v5136 = vshrl.u32 %v5135, 7
        %v5137 = vsub.s32 %v5134, %v5136
        %v5138 = vrot.slane %v4363, %v5137
        %v5140 = vunpack.c.l.s4 1966171168
        %v5141 = vunpack.c.0.s8 %v5140
        %v5142 = vlaneseq
        %v5143 = vshrl.u32 %v5142, 7
        %v5144 = vsub.s32 %v5141, %v5143
        %v5145 = vrot.slane %v5138, %v5144
        %v5147 = vunpack.c.l.s4 1966171168
        %v5148 = vunpack.c.0.s8 %v5147
        %v5149 = vlaneseq
        %v5150 = vshrl.u32 %v5149, 7
        %v5151 = vsub.s32 %v5148, %v5150
        %v5152 = vrot.slane %v4364, %v5151
        %v5154 = vunpack.c.l.s4 1966171168
        %v5155 = vunpack.c.0.s8 %v5154
        %v5156 = vlaneseq
        %v5157 = vshrl.u32 %v5156, 7
        %v5158 = vsub.s32 %v5155, %v5157
        %v5159 = vrot.slane %v5152, %v5158
        %v5161 = vunpack.c.l.s4 1966171168
        %v5162 = vunpack.c.0.s8 %v5161
        %v5163 = vlaneseq
        %v5164 = vshrl.u32 %v5163, 7
        %v5165 = vsub.s32 %v5162, %v5164
        %v5166 = vrot.slane %v4365, %v5165
        %v5168 = vunpack.c.l.s4 1966171168
        %v5169 = vunpack.c.0.s8 %v5168
        %v5170 = vlaneseq
        %v5171 = vshrl.u32 %v5170, 7
        %v5172 = vsub.s32 %v5169, %v5171
        %v5173 = vrot.slane %v5166, %v5172
        %v5175 = vunpack.c.l.s4 1966171168
        %v5176 = vunpack.c.0.s8 %v5175
        %v5177 = vlaneseq
        %v5178 = vshrl.u32 %v5177, 7
        %v5179 = vsub.s32 %v5176, %v5178
        %v5180 = vrot.slane %v4380, %v5179
        %v5182 = vunpack.c.l.s4 1966171168
        %v5183 = vunpack.c.0.s8 %v5182
        %v5184 = vlaneseq
        %v5185 = vshrl.u32 %v5184, 7
        %v5186 = vsub.s32 %v5183, %v5185
        %v5187 = vrot.slane %v5180, %v5186
        %v5189 = vunpack.c.l.s4 1966171168
        %v5190 = vunpack.c.0.s8 %v5189
        %v5191 = vlaneseq
        %v5192 = vshrl.u32 %v5191, 7
        %v5193 = vsub.s32 %v5190, %v5192
        %v5194 = vrot.slane %v4387, %v5193
        %v5196 = vunpack.c.l.s4 1966171168
        %v5197 = vunpack.c.0.s8 %v5196
        %v5198 = vlaneseq
        %v5199 = vshrl.u32 %v5198, 7
        %v5200 = vsub.s32 %v5197, %v5199
        %v5201 = vrot.slane %v5194, %v5200
        %v5203 = vunpack.c.l.s4 1966171168
        %v5204 = vunpack.c.0.s8 %v5203
        %v5205 = vlaneseq
        %v5206 = vshrl.u32 %v5205, 7
        %v5207 = vsub.s32 %v5204, %v5206
        %v5208 = vrot.slane %v4388, %v5207
        %v5210 = vunpack.c.l.s4 1966171168
        %v5211 = vunpack.c.0.s8 %v5210
        %v5212 = vlaneseq
        %v5213 = vshrl.u32 %v5212, 7
        %v5214 = vsub.s32 %v5211, %v5213
        %v5215 = vrot.slane %v5208, %v5214
        %v5217 = vunpack.c.l.s4 1966171168
        %v5218 = vunpack.c.0.s8 %v5217
        %v5219 = vlaneseq
        %v5220 = vshrl.u32 %v5219, 7
        %v5221 = vsub.s32 %v5218, %v5220
        %v5222 = vrot.slane %v4389, %v5221
        %v5224 = vunpack.c.l.s4 1966171168
        %v5225 = vunpack.c.0.s8 %v5224
        %v5226 = vlaneseq
        %v5227 = vshrl.u32 %v5226, 7
        %v5228 = vsub.s32 %v5225, %v5227
        %v5229 = vrot.slane %v5222, %v5228
        %v5231 = vunpack.c.l.s4 1966171168
        %v5232 = vunpack.c.0.s8 %v5231
        %v5233 = vlaneseq
        %v5234 = vshrl.u32 %v5233, 7
        %v5235 = vsub.s32 %v5232, %v5234
        %v5236 = vrot.slane %v4404, %v5235
        %v5238 = vunpack.c.l.s4 1966171168
        %v5239 = vunpack.c.0.s8 %v5238
        %v5240 = vlaneseq
        %v5241 = vshrl.u32 %v5240, 7
        %v5242 = vsub.s32 %v5239, %v5241
        %v5243 = vrot.slane %v5236, %v5242
        %v5245 = vunpack.c.l.s4 1966171168
        %v5246 = vunpack.c.0.s8 %v5245
        %v5247 = vlaneseq
        %v5248 = vshrl.u32 %v5247, 7
        %v5249 = vsub.s32 %v5246, %v5248
        %v5250 = vrot.slane %v4411, %v5249
        %v5252 = vunpack.c.l.s4 1966171168
        %v5253 = vunpack.c.0.s8 %v5252
        %v5254 = vlaneseq
        %v5255 = vshrl.u32 %v5254, 7
        %v5256 = vsub.s32 %v5253, %v5255
        %v5257 = vrot.slane %v5250, %v5256
        %v5259 = vunpack.c.l.s4 1966171168
        %v5260 = vunpack.c.0.s8 %v5259
        %v5261 = vlaneseq
        %v5262 = vshrl.u32 %v5261, 7
        %v5263 = vsub.s32 %v5260, %v5262
        %v5264 = vrot.slane %v4412, %v5263
        %v5266 = vunpack.c.l.s4 1966171168
        %v5267 = vunpack.c.0.s8 %v5266
        %v5268 = vlaneseq
        %v5269 = vshrl.u32 %v5268, 7
        %v5270 = vsub.s32 %v5267, %v5269
        %v5271 = vrot.slane %v5264, %v5270
        %v5273 = vunpack.c.l.s4 1966171168
        %v5274 = vunpack.c.0.s8 %v5273
        %v5275 = vlaneseq
        %v5276 = vshrl.u32 %v5275, 7
        %v5277 = vsub.s32 %v5274, %v5276
        %v5278 = vrot.slane %v4413, %v5277
        %v5280 = vunpack.c.l.s4 1966171168
        %v5281 = vunpack.c.0.s8 %v5280
        %v5282 = vlaneseq
        %v5283 = vshrl.u32 %v5282, 7
        %v5284 = vsub.s32 %v5281, %v5283
        %v5285 = vrot.slane %v5278, %v5284
        %v5287 = vunpack.c.l.s4 1966171168
        %v5288 = vunpack.c.0.s8 %v5287
        %v5289 = vlaneseq
        %v5290 = vshrl.u32 %v5289, 7
        %v5291 = vsub.s32 %v5288, %v5290
        %v5292 = vrot.slane %v4428, %v5291
        %v5294 = vunpack.c.l.s4 1966171168
        %v5295 = vunpack.c.0.s8 %v5294
        %v5296 = vlaneseq
        %v5297 = vshrl.u32 %v5296, 7
        %v5298 = vsub.s32 %v5295, %v5297
        %v5299 = vrot.slane %v5292, %v5298
        %v5301 = vunpack.c.l.s4 1966171168
        %v5302 = vunpack.c.0.s8 %v5301
        %v5303 = vlaneseq
        %v5304 = vshrl.u32 %v5303, 7
        %v5305 = vsub.s32 %v5302, %v5304
        %v5306 = vrot.slane %v4435, %v5305
        %v5308 = vunpack.c.l.s4 1966171168
        %v5309 = vunpack.c.0.s8 %v5308
        %v5310 = vlaneseq
        %v5311 = vshrl.u32 %v5310, 7
        %v5312 = vsub.s32 %v5309, %v5311
        %v5313 = vrot.slane %v5306, %v5312
        %v5315 = vunpack.c.l.s4 1966171168
        %v5316 = vunpack.c.0.s8 %v5315
        %v5317 = vlaneseq
        %v5318 = vshrl.u32 %v5317, 7
        %v5319 = vsub.s32 %v5316, %v5318
        %v5320 = vrot.slane %v4436, %v5319
        %v5322 = vunpack.c.l.s4 1966171168
        %v5323 = vunpack.c.0.s8 %v5322
        %v5324 = vlaneseq
        %v5325 = vshrl.u32 %v5324, 7
        %v5326 = vsub.s32 %v5323, %v5325
        %v5327 = vrot.slane %v5320, %v5326
        %v5329 = vunpack.c.l.s4 1966171168
        %v5330 = vunpack.c.0.s8 %v5329
        %v5331 = vlaneseq
        %v5332 = vshrl.u32 %v5331, 7
        %v5333 = vsub.s32 %v5330, %v5332
        %v5334 = vrot.slane %v4437, %v5333
        %v5336 = vunpack.c.l.s4 1966171168
        %v5337 = vunpack.c.0.s8 %v5336
        %v5338 = vlaneseq
        %v5339 = vshrl.u32 %v5338, 7
        %v5340 = vsub.s32 %v5337, %v5339
        %v5341 = vrot.slane %v5334, %v5340
        %v5342 = vunpack.c.l.b16 %v4459
        %v5343 = vunpack.c.l.b16 %v4473
        %v5344 = vunpack.c.l.b16 %v4487
        %v5345 = vunpack.c.l.b16 %v4501
        %v5346 = vunpack.c.l.b16 %v4515
        %v5347 = vunpack.c.l.b16 %v4529
        %v5348 = vunpack.c.l.b16 %v4543
        %v5349 = vunpack.c.l.b16 %v4557
        %v5350 = vunpack.c.l.b16 %v4571
        %v5351 = vunpack.c.l.b16 %v4585
        %v5352 = vunpack.c.l.b16 %v4599
        %v5353 = vunpack.c.l.b16 %v4613
        %v5354 = vunpack.c.l.b16 %v4627
        %v5355 = vunpack.c.l.b16 %v4641
        %v5356 = vunpack.c.l.b16 %v4655
        %v5357 = vunpack.c.l.b16 %v4669
        %v5358 = vunpack.c.l.b16 %v4683
        %v5359 = vunpack.c.l.b16 %v4697
        %v5360 = vunpack.c.l.b16 %v4711
        %v5361 = vunpack.c.l.b16 %v4725
        %v5362 = vunpack.c.l.b16 %v4739
        %v5363 = vunpack.c.l.b16 %v4753
        %v5364 = vunpack.c.l.b16 %v4767
        %v5365 = vunpack.c.l.b16 %v4781
        %v5366 = vunpack.c.l.b16 %v4795
        %v5367 = vunpack.c.l.b16 %v4809
        %v5368 = vunpack.c.l.b16 %v4823
        %v5369 = vunpack.c.l.b16 %v4837
        %v5370 = vunpack.c.l.b16 %v4851
        %v5371 = vunpack.c.l.b16 %v4865
        %v5372 = vunpack.c.l.b16 %v4879
        %v5373 = vunpack.c.l.b16 %v4893
        %v5374 = vunpack.c.l.b16 %v4907
        %v5375 = vunpack.c.l.b16 %v4921
        %v5376 = vunpack.c.l.b16 %v4935
        %v5377 = vunpack.c.l.b16 %v4949
        %v5378 = vunpack.c.l.b16 %v4963
        %v5379 = vunpack.c.l.b16 %v4977
        %v5380 = vunpack.c.l.b16 %v4991
        %v5381 = vunpack.c.l.b16 %v5005
        %v5382 = vunpack.c.l.b16 %v5019
        %v5383 = vunpack.c.l.b16 %v5033
        %v5384 = vunpack.c.l.b16 %v5047
        %v5385 = vunpack.c.l.b16 %v5061
        %v5386 = vunpack.c.l.b16 %v5075
        %v5387 = vunpack.c.l.b16 %v5089
        %v5388 = vunpack.c.l.b16 %v5103
        %v5389 = vunpack.c.l.b16 %v5117
        %v5390 = vunpack.c.l.b16 %v5131
        %v5391 = vunpack.c.l.b16 %v5145
        %v5392 = vunpack.c.l.b16 %v5159
        %v5393 = vunpack.c.l.b16 %v5173
        %v5394 = vunpack.c.l.b16 %v5187
        %v5395 = vunpack.c.l.b16 %v5201
        %v5396 = vunpack.c.l.b16 %v5215
        %v5397 = vunpack.c.l.b16 %v5229
        %v5398 = vunpack.c.l.b16 %v5243
        %v5399 = vunpack.c.l.b16 %v5257
        %v5400 = vunpack.c.l.b16 %v5271
        %v5401 = vunpack.c.l.b16 %v5285
        %v5402 = vunpack.c.l.b16 %v5299
        %v5403 = vunpack.c.l.b16 %v5313
        %v5404 = vunpack.c.l.b16 %v5327
        %v5405 = vunpack.c.l.b16 %v5341
        %v5406 = vrot.slane %v5343, 7
        %v5407 = vsel %vm3843, %v5406, %v5342
        %v5408 = vrot.slane %v5344, 6
        %v5409 = vsel %vm3846, %v5408, %v5407
        %v5410 = vrot.slane %v5345, 5
        %v5411 = vsel %vm3849, %v5410, %v5409
        %v5412 = vrot.slane %v5346, 4
        %v5413 = vsel %vm3852, %v5412, %v5411
        %v5414 = vrot.slane %v5347, 3
        %v5415 = vsel %vm3855, %v5414, %v5413
        %v5416 = vrot.slane %v5348, 2
        %v5417 = vsel %vm3858, %v5416, %v5415
        %v5418 = vrot.slane %v5349, 1
        %v5419 = vsel %vm3861, %v5418, %v5417
        %v5420 = vrot.slane %v5351, 7
        %v5421 = vsel %vm3843, %v5420, %v5350
        %v5422 = vrot.slane %v5352, 6
        %v5423 = vsel %vm3846, %v5422, %v5421
        %v5424 = vrot.slane %v5353, 5
        %v5425 = vsel %vm3849, %v5424, %v5423
        %v5426 = vrot.slane %v5354, 4
        %v5427 = vsel %vm3852, %v5426, %v5425
        %v5428 = vrot.slane %v5355, 3
        %v5429 = vsel %vm3855, %v5428, %v5427
        %v5430 = vrot.slane %v5356, 2
        %v5431 = vsel %vm3858, %v5430, %v5429
        %v5432 = vrot.slane %v5357, 1
        %v5433 = vsel %vm3861, %v5432, %v5431
        %v5434 = vrot.slane %v5359, 7
        %v5435 = vsel %vm3843, %v5434, %v5358
        %v5436 = vrot.slane %v5360, 6
        %v5437 = vsel %vm3846, %v5436, %v5435
        %v5438 = vrot.slane %v5361, 5
        %v5439 = vsel %vm3849, %v5438, %v5437
        %v5440 = vrot.slane %v5362, 4
        %v5441 = vsel %vm3852, %v5440, %v5439
        %v5442 = vrot.slane %v5363, 3
        %v5443 = vsel %vm3855, %v5442, %v5441
        %v5444 = vrot.slane %v5364, 2
        %v5445 = vsel %vm3858, %v5444, %v5443
        %v5446 = vrot.slane %v5365, 1
        %v5447 = vsel %vm3861, %v5446, %v5445
        %v5448 = vrot.slane %v5367, 7
        %v5449 = vsel %vm3843, %v5448, %v5366
        %v5450 = vrot.slane %v5368, 6
        %v5451 = vsel %vm3846, %v5450, %v5449
        %v5452 = vrot.slane %v5369, 5
        %v5453 = vsel %vm3849, %v5452, %v5451
        %v5454 = vrot.slane %v5370, 4
        %v5455 = vsel %vm3852, %v5454, %v5453
        %v5456 = vrot.slane %v5371, 3
        %v5457 = vsel %vm3855, %v5456, %v5455
        %v5458 = vrot.slane %v5372, 2
        %v5459 = vsel %vm3858, %v5458, %v5457
        %v5460 = vrot.slane %v5373, 1
        %v5461 = vsel %vm3861, %v5460, %v5459
        %v5462 = vrot.slane %v5375, 7
        %v5463 = vsel %vm3843, %v5462, %v5374
        %v5464 = vrot.slane %v5376, 6
        %v5465 = vsel %vm3846, %v5464, %v5463
        %v5466 = vrot.slane %v5377, 5
        %v5467 = vsel %vm3849, %v5466, %v5465
        %v5468 = vrot.slane %v5378, 4
        %v5469 = vsel %vm3852, %v5468, %v5467
        %v5470 = vrot.slane %v5379, 3
        %v5471 = vsel %vm3855, %v5470, %v5469
        %v5472 = vrot.slane %v5380, 2
        %v5473 = vsel %vm3858, %v5472, %v5471
        %v5474 = vrot.slane %v5381, 1
        %v5475 = vsel %vm3861, %v5474, %v5473
        %v5476 = vrot.slane %v5383, 7
        %v5477 = vsel %vm3843, %v5476, %v5382
        %v5478 = vrot.slane %v5384, 6
        %v5479 = vsel %vm3846, %v5478, %v5477
        %v5480 = vrot.slane %v5385, 5
        %v5481 = vsel %vm3849, %v5480, %v5479
        %v5482 = vrot.slane %v5386, 4
        %v5483 = vsel %vm3852, %v5482, %v5481
        %v5484 = vrot.slane %v5387, 3
        %v5485 = vsel %vm3855, %v5484, %v5483
        %v5486 = vrot.slane %v5388, 2
        %v5487 = vsel %vm3858, %v5486, %v5485
        %v5488 = vrot.slane %v5389, 1
        %v5489 = vsel %vm3861, %v5488, %v5487
        %v5490 = vrot.slane %v5391, 7
        %v5491 = vsel %vm3843, %v5490, %v5390
        %v5492 = vrot.slane %v5392, 6
        %v5493 = vsel %vm3846, %v5492, %v5491
        %v5494 = vrot.slane %v5393, 5
        %v5495 = vsel %vm3849, %v5494, %v5493
        %v5496 = vrot.slane %v5394, 4
        %v5497 = vsel %vm3852, %v5496, %v5495
        %v5498 = vrot.slane %v5395, 3
        %v5499 = vsel %vm3855, %v5498, %v5497
        %v5500 = vrot.slane %v5396, 2
        %v5501 = vsel %vm3858, %v5500, %v5499
        %v5502 = vrot.slane %v5397, 1
        %v5503 = vsel %vm3861, %v5502, %v5501
        %v5504 = vrot.slane %v5399, 7
        %v5505 = vsel %vm3843, %v5504, %v5398
        %v5506 = vrot.slane %v5400, 6
        %v5507 = vsel %vm3846, %v5506, %v5505
        %v5508 = vrot.slane %v5401, 5
        %v5509 = vsel %vm3849, %v5508, %v5507
        %v5510 = vrot.slane %v5402, 4
        %v5511 = vsel %vm3852, %v5510, %v5509
        %v5512 = vrot.slane %v5403, 3
        %v5513 = vsel %vm3855, %v5512, %v5511
        %v5514 = vrot.slane %v5404, 2
        %v5515 = vsel %vm3858, %v5514, %v5513
        %v5516 = vrot.slane %v5405, 1
        %v5517 = vsel %vm3861, %v5516, %v5515
        %v5518 = vpack.c.b16 %v5433, %v5419
        %v5519 = vpack.c.b16 %v5461, %v5447
        %v5520 = vpack.c.b16 %v5489, %v5475
        %v5521 = vpack.c.b16 %v5517, %v5503
        %v5530 = vunpack.c.l.b16 %v4438
        %v5531 = vunpack.c.l.b16 %v4439
        %v5532 = vunpack.c.l.b16 %v4440
        %v5533 = vunpack.c.l.b16 %v4441
        %v5534 = vunpack.c.l.b16 %v4442
        %v5535 = vunpack.c.l.b16 %v4443
        %v5536 = vunpack.c.l.b16 %v4444
        %v5537 = vunpack.c.l.b16 %v4445
        %v5538 = vpack.c.b16 %v5531, %v5530
        %v5539 = vpack.c.b16 %v5533, %v5532
        %v5540 = vpack.c.b16 %v5535, %v5534
        %v5541 = vpack.c.b16 %v5537, %v5536
        %v5547 = vsel %vm483, %v5518, 0
        %v5550 = vsel %vm483, %v5519, 0
        %v5553 = vsel %vm483, %v5520, 0
        %v5556 = vsel %vm483, %v5521, 0
        %5558 = vmatprep.subr.bf16.mxu0 0
        %5559 = vmatpush1.bf16.msra.mxu0 %v5538
        %5560 = vmatprep.subr.bf16.mxu0 0
        %5561 = vmatpush1.bf16.msra.mxu0 %v5539
        %5562 = vmatprep.subr.bf16.mxu0 0
        %5563 = vmatpush1.bf16.msra.mxu0 %v5540
        %5564 = vmatprep.subr.bf16.mxu0 0
        %5565 = vmatpush1.bf16.msra.mxu0 %v5541
        %5566 = vmatprep.subr.bf16.mxu0 0
        %5567 = vmatpush1.bf16.msra.mxu0 0
        %5568 = vmatprep.subr.bf16.mxu0 0
        %5569 = vmatpush1.bf16.msra.mxu0 0
        %5570 = vmatprep.subr.bf16.mxu0 0
        %5571 = vmatpush1.bf16.msra.mxu0 0
        %5572 = vmatprep.subr.bf16.mxu0 0
        %5573 = vmatpush1.bf16.msra.mxu0 0
        %5574 = vmatprep.subr.bf16.mxu0 0
        %5575 = vmatpush1.bf16.msra.mxu0 0
        %5576 = vmatprep.subr.bf16.mxu0 0
        %5577 = vmatpush1.bf16.msra.mxu0 0
        %5578 = vmatprep.subr.bf16.mxu0 0
        %5579 = vmatpush1.bf16.msra.mxu0 0
        %5580 = vmatprep.subr.bf16.mxu0 0
        %5581 = vmatpush1.bf16.msra.mxu0 0
        %5582 = vmatprep.subr.bf16.mxu0 0
        %5583 = vmatpush1.bf16.msra.mxu0 0
        %5584 = vmatprep.subr.bf16.mxu0 0
        %5585 = vmatpush1.bf16.msra.mxu0 0
        %5586 = vmatprep.subr.bf16.mxu0 0
        %5587 = vmatpush1.bf16.msra.mxu0 0
        %5588 = vmatprep.subr.bf16.mxu0 0
        %5589 = vmatpush1.bf16.msra.mxu0 0
        %5590 = vmatprep.mubr.bf16.mxu0 0
        %5591 = vmatmul.mubr.bf16.gmra.mrb[0].mxu0 %v5547
        %v5592 = vpop.f32.mrb[0].mxu0
        %v5593 = vadd.f32 0.0, %v5592
        %v5594 = vpop.f32.mrb[0].mxu0
        %v5595 = vpop.f32.mrb[0].mxu0
        %v5596 = vadd.f32 0.0, %v5595
        %v5597 = vpop.f32.mrb[0].mxu0
        %5598 = vmatprep.mubr.bf16.mxu0 0
        %5599 = vmatmul.mubr.bf16.gmra.mrb[0].mxu0 %v5550
        %v5600 = vpop.f32.mrb[0].mxu0
        %v5601 = vadd.f32 0.0, %v5600
        %v5602 = vpop.f32.mrb[0].mxu0
        %v5603 = vpop.f32.mrb[0].mxu0
        %v5604 = vadd.f32 0.0, %v5603
        %v5605 = vpop.f32.mrb[0].mxu0
        %5606 = vmatprep.mubr.bf16.mxu0 0
        %5607 = vmatmul.mubr.bf16.gmra.mrb[0].mxu0 %v5553
        %v5608 = vpop.f32.mrb[0].mxu0
        %v5609 = vadd.f32 0.0, %v5608
        %v5610 = vpop.f32.mrb[0].mxu0
        %v5611 = vpop.f32.mrb[0].mxu0
        %v5612 = vadd.f32 0.0, %v5611
        %v5613 = vpop.f32.mrb[0].mxu0
        %5614 = vmatprep.mubr.bf16.mxu0 0
        %5615 = vmatmul.mubr.bf16.gmra.mrb[0].mxu0 %v5556
        %v5616 = vpop.f32.mrb[0].mxu0
        %v5617 = vadd.f32 0.0, %v5616
        %v5618 = vpop.f32.mrb[0].mxu0
        %v5619 = vpop.f32.mrb[0].mxu0
        %v5620 = vadd.f32 0.0, %v5619
        %v5621 = vpop.f32.mrb[0].mxu0
        %5622 = vdwg.mxu0
        %v5623 = vadd.f32 %v4024, %v5593
        %v5624 = vadd.f32 %v4027, %v5596
        %v5625 = vadd.f32 %v4032, %v5601
        %v5626 = vadd.f32 %v4035, %v5604
        %v5627 = vadd.f32 %v4040, %v5609
        %v5628 = vadd.f32 %v4043, %v5612
        %v5629 = vadd.f32 %v4048, %v5617
        %v5630 = vadd.f32 %v4051, %v5620
        %v5631 = vld [vmem:[%s8] sm:$0x1]
        %v5633 = vlaneseq
        %v5634 = vshrl.u32 %v5633, 7
        %v5635 = vsub.s32 0, %v5634
        %v5636 = vrot.slane %v5631, %v5635
        %v5638 = vadd.f32 %v5623, %v5636
        %v5639 = vadd.f32 %v5624, %v5636
        %v5640 = vadd.f32 %v5625, %v5636
        %v5641 = vadd.f32 %v5626, %v5636
        %v5642 = vadd.f32 %v5627, %v5636
        %v5643 = vadd.f32 %v5628, %v5636
        %v5644 = vadd.f32 %v5629, %v5636
        %v5645 = vadd.f32 %v5630, %v5636
        %v5646 = vmax.f32 %v5638, 0.0
        %v5647 = vmax.f32 %v5639, 0.0
        %v5648 = vmax.f32 %v5640, 0.0
        %v5649 = vmax.f32 %v5641, 0.0
        %v5650 = vmax.f32 %v5642, 0.0
        %v5651 = vmax.f32 %v5643, 0.0
        %v5652 = vmax.f32 %v5644, 0.0
        %v5653 = vmax.f32 %v5645, 0.0
        %5654 = vst [vmem:[%s325] sm:$0xff] %v5646
        %5655 = vst [vmem:[%s325 + $0x8] sm:$0xff] %v5647
        %5656 = vst [vmem:[%s325 + $0x10] sm:$0xff] %v5648
        %5657 = vst [vmem:[%s325 + $0x18] sm:$0xff] %v5649
        %5658 = vst [vmem:[%s325 + $0x20] sm:$0xff] %v5650
        %5659 = vst [vmem:[%s325 + $0x28] sm:$0xff] %v5651
        %5660 = vst [vmem:[%s325 + $0x30] sm:$0xff] %v5652
        %5661 = vst [vmem:[%s325 + $0x38] sm:$0xff] %v5653
        %s5662 = sand.u32 %s225, 1
        %s5663 = scalar_lea.sflag [#allocation4], %s5662
        %s5664 = sand.u32 %s225, 1
        %s5665 = smul.addr %s5664, 64
        %s5666 = scalar_lea.vmem [#allocation3], %s5665
        // Predicated region
        $region57: #{bottleneck_pallas.1} parent=55 // pred_check
          %p5667 = pneg %p235
        $region58: #{bottleneck_pallas.1} parent=55 // pred_check_branch
          %5669 = sbr.rel (%p5667) target = $region60
        $region59: #{bottleneck_pallas.1} parent=55 // pred_region
          %s5671 = ssub.s32 1024, 1024
          %5672 = vsyncadd %s5663, %s5671
          %s5673 = smul.addr %s23, 8
          %s5674 = smul.addr %s5673, 128
          %s5675 = scalar_lea.hbm %s9, %s5674
          %s5676 = sshll.u32 %s5666, 4
          %s5677 = int_to_ptr.vmem [resolvable:$true] %s5676
          %5682 = dma.vmem_to_hbm [thread:$0]  %s5677, 1024, %s5675, %s5663, 128, 128, 8
        $region60: #{bottleneck_pallas.1} parent=55 // pred_fallthru
          _
      $region56: #{bottleneck_pallas.1} parent=5 // pred_fallthru
        _
      %p5683 = scmp.le.s32.totalorder 2, %s18
      // Predicated region
      $region61: #{bottleneck_pallas.1} parent=5 // pred_check
        %p5684 = pneg %p5683
      $region62: #{bottleneck_pallas.1} parent=5 // pred_check_branch
        %5686 = sbr.rel (%p5684) target = $region64
      $region63: #{bottleneck_pallas.1} parent=5 // pred_region
        %s5687 = ssub.s32 %s18, 2
        // Predicated region
        $region65: #{bottleneck_pallas.1} parent=63 // pred_check
          %p5688 = pneg %p241
        $region66: #{bottleneck_pallas.1} parent=63 // pred_check_branch
          %5690 = sbr.rel (%p5688) target = $region68
        $region67: #{bottleneck_pallas.1} parent=63 // pred_region
          %s5691 = sand.u32 %s226, 1
          %s5692 = scalar_lea.sflag [#allocation4], %s5691
          %s5693 = sand.u32 %s226, 1
          %s5694 = smul.addr %s5693, 64
          %s5695 = scalar_lea.vmem [#allocation3], %s5694
          %5696 = dma.done %s5692, 1024
        $region68: #{bottleneck_pallas.1} parent=63 // pred_fallthru
          _
      $region64: #{bottleneck_pallas.1} parent=5 // pred_fallthru
        _
    $region6: #{bottleneck_pallas.1} parent=1 // loop_footer
      %s22 = sadd.s32 1, %s18
    $region7: #{bottleneck_pallas.1} parent=1 // loop_footer_branch
      %17 = sbr.rel target = $region3
    $region8: #{bottleneck_pallas.1} parent=1 // loop_exit
      _
    %5697 = vsyncpa [#allocation4], 1
    %s5698 = scalar_lea.sflag [#allocation4], 1
    %5699 = vsyncpa %s5698, 1

</llo_original>
